<compile_context>
chip_gen: v7x
topology: tpu7x:2x2x1
jax: 0.10.0
libtpu: 0.0.40
codegen_flags: <defaults>
</compile_context>

<pallas_src>
import numpy as np
import jax
import jax.numpy as jnp
from jax import lax
from jax.experimental import pallas as pl
from jax.experimental.pallas import tpu as pltpu


def default_rnnlm_forward(x, t, params, *, time_chunk=32):
    """Pallas implementation of DefaultRNNLM.forward(x, t).

    params = (emb, wih, whh, bias, low, lob) with weights pre-transposed to
    (in_dim, out_dim):
      emb  (V, E)      embedding table          (E == H, espnet default)
      wih  (L, E, 4H)  LSTMCell input weights
      whh  (L, H, 4H)  LSTMCell recurrent weights
      bias (L, 1, 4H)  b_ih + b_hh
      low  (H, V)      lo.weight^T
      lob  (1, V)      lo.bias
    """
    emb, wih, whh, bias, low, lob = params
    B, T = x.shape
    L = int(wih.shape[0])
    E = int(wih.shape[1])          # == H with espnet default embed_unit=None
    H = int(whh.shape[1])
    V = int(low.shape[1])
    H4 = 4 * H

    # ---- host-side layout glue (O(T*B*E) gather + O(T*B) masks) ----
    Bp = max(8, -(-B // 8) * 8)            # batch padded to a sublane multiple
    Tc = max(1, min(T, time_chunk))        # time steps per grid iteration
    Tp = -(-T // Tc) * Tc                  # time padded to a chunk multiple
    n_chunks = Tp // Tc
    TBp = Tc * Bp

    x_tm = jnp.zeros((Tp, Bp), jnp.int32).at[:T, :B].set(x.T.astype(jnp.int32))
    t_tm = jnp.zeros((Tp, Bp), jnp.int32).at[:T, :B].set(t.T.astype(jnp.int32))

    # Embedding lookup on the host; the (Tc*Bp, E) bf16 chunk is streamed in by
    # the BlockSpec pipeline (overlaps DMA of the next chunk with compute).
    emb_bf = emb.astype(jnp.bfloat16)
    embx_flat = emb_bf[x_tm.reshape(-1)]                        # (Tp*Bp, E) bf16

    nz_f = (x_tm != 0).astype(jnp.float32)                      # padded entries are 0
    nz_step = jnp.sum(nz_f, axis=1, keepdims=True)              # (Tp, 1) nonzeros/step
    valid_b = (jnp.arange(Bp) < B).astype(jnp.float32)[None, :]
    # per-row loss coefficient: ce[t, b] contributes valid[b]/B * nz_step[t]
    coef_flat = ((nz_step / jnp.float32(B)) * valid_b).reshape(Tp * Bp, 1)
    t_flat = t_tm.reshape(Tp * Bp, 1)

    # count is input-only data -> computed on the host.
    count = jnp.sum(x != 0).astype(jnp.int32)

    # bf16 weight storage; biases stay f32 (added after f32 accumulation).
    wih_bf = wih.astype(jnp.bfloat16)                           # (L, E, 4H)
    whh_bf = whh.astype(jnp.bfloat16)                           # (L, H, 4H)
    bias_f = bias.astype(jnp.float32)                           # (L, 1, 4H)
    low_bf = low.astype(jnp.bfloat16)                           # (H, V)
    lob_f = lob.astype(jnp.float32)                             # (1, V)

    def lstm_cell(gates, c_prev):
        # PyTorch LSTMCell gate order: i, f, g, o.
        i_g = jax.nn.sigmoid(gates[:, 0:H])
        f_g = jax.nn.sigmoid(gates[:, H:2 * H])
        g_g = jnp.tanh(gates[:, 2 * H:3 * H])
        o_g = jax.nn.sigmoid(gates[:, 3 * H:4 * H])
        c_new = f_g * c_prev + i_g * g_g
        h_new = o_g * jnp.tanh(c_new)
        return h_new, c_new

    def kernel(embx_ref,                                # (TBp, E) bf16 chunk (streamed)
               t_ref, coef_ref,                         # (TBp, 1) per-chunk rows
               wih_ref, whh_ref, bias_ref,              # resident weights
               low_ref, lob_ref,
               loss_ref,                                # (1, 1) accumulator
               h_scr, c_scr, g0_scr, htop_scr):
        chunk = pl.program_id(0)

        @pl.when(chunk == 0)
        def _init():
            h_scr[...] = jnp.zeros_like(h_scr)
            c_scr[...] = jnp.zeros_like(c_scr)
            loss_ref[...] = jnp.zeros_like(loss_ref)

        # Phase 1 (hoisted, non-recurrent): layer-0 input-gate contribution for
        # the whole chunk -> one (Tc*Bp, E) x (E, 4H) bf16 MXU call.
        g0_scr[...] = (jnp.dot(embx_ref[...], wih_ref[0],
                               preferred_element_type=jnp.float32)
                       + bias_ref[0])

        # Phase 2: sequential LSTM recurrence; only h @ Whh work is serial.
        # TODO(synk): tune the unroll (2/4) when H is large to bound vreg pressure.
        def step(tl, carry):
            row0 = pl.multiple_of(tl * Bp, Bp)
            gates0 = (g0_scr[pl.ds(row0, Bp), :]
                      + jnp.dot(h_scr[0].astype(jnp.bfloat16), whh_ref[0],
                                preferred_element_type=jnp.float32))
            h_new, c_new = lstm_cell(gates0, c_scr[0])
            h_scr[0] = h_new
            c_scr[0] = c_new
            inp = h_new
            for l in range(1, L):                     # static python loop over layers
                # Two accumulated dots instead of a lane-concat + packed weight.
                gates = (jnp.dot(inp.astype(jnp.bfloat16), wih_ref[l],
                                 preferred_element_type=jnp.float32)
                         + jnp.dot(h_scr[l].astype(jnp.bfloat16), whh_ref[l],
                                   preferred_element_type=jnp.float32)
                         + bias_ref[l])
                h_new, c_new = lstm_cell(gates, c_scr[l])
                h_scr[l] = h_new
                c_scr[l] = c_new
                inp = h_new
            htop_scr[pl.ds(row0, Bp), :] = inp
            return carry
        lax.fori_loop(0, Tc, step, 0, unroll=True)

        # Phase 3: batched output projection + cross entropy for the whole chunk.
        # TODO(synk): vocab-tile this with an online logsumexp for realistic V.
        logits = (jnp.dot(htop_scr[...].astype(jnp.bfloat16), low_ref[...],
                          preferred_element_type=jnp.float32)
                  + lob_ref[...])                                    # (TBp, V)
        m = jnp.max(logits, axis=1, keepdims=True)
        lse = jnp.log(jnp.sum(jnp.exp(logits - m), axis=1, keepdims=True)) + m
        lanes = lax.broadcasted_iota(jnp.int32, (TBp, V), 1)
        tgt = jnp.sum(jnp.where(lanes == t_ref[...], logits, 0.0),
                      axis=1, keepdims=True)                         # (TBp, 1)
        ce = lse - tgt                                               # (TBp, 1)

        # loss += sum_t mean_b(ce) * nz_t  (all masking folded into coef).
        loss_ref[...] += jnp.sum(ce * coef_ref[...], axis=0, keepdims=True)

    def const_spec(a):
        nd = a.ndim
        return pl.BlockSpec(a.shape, lambda c, _nd=nd: (0,) * _nd)

    emb_spec = pl.BlockSpec((TBp, E), lambda c: (c, 0))
    row_spec = pl.BlockSpec((TBp, 1), lambda c: (c, 0))
    out_spec = pl.BlockSpec((1, 1), lambda c: (0, 0))

    grid_spec = pltpu.PrefetchScalarGridSpec(
        num_scalar_prefetch=0,
        grid=(n_chunks,),
        in_specs=[
            emb_spec,                                   # embedded chunk (streamed)
            row_spec, row_spec,                         # t, coef (per-chunk)
            const_spec(wih_bf), const_spec(whh_bf), const_spec(bias_f),
            const_spec(low_bf), const_spec(lob_f),
        ],
        out_specs=out_spec,
        scratch_shapes=[
            pltpu.VMEM((L, Bp, H), jnp.float32),        # h state (persists across chunks)
            pltpu.VMEM((L, Bp, H), jnp.float32),        # c state
            pltpu.VMEM((TBp, H4), jnp.float32),         # hoisted layer-0 gates
            pltpu.VMEM((TBp, H), jnp.float32),          # top-layer h per step
        ],
    )

    loss_sum = pl.pallas_call(
        kernel,
        out_shape=jax.ShapeDtypeStruct((1, 1), jnp.float32),
        grid_spec=grid_spec,
        compiler_params=pltpu.CompilerParams(
            dimension_semantics=("arbitrary",),
            vmem_limit_bytes=64 * 1024 * 1024),
    )(embx_flat, t_flat, coef_flat, wih_bf, whh_bf, bias_f, low_bf, lob_f)

    loss = loss_sum[0, 0]
    return loss / jnp.float32(B), loss, count


def reference_forward(x, t, params):
    """Pure-JAX f32 reference replicating the PyTorch forward exactly."""
    emb, wih, whh, b, low, lob = params
    B, T = x.shape
    L = wih.shape[0]
    H = whh.shape[1]
    h = [jnp.zeros((B, H), jnp.float32) for _ in range(L)]
    c = [jnp.zeros((B, H), jnp.float32) for _ in range(L)]
    loss = jnp.float32(0.0)
    count = 0
    for i in range(T):
        inp = emb[x[:, i]]
        for l in range(L):
            gates = inp @ wih[l] + h[l] @ whh[l] + b[l][0]
            i_g = jax.nn.sigmoid(gates[:, :H])
            f_g = jax.nn.sigmoid(gates[:, H:2 * H])
            g_g = jnp.tanh(gates[:, 2 * H:3 * H])
            o_g = jax.nn.sigmoid(gates[:, 3 * H:])
            c[l] = f_g * c[l] + i_g * g_g
            h[l] = o_g * jnp.tanh(c[l])
            inp = h[l]
        logits = inp @ low + lob[0]
        lse = jax.scipy.special.logsumexp(logits, axis=1)
        ce = lse - logits[jnp.arange(B), t[:, i]]
        nz = jnp.sum(x[:, i] != 0).astype(jnp.float32)
        loss = loss + jnp.mean(ce) * nz
        count = count + int(jnp.sum(x[:, i] != 0))
    return loss / B, loss, count


if __name__ == "__main__":
    V = 128      # n_vocab
    L = 2        # n_layers
    H = 32       # n_units (== n_embed since embed_unit=None)
    B = 4        # batch
    T = 8        # sequence length

    key = jax.random.PRNGKey(0)
    keys = jax.random.split(key, 16)

    def u(k, shape):
        return jax.random.uniform(k, shape, jnp.float32, -0.1, 0.1)

    # Parameters (uniform(-0.1, 0.1) like the module __init__), pre-transposed
    # to (in_dim, out_dim) for the kernel matmuls.
    emb = u(keys[0], (V, H))                                            # embedding
    wih = jnp.stack([u(keys[1 + l], (H, 4 * H)) for l in range(L)])     # (L, H, 4H)
    whh = jnp.stack([u(keys[3 + l], (H, 4 * H)) for l in range(L)])     # (L, H, 4H)
    b_ih = jnp.stack([u(keys[5 + l], (1, 4 * H)) for l in range(L)])
    b_hh = jnp.stack([u(keys[7 + l], (1, 4 * H)) for l in range(L)])
    bias = b_ih + b_hh                                                  # (L, 1, 4H)
    low = u(keys[9], (H, V))                                            # lo.weight^T
    lob = u(keys[10], (1, V))                                           # lo.bias
    params = (emb, wih, whh, bias, low, lob)

    # Inputs: token ids (batch, seq); include some zeros (padding id) for counting.
    x = jax.random.randint(keys[11], (B, T), 0, V, jnp.int32)
    t = jax.random.randint(keys[12], (B, T), 0, V, jnp.int32)
    x = x.at[0, 0].set(0).at[1, 3].set(0)

    loss_per_batch, loss, count = default_rnnlm_forward(x, t, params)
    jax.block_until_ready((loss_per_batch, loss, count))

    ref_lpb, ref_loss, ref_count = reference_forward(x, t, params)
    assert np.allclose(np.asarray(loss), np.asarray(ref_loss),
                       rtol=1e-3, atol=1e-3), (loss, ref_loss)
    assert np.allclose(np.asarray(loss_per_batch), np.asarray(ref_lpb),
                       rtol=1e-3, atol=1e-3), (loss_per_batch, ref_lpb)
    assert int(count) == int(ref_count), (int(count), int(ref_count))

    print("KERNEL_OK")
</pallas_src>

<mosaic_0001>
module attributes {stable_mosaic.version = 11 : i64} {
  func.func @kernel(%arg0: i32, %arg1: memref<64x32xbf16, #tpu.memory_space<vmem>>, %arg2: memref<64x1xi32, #tpu.memory_space<vmem>>, %arg3: memref<64x1xf32, #tpu.memory_space<vmem>>, %arg4: memref<2x32x128xbf16, #tpu.memory_space<vmem>>, %arg5: memref<2x32x128xbf16, #tpu.memory_space<vmem>>, %arg6: memref<2x1x128xf32, #tpu.memory_space<vmem>>, %arg7: memref<32x128xbf16, #tpu.memory_space<vmem>>, %arg8: memref<1x128xf32, #tpu.memory_space<vmem>>, %arg9: memref<1x1xf32, #tpu.memory_space<vmem>>, %arg10: memref<2x8x32xf32, #tpu.memory_space<vmem>>, %arg11: memref<2x8x32xf32, #tpu.memory_space<vmem>>, %arg12: memref<64x128xf32, #tpu.memory_space<vmem>>, %arg13: memref<64x32xf32, #tpu.memory_space<vmem>>) attributes {dimension_semantics = [#tpu.dimension_semantics<arbitrary>], iteration_bounds = array<i64: 1>, scalar_prefetch = 0 : i64, scratch_operands = 4 : i64, tpu.core_type = #tpu.core_type<tc>, window_params = [{transform_indices = @transform_0, window_bounds = array<i64: 64, 32>}, {transform_indices = @transform_1, window_bounds = array<i64: 64, 1>}, {transform_indices = @transform_2, window_bounds = array<i64: 64, 1>}, {pipeline_mode = #tpu.pipeline_mode<synchronous>, transform_indices = @transform_3, window_bounds = array<i64: 2, 32, 128>}, {pipeline_mode = #tpu.pipeline_mode<synchronous>, transform_indices = @transform_4, window_bounds = array<i64: 2, 32, 128>}, {pipeline_mode = #tpu.pipeline_mode<synchronous>, transform_indices = @transform_5, window_bounds = array<i64: 2, 1, 128>}, {pipeline_mode = #tpu.pipeline_mode<synchronous>, transform_indices = @transform_6, window_bounds = array<i64: 32, 128>}, {pipeline_mode = #tpu.pipeline_mode<synchronous>, transform_indices = @transform_7, window_bounds = array<i64: 1, 128>}, {pipeline_mode = #tpu.pipeline_mode<synchronous>, transform_indices = @transform_8, window_bounds = array<i64: 1, 1>}]} {
    %c0_i32 = arith.constant 0 : i32
    %0 = arith.cmpi eq, %arg0, %c0_i32 : i32
    %1 = arith.extui %0 : i1 to i32
    %c0_i32_0 = arith.constant 0 : i32
    %2 = arith.cmpi ne, %1, %c0_i32_0 : i32
    scf.if %2 {
      %cst_414 = arith.constant 0.000000e+00 : f32
      %796 = vector.broadcast %cst_414 : f32 to vector<2x8x32xf32>
      %c0_415 = arith.constant 0 : index
      %c0_416 = arith.constant 0 : index
      %c0_417 = arith.constant 0 : index
      %797 = vector.load %arg10[%c0_415, %c0_416, %c0_417] : memref<2x8x32xf32, #tpu.memory_space<vmem>>, vector<2x8x32xf32>
      tpu.vector_store %arg10[%c0_415, %c0_416, %c0_417], %796 {strides = array<i32>} : memref<2x8x32xf32, #tpu.memory_space<vmem>>, vector<2x8x32xf32>,
      %cst_418 = arith.constant 0.000000e+00 : f32
      %798 = vector.broadcast %cst_418 : f32 to vector<2x8x32xf32>
      %c0_419 = arith.constant 0 : index
      %c0_420 = arith.constant 0 : index
      %c0_421 = arith.constant 0 : index
      %799 = vector.load %arg11[%c0_419, %c0_420, %c0_421] : memref<2x8x32xf32, #tpu.memory_space<vmem>>, vector<2x8x32xf32>
      tpu.vector_store %arg11[%c0_419, %c0_420, %c0_421], %798 {strides = array<i32>} : memref<2x8x32xf32, #tpu.memory_space<vmem>>, vector<2x8x32xf32>,
      %cst_422 = arith.constant 0.000000e+00 : f32
      %800 = vector.broadcast %cst_422 : f32 to vector<1x1xf32>
      %c0_423 = arith.constant 0 : index
      %c0_424 = arith.constant 0 : index
      %801 = vector.load %arg9[%c0_423, %c0_424] : memref<1x1xf32, #tpu.memory_space<vmem>>, vector<1x1xf32>
      tpu.vector_store %arg9[%c0_423, %c0_424], %800 {strides = array<i32>} : memref<1x1xf32, #tpu.memory_space<vmem>>, vector<1x1xf32>,
    } else {
    }
    %c0 = arith.constant 0 : index
    %c0_1 = arith.constant 0 : index
    %3 = vector.load %arg1[%c0, %c0_1] : memref<64x32xbf16, #tpu.memory_space<vmem>>, vector<64x32xbf16>
    %c0_2 = arith.constant 0 : index
    %c0_3 = arith.constant 0 : index
    %c0_4 = arith.constant 0 : index
    %4 = vector.load %arg4[%c0_2, %c0_3, %c0_4] : memref<2x32x128xbf16, #tpu.memory_space<vmem>>, vector<1x32x128xbf16>
    %5 = vector.shape_cast %4 : vector<1x32x128xbf16> to vector<32x128xbf16>
    %cst = arith.constant dense<0.000000e+00> : vector<64x128xf32>
    %6 = tpu.matmul %3, %5, %cst {dimension_numbers = #tpu.dot_dimension_numbers<[1], [0], [0], [1], [0, 0, 1, 1], [], []>} : vector<64x32xbf16>, vector<32x128xbf16>, vector<64x128xf32> -> vector<64x128xf32>
    %c0_5 = arith.constant 0 : index
    %c0_6 = arith.constant 0 : index
    %c0_7 = arith.constant 0 : index
    %7 = vector.load %arg6[%c0_5, %c0_6, %c0_7] : memref<2x1x128xf32, #tpu.memory_space<vmem>>, vector<1x1x128xf32>
    %8 = vector.shape_cast %7 : vector<1x1x128xf32> to vector<1x128xf32>
    %9 = vector.broadcast %8 : vector<1x128xf32> to vector<64x128xf32>
    %10 = arith.addf %6, %9 : vector<64x128xf32>
    %c0_8 = arith.constant 0 : index
    %c0_9 = arith.constant 0 : index
    %11 = vector.load %arg12[%c0_8, %c0_9] : memref<64x128xf32, #tpu.memory_space<vmem>>, vector<64x128xf32>
    tpu.vector_store %arg12[%c0_8, %c0_9], %10 {strides = array<i32>} : memref<64x128xf32, #tpu.memory_space<vmem>>, vector<64x128xf32>,
    %c0_i32_10 = arith.constant 0 : i32
    %c8_i32 = arith.constant 8 : i32
    %12 = arith.muli %c0_i32_10, %c8_i32 : i32
    %13 = tpu.assume_multiple %12, 8 : i32
    %14 = arith.index_cast %13 : i32 to index
    %c0_11 = arith.constant 0 : index
    %15 = vector.load %arg12[%14, %c0_11] : memref<64x128xf32, #tpu.memory_space<vmem>>, vector<8x128xf32>
    %c0_12 = arith.constant 0 : index
    %c0_13 = arith.constant 0 : index
    %c0_14 = arith.constant 0 : index
    %16 = vector.load %arg10[%c0_12, %c0_13, %c0_14] : memref<2x8x32xf32, #tpu.memory_space<vmem>>, vector<1x8x32xf32>
    %17 = vector.shape_cast %16 : vector<1x8x32xf32> to vector<8x32xf32>
    %18 = arith.truncf %17 : vector<8x32xf32> to vector<8x32xbf16>
    %c0_15 = arith.constant 0 : index
    %c0_16 = arith.constant 0 : index
    %c0_17 = arith.constant 0 : index
    %19 = vector.load %arg5[%c0_15, %c0_16, %c0_17] : memref<2x32x128xbf16, #tpu.memory_space<vmem>>, vector<1x32x128xbf16>
    %20 = vector.shape_cast %19 : vector<1x32x128xbf16> to vector<32x128xbf16>
    %cst_18 = arith.constant dense<0.000000e+00> : vector<8x128xf32>
    %21 = tpu.matmul %18, %20, %cst_18 {dimension_numbers = #tpu.dot_dimension_numbers<[1], [0], [0], [1], [0, 0, 1, 1], [], []>} : vector<8x32xbf16>, vector<32x128xbf16>, vector<8x128xf32> -> vector<8x128xf32>
    %22 = arith.addf %15, %21 : vector<8x128xf32>
    %c0_19 = arith.constant 0 : index
    %c0_20 = arith.constant 0 : index
    %c0_21 = arith.constant 0 : index
    %23 = vector.load %arg11[%c0_19, %c0_20, %c0_21] : memref<2x8x32xf32, #tpu.memory_space<vmem>>, vector<1x8x32xf32>
    %24 = vector.shape_cast %23 : vector<1x8x32xf32> to vector<8x32xf32>
    %25 = vector.extract_strided_slice %22 {offsets = [0, 0], sizes = [8, 32], strides = [1, 1]} : vector<8x128xf32> to vector<8x32xf32>
    %26 = arith.negf %25 : vector<8x32xf32>
    %27 = math.exp %26 : vector<8x32xf32>
    %cst_22 = arith.constant 1.000000e+00 : f32
    %28 = vector.broadcast %cst_22 : f32 to vector<8x32xf32>
    %29 = arith.addf %28, %27 : vector<8x32xf32>
    %30 = arith.divf %28, %29 : vector<8x32xf32>
    %31 = vector.extract_strided_slice %22 {offsets = [0, 32], sizes = [8, 32], strides = [1, 1]} : vector<8x128xf32> to vector<8x32xf32>
    %32 = arith.negf %31 : vector<8x32xf32>
    %33 = math.exp %32 : vector<8x32xf32>
    %cst_23 = arith.constant 1.000000e+00 : f32
    %34 = vector.broadcast %cst_23 : f32 to vector<8x32xf32>
    %35 = arith.addf %34, %33 : vector<8x32xf32>
    %36 = arith.divf %34, %35 : vector<8x32xf32>
    %37 = vector.extract_strided_slice %22 {offsets = [0, 64], sizes = [8, 32], strides = [1, 1]} : vector<8x128xf32> to vector<8x32xf32>
    %38 = math.tanh %37 : vector<8x32xf32>
    %39 = vector.extract_strided_slice %22 {offsets = [0, 96], sizes = [8, 32], strides = [1, 1]} : vector<8x128xf32> to vector<8x32xf32>
    %40 = arith.negf %39 : vector<8x32xf32>
    %41 = math.exp %40 : vector<8x32xf32>
    %cst_24 = arith.constant 1.000000e+00 : f32
    %42 = vector.broadcast %cst_24 : f32 to vector<8x32xf32>
    %43 = arith.addf %42, %41 : vector<8x32xf32>
    %44 = arith.divf %42, %43 : vector<8x32xf32>
    %45 = arith.mulf %36, %24 : vector<8x32xf32>
    %46 = arith.mulf %30, %38 : vector<8x32xf32>
    %47 = arith.addf %45, %46 : vector<8x32xf32>
    %48 = math.tanh %47 : vector<8x32xf32>
    %49 = arith.mulf %44, %48 : vector<8x32xf32>
    %c0_25 = arith.constant 0 : index
    %c0_26 = arith.constant 0 : index
    %c0_27 = arith.constant 0 : index
    %50 = vector.load %arg10[%c0_25, %c0_26, %c0_27] : memref<2x8x32xf32, #tpu.memory_space<vmem>>, vector<1x8x32xf32>
    %51 = vector.shape_cast %50 : vector<1x8x32xf32> to vector<8x32xf32>
    %52 = vector.shape_cast %49 : vector<8x32xf32> to vector<1x8x32xf32>
    tpu.vector_store %arg10[%c0_25, %c0_26, %c0_27], %52 {strides = array<i32>} : memref<2x8x32xf32, #tpu.memory_space<vmem>>, vector<1x8x32xf32>,
    %c0_28 = arith.constant 0 : index
    %c0_29 = arith.constant 0 : index
    %c0_30 = arith.constant 0 : index
    %53 = vector.load %arg11[%c0_28, %c0_29, %c0_30] : memref<2x8x32xf32, #tpu.memory_space<vmem>>, vector<1x8x32xf32>
    %54 = vector.shape_cast %53 : vector<1x8x32xf32> to vector<8x32xf32>
    %55 = vector.shape_cast %47 : vector<8x32xf32> to vector<1x8x32xf32>
    tpu.vector_store %arg11[%c0_28, %c0_29, %c0_30], %55 {strides = array<i32>} : memref<2x8x32xf32, #tpu.memory_space<vmem>>, vector<1x8x32xf32>,
    %56 = arith.truncf %49 : vector<8x32xf32> to vector<8x32xbf16>
    %c1 = arith.constant 1 : index
    %c0_31 = arith.constant 0 : index
    %c0_32 = arith.constant 0 : index
    %57 = vector.load %arg4[%c1, %c0_31, %c0_32] : memref<2x32x128xbf16, #tpu.memory_space<vmem>>, vector<1x32x128xbf16>
    %58 = vector.shape_cast %57 : vector<1x32x128xbf16> to vector<32x128xbf16>
    %cst_33 = arith.constant dense<0.000000e+00> : vector<8x128xf32>
    %59 = tpu.matmul %56, %58, %cst_33 {dimension_numbers = #tpu.dot_dimension_numbers<[1], [0], [0], [1], [0, 0, 1, 1], [], []>} : vector<8x32xbf16>, vector<32x128xbf16>, vector<8x128xf32> -> vector<8x128xf32>
    %c1_34 = arith.constant 1 : index
    %c0_35 = arith.constant 0 : index
    %c0_36 = arith.constant 0 : index
    %60 = vector.load %arg10[%c1_34, %c0_35, %c0_36] : memref<2x8x32xf32, #tpu.memory_space<vmem>>, vector<1x8x32xf32>
    %61 = vector.shape_cast %60 : vector<1x8x32xf32> to vector<8x32xf32>
    %62 = arith.truncf %61 : vector<8x32xf32> to vector<8x32xbf16>
    %c1_37 = arith.constant 1 : index
    %c0_38 = arith.constant 0 : index
    %c0_39 = arith.constant 0 : index
    %63 = vector.load %arg5[%c1_37, %c0_38, %c0_39] : memref<2x32x128xbf16, #tpu.memory_space<vmem>>, vector<1x32x128xbf16>
    %64 = vector.shape_cast %63 : vector<1x32x128xbf16> to vector<32x128xbf16>
    %cst_40 = arith.constant dense<0.000000e+00> : vector<8x128xf32>
    %65 = tpu.matmul %62, %64, %cst_40 {dimension_numbers = #tpu.dot_dimension_numbers<[1], [0], [0], [1], [0, 0, 1, 1], [], []>} : vector<8x32xbf16>, vector<32x128xbf16>, vector<8x128xf32> -> vector<8x128xf32>
    %66 = arith.addf %59, %65 : vector<8x128xf32>
    %c1_41 = arith.constant 1 : index
    %c0_42 = arith.constant 0 : index
    %c0_43 = arith.constant 0 : index
    %67 = vector.load %arg6[%c1_41, %c0_42, %c0_43] : memref<2x1x128xf32, #tpu.memory_space<vmem>>, vector<1x1x128xf32>
    %68 = vector.shape_cast %67 : vector<1x1x128xf32> to vector<1x128xf32>
    %69 = vector.broadcast %68 : vector<1x128xf32> to vector<8x128xf32>
    %70 = arith.addf %66, %69 : vector<8x128xf32>
    %c1_44 = arith.constant 1 : index
    %c0_45 = arith.constant 0 : index
    %c0_46 = arith.constant 0 : index
    %71 = vector.load %arg11[%c1_44, %c0_45, %c0_46] : memref<2x8x32xf32, #tpu.memory_space<vmem>>, vector<1x8x32xf32>
    %72 = vector.shape_cast %71 : vector<1x8x32xf32> to vector<8x32xf32>
    %73 = vector.extract_strided_slice %70 {offsets = [0, 0], sizes = [8, 32], strides = [1, 1]} : vector<8x128xf32> to vector<8x32xf32>
    %74 = arith.negf %73 : vector<8x32xf32>
    %75 = math.exp %74 : vector<8x32xf32>
    %cst_47 = arith.constant 1.000000e+00 : f32
    %76 = vector.broadcast %cst_47 : f32 to vector<8x32xf32>
    %77 = arith.addf %76, %75 : vector<8x32xf32>
    %78 = arith.divf %76, %77 : vector<8x32xf32>
    %79 = vector.extract_strided_slice %70 {offsets = [0, 32], sizes = [8, 32], strides = [1, 1]} : vector<8x128xf32> to vector<8x32xf32>
    %80 = arith.negf %79 : vector<8x32xf32>
    %81 = math.exp %80 : vector<8x32xf32>
    %cst_48 = arith.constant 1.000000e+00 : f32
    %82 = vector.broadcast %cst_48 : f32 to vector<8x32xf32>
    %83 = arith.addf %82, %81 : vector<8x32xf32>
    %84 = arith.divf %82, %83 : vector<8x32xf32>
    %85 = vector.extract_strided_slice %70 {offsets = [0, 64], sizes = [8, 32], strides = [1, 1]} : vector<8x128xf32> to vector<8x32xf32>
    %86 = math.tanh %85 : vector<8x32xf32>
    %87 = vector.extract_strided_slice %70 {offsets = [0, 96], sizes = [8, 32], strides = [1, 1]} : vector<8x128xf32> to vector<8x32xf32>
    %88 = arith.negf %87 : vector<8x32xf32>
    %89 = math.exp %88 : vector<8x32xf32>
    %cst_49 = arith.constant 1.000000e+00 : f32
    %90 = vector.broadcast %cst_49 : f32 to vector<8x32xf32>
    %91 = arith.addf %90, %89 : vector<8x32xf32>
    %92 = arith.divf %90, %91 : vector<8x32xf32>
    %93 = arith.mulf %84, %72 : vector<8x32xf32>
    %94 = arith.mulf %78, %86 : vector<8x32xf32>
    %95 = arith.addf %93, %94 : vector<8x32xf32>
    %96 = math.tanh %95 : vector<8x32xf32>
    %97 = arith.mulf %92, %96 : vector<8x32xf32>
    %c1_50 = arith.constant 1 : index
    %c0_51 = arith.constant 0 : index
    %c0_52 = arith.constant 0 : index
    %98 = vector.load %arg10[%c1_50, %c0_51, %c0_52] : memref<2x8x32xf32, #tpu.memory_space<vmem>>, vector<1x8x32xf32>
    %99 = vector.shape_cast %98 : vector<1x8x32xf32> to vector<8x32xf32>
    %100 = vector.shape_cast %97 : vector<8x32xf32> to vector<1x8x32xf32>
    tpu.vector_store %arg10[%c1_50, %c0_51, %c0_52], %100 {strides = array<i32>} : memref<2x8x32xf32, #tpu.memory_space<vmem>>, vector<1x8x32xf32>,
    %c1_53 = arith.constant 1 : index
    %c0_54 = arith.constant 0 : index
    %c0_55 = arith.constant 0 : index
    %101 = vector.load %arg11[%c1_53, %c0_54, %c0_55] : memref<2x8x32xf32, #tpu.memory_space<vmem>>, vector<1x8x32xf32>
    %102 = vector.shape_cast %101 : vector<1x8x32xf32> to vector<8x32xf32>
    %103 = vector.shape_cast %95 : vector<8x32xf32> to vector<1x8x32xf32>
    tpu.vector_store %arg11[%c1_53, %c0_54, %c0_55], %103 {strides = array<i32>} : memref<2x8x32xf32, #tpu.memory_space<vmem>>, vector<1x8x32xf32>,
    %104 = arith.index_cast %13 : i32 to index
    %c0_56 = arith.constant 0 : index
    %105 = vector.load %arg13[%104, %c0_56] : memref<64x32xf32, #tpu.memory_space<vmem>>, vector<8x32xf32>
    tpu.vector_store %arg13[%104, %c0_56], %97 {strides = array<i32>} : memref<64x32xf32, #tpu.memory_space<vmem>>, vector<8x32xf32>,
    %c1_i32 = arith.constant 1 : i32
    %c8_i32_57 = arith.constant 8 : i32
    %106 = arith.muli %c1_i32, %c8_i32_57 : i32
    %107 = tpu.assume_multiple %106, 8 : i32
    %108 = arith.index_cast %107 : i32 to index
    %c0_58 = arith.constant 0 : index
    %109 = vector.load %arg12[%108, %c0_58] : memref<64x128xf32, #tpu.memory_space<vmem>>, vector<8x128xf32>
    %c0_59 = arith.constant 0 : index
    %c0_60 = arith.constant 0 : index
    %c0_61 = arith.constant 0 : index
    %110 = vector.load %arg10[%c0_59, %c0_60, %c0_61] : memref<2x8x32xf32, #tpu.memory_space<vmem>>, vector<1x8x32xf32>
    %111 = vector.shape_cast %110 : vector<1x8x32xf32> to vector<8x32xf32>
    %112 = arith.truncf %111 : vector<8x32xf32> to vector<8x32xbf16>
    %c0_62 = arith.constant 0 : index
    %c0_63 = arith.constant 0 : index
    %c0_64 = arith.constant 0 : index
    %113 = vector.load %arg5[%c0_62, %c0_63, %c0_64] : memref<2x32x128xbf16, #tpu.memory_space<vmem>>, vector<1x32x128xbf16>
    %114 = vector.shape_cast %113 : vector<1x32x128xbf16> to vector<32x128xbf16>
    %cst_65 = arith.constant dense<0.000000e+00> : vector<8x128xf32>
    %115 = tpu.matmul %112, %114, %cst_65 {dimension_numbers = #tpu.dot_dimension_numbers<[1], [0], [0], [1], [0, 0, 1, 1], [], []>} : vector<8x32xbf16>, vector<32x128xbf16>, vector<8x128xf32> -> vector<8x128xf32>
    %116 = arith.addf %109, %115 : vector<8x128xf32>
    %c0_66 = arith.constant 0 : index
    %c0_67 = arith.constant 0 : index
    %c0_68 = arith.constant 0 : index
    %117 = vector.load %arg11[%c0_66, %c0_67, %c0_68] : memref<2x8x32xf32, #tpu.memory_space<vmem>>, vector<1x8x32xf32>
    %118 = vector.shape_cast %117 : vector<1x8x32xf32> to vector<8x32xf32>
    %119 = vector.extract_strided_slice %116 {offsets = [0, 0], sizes = [8, 32], strides = [1, 1]} : vector<8x128xf32> to vector<8x32xf32>
    %120 = arith.negf %119 : vector<8x32xf32>
    %121 = math.exp %120 : vector<8x32xf32>
    %cst_69 = arith.constant 1.000000e+00 : f32
    %122 = vector.broadcast %cst_69 : f32 to vector<8x32xf32>
    %123 = arith.addf %122, %121 : vector<8x32xf32>
    %124 = arith.divf %122, %123 : vector<8x32xf32>
    %125 = vector.extract_strided_slice %116 {offsets = [0, 32], sizes = [8, 32], strides = [1, 1]} : vector<8x128xf32> to vector<8x32xf32>
    %126 = arith.negf %125 : vector<8x32xf32>
    %127 = math.exp %126 : vector<8x32xf32>
    %cst_70 = arith.constant 1.000000e+00 : f32
    %128 = vector.broadcast %cst_70 : f32 to vector<8x32xf32>
    %129 = arith.addf %128, %127 : vector<8x32xf32>
    %130 = arith.divf %128, %129 : vector<8x32xf32>
    %131 = vector.extract_strided_slice %116 {offsets = [0, 64], sizes = [8, 32], strides = [1, 1]} : vector<8x128xf32> to vector<8x32xf32>
    %132 = math.tanh %131 : vector<8x32xf32>
    %133 = vector.extract_strided_slice %116 {offsets = [0, 96], sizes = [8, 32], strides = [1, 1]} : vector<8x128xf32> to vector<8x32xf32>
    %134 = arith.negf %133 : vector<8x32xf32>
    %135 = math.exp %134 : vector<8x32xf32>
    %cst_71 = arith.constant 1.000000e+00 : f32
    %136 = vector.broadcast %cst_71 : f32 to vector<8x32xf32>
    %137 = arith.addf %136, %135 : vector<8x32xf32>
    %138 = arith.divf %136, %137 : vector<8x32xf32>
    %139 = arith.mulf %130, %118 : vector<8x32xf32>
    %140 = arith.mulf %124, %132 : vector<8x32xf32>
    %141 = arith.addf %139, %140 : vector<8x32xf32>
    %142 = math.tanh %141 : vector<8x32xf32>
    %143 = arith.mulf %138, %142 : vector<8x32xf32>
    %c0_72 = arith.constant 0 : index
    %c0_73 = arith.constant 0 : index
    %c0_74 = arith.constant 0 : index
    %144 = vector.load %arg10[%c0_72, %c0_73, %c0_74] : memref<2x8x32xf32, #tpu.memory_space<vmem>>, vector<1x8x32xf32>
    %145 = vector.shape_cast %144 : vector<1x8x32xf32> to vector<8x32xf32>
    %146 = vector.shape_cast %143 : vector<8x32xf32> to vector<1x8x32xf32>
    tpu.vector_store %arg10[%c0_72, %c0_73, %c0_74], %146 {strides = array<i32>} : memref<2x8x32xf32, #tpu.memory_space<vmem>>, vector<1x8x32xf32>,
    %c0_75 = arith.constant 0 : index
    %c0_76 = arith.constant 0 : index
    %c0_77 = arith.constant 0 : index
    %147 = vector.load %arg11[%c0_75, %c0_76, %c0_77] : memref<2x8x32xf32, #tpu.memory_space<vmem>>, vector<1x8x32xf32>
    %148 = vector.shape_cast %147 : vector<1x8x32xf32> to vector<8x32xf32>
    %149 = vector.shape_cast %141 : vector<8x32xf32> to vector<1x8x32xf32>
    tpu.vector_store %arg11[%c0_75, %c0_76, %c0_77], %149 {strides = array<i32>} : memref<2x8x32xf32, #tpu.memory_space<vmem>>, vector<1x8x32xf32>,
    %150 = arith.truncf %143 : vector<8x32xf32> to vector<8x32xbf16>
    %c1_78 = arith.constant 1 : index
    %c0_79 = arith.constant 0 : index
    %c0_80 = arith.constant 0 : index
    %151 = vector.load %arg4[%c1_78, %c0_79, %c0_80] : memref<2x32x128xbf16, #tpu.memory_space<vmem>>, vector<1x32x128xbf16>
    %152 = vector.shape_cast %151 : vector<1x32x128xbf16> to vector<32x128xbf16>
    %cst_81 = arith.constant dense<0.000000e+00> : vector<8x128xf32>
    %153 = tpu.matmul %150, %152, %cst_81 {dimension_numbers = #tpu.dot_dimension_numbers<[1], [0], [0], [1], [0, 0, 1, 1], [], []>} : vector<8x32xbf16>, vector<32x128xbf16>, vector<8x128xf32> -> vector<8x128xf32>
    %c1_82 = arith.constant 1 : index
    %c0_83 = arith.constant 0 : index
    %c0_84 = arith.constant 0 : index
    %154 = vector.load %arg10[%c1_82, %c0_83, %c0_84] : memref<2x8x32xf32, #tpu.memory_space<vmem>>, vector<1x8x32xf32>
    %155 = vector.shape_cast %154 : vector<1x8x32xf32> to vector<8x32xf32>
    %156 = arith.truncf %155 : vector<8x32xf32> to vector<8x32xbf16>
    %c1_85 = arith.constant 1 : index
    %c0_86 = arith.constant 0 : index
    %c0_87 = arith.constant 0 : index
    %157 = vector.load %arg5[%c1_85, %c0_86, %c0_87] : memref<2x32x128xbf16, #tpu.memory_space<vmem>>, vector<1x32x128xbf16>
    %158 = vector.shape_cast %157 : vector<1x32x128xbf16> to vector<32x128xbf16>
    %cst_88 = arith.constant dense<0.000000e+00> : vector<8x128xf32>
    %159 = tpu.matmul %156, %158, %cst_88 {dimension_numbers = #tpu.dot_dimension_numbers<[1], [0], [0], [1], [0, 0, 1, 1], [], []>} : vector<8x32xbf16>, vector<32x128xbf16>, vector<8x128xf32> -> vector<8x128xf32>
    %160 = arith.addf %153, %159 : vector<8x128xf32>
    %c1_89 = arith.constant 1 : index
    %c0_90 = arith.constant 0 : index
    %c0_91 = arith.constant 0 : index
    %161 = vector.load %arg6[%c1_89, %c0_90, %c0_91] : memref<2x1x128xf32, #tpu.memory_space<vmem>>, vector<1x1x128xf32>
    %162 = vector.shape_cast %161 : vector<1x1x128xf32> to vector<1x128xf32>
    %163 = vector.broadcast %162 : vector<1x128xf32> to vector<8x128xf32>
    %164 = arith.addf %160, %163 : vector<8x128xf32>
    %c1_92 = arith.constant 1 : index
    %c0_93 = arith.constant 0 : index
    %c0_94 = arith.constant 0 : index
    %165 = vector.load %arg11[%c1_92, %c0_93, %c0_94] : memref<2x8x32xf32, #tpu.memory_space<vmem>>, vector<1x8x32xf32>
    %166 = vector.shape_cast %165 : vector<1x8x32xf32> to vector<8x32xf32>
    %167 = vector.extract_strided_slice %164 {offsets = [0, 0], sizes = [8, 32], strides = [1, 1]} : vector<8x128xf32> to vector<8x32xf32>
    %168 = arith.negf %167 : vector<8x32xf32>
    %169 = math.exp %168 : vector<8x32xf32>
    %cst_95 = arith.constant 1.000000e+00 : f32
    %170 = vector.broadcast %cst_95 : f32 to vector<8x32xf32>
    %171 = arith.addf %170, %169 : vector<8x32xf32>
    %172 = arith.divf %170, %171 : vector<8x32xf32>
    %173 = vector.extract_strided_slice %164 {offsets = [0, 32], sizes = [8, 32], strides = [1, 1]} : vector<8x128xf32> to vector<8x32xf32>
    %174 = arith.negf %173 : vector<8x32xf32>
    %175 = math.exp %174 : vector<8x32xf32>
    %cst_96 = arith.constant 1.000000e+00 : f32
    %176 = vector.broadcast %cst_96 : f32 to vector<8x32xf32>
    %177 = arith.addf %176, %175 : vector<8x32xf32>
    %178 = arith.divf %176, %177 : vector<8x32xf32>
    %179 = vector.extract_strided_slice %164 {offsets = [0, 64], sizes = [8, 32], strides = [1, 1]} : vector<8x128xf32> to vector<8x32xf32>
    %180 = math.tanh %179 : vector<8x32xf32>
    %181 = vector.extract_strided_slice %164 {offsets = [0, 96], sizes = [8, 32], strides = [1, 1]} : vector<8x128xf32> to vector<8x32xf32>
    %182 = arith.negf %181 : vector<8x32xf32>
    %183 = math.exp %182 : vector<8x32xf32>
    %cst_97 = arith.constant 1.000000e+00 : f32
    %184 = vector.broadcast %cst_97 : f32 to vector<8x32xf32>
    %185 = arith.addf %184, %183 : vector<8x32xf32>
    %186 = arith.divf %184, %185 : vector<8x32xf32>
    %187 = arith.mulf %178, %166 : vector<8x32xf32>
    %188 = arith.mulf %172, %180 : vector<8x32xf32>
    %189 = arith.addf %187, %188 : vector<8x32xf32>
    %190 = math.tanh %189 : vector<8x32xf32>
    %191 = arith.mulf %186, %190 : vector<8x32xf32>
    %c1_98 = arith.constant 1 : index
    %c0_99 = arith.constant 0 : index
    %c0_100 = arith.constant 0 : index
    %192 = vector.load %arg10[%c1_98, %c0_99, %c0_100] : memref<2x8x32xf32, #tpu.memory_space<vmem>>, vector<1x8x32xf32>
    %193 = vector.shape_cast %192 : vector<1x8x32xf32> to vector<8x32xf32>
    %194 = vector.shape_cast %191 : vector<8x32xf32> to vector<1x8x32xf32>
    tpu.vector_store %arg10[%c1_98, %c0_99, %c0_100], %194 {strides = array<i32>} : memref<2x8x32xf32, #tpu.memory_space<vmem>>, vector<1x8x32xf32>,
    %c1_101 = arith.constant 1 : index
    %c0_102 = arith.constant 0 : index
    %c0_103 = arith.constant 0 : index
    %195 = vector.load %arg11[%c1_101, %c0_102, %c0_103] : memref<2x8x32xf32, #tpu.memory_space<vmem>>, vector<1x8x32xf32>
    %196 = vector.shape_cast %195 : vector<1x8x32xf32> to vector<8x32xf32>
    %197 = vector.shape_cast %189 : vector<8x32xf32> to vector<1x8x32xf32>
    tpu.vector_store %arg11[%c1_101, %c0_102, %c0_103], %197 {strides = array<i32>} : memref<2x8x32xf32, #tpu.memory_space<vmem>>, vector<1x8x32xf32>,
    %198 = arith.index_cast %107 : i32 to index
    %c0_104 = arith.constant 0 : index
    %199 = vector.load %arg13[%198, %c0_104] : memref<64x32xf32, #tpu.memory_space<vmem>>, vector<8x32xf32>
    tpu.vector_store %arg13[%198, %c0_104], %191 {strides = array<i32>} : memref<64x32xf32, #tpu.memory_space<vmem>>, vector<8x32xf32>,
    %c2_i32 = arith.constant 2 : i32
    %c8_i32_105 = arith.constant 8 : i32
    %200 = arith.muli %c2_i32, %c8_i32_105 : i32
    %201 = tpu.assume_multiple %200, 8 : i32
    %202 = arith.index_cast %201 : i32 to index
    %c0_106 = arith.constant 0 : index
    %203 = vector.load %arg12[%202, %c0_106] : memref<64x128xf32, #tpu.memory_space<vmem>>, vector<8x128xf32>
    %c0_107 = arith.constant 0 : index
    %c0_108 = arith.constant 0 : index
    %c0_109 = arith.constant 0 : index
    %204 = vector.load %arg10[%c0_107, %c0_108, %c0_109] : memref<2x8x32xf32, #tpu.memory_space<vmem>>, vector<1x8x32xf32>
    %205 = vector.shape_cast %204 : vector<1x8x32xf32> to vector<8x32xf32>
    %206 = arith.truncf %205 : vector<8x32xf32> to vector<8x32xbf16>
    %c0_110 = arith.constant 0 : index
    %c0_111 = arith.constant 0 : index
    %c0_112 = arith.constant 0 : index
    %207 = vector.load %arg5[%c0_110, %c0_111, %c0_112] : memref<2x32x128xbf16, #tpu.memory_space<vmem>>, vector<1x32x128xbf16>
    %208 = vector.shape_cast %207 : vector<1x32x128xbf16> to vector<32x128xbf16>
    %cst_113 = arith.constant dense<0.000000e+00> : vector<8x128xf32>
    %209 = tpu.matmul %206, %208, %cst_113 {dimension_numbers = #tpu.dot_dimension_numbers<[1], [0], [0], [1], [0, 0, 1, 1], [], []>} : vector<8x32xbf16>, vector<32x128xbf16>, vector<8x128xf32> -> vector<8x128xf32>
    %210 = arith.addf %203, %209 : vector<8x128xf32>
    %c0_114 = arith.constant 0 : index
    %c0_115 = arith.constant 0 : index
    %c0_116 = arith.constant 0 : index
    %211 = vector.load %arg11[%c0_114, %c0_115, %c0_116] : memref<2x8x32xf32, #tpu.memory_space<vmem>>, vector<1x8x32xf32>
    %212 = vector.shape_cast %211 : vector<1x8x32xf32> to vector<8x32xf32>
    %213 = vector.extract_strided_slice %210 {offsets = [0, 0], sizes = [8, 32], strides = [1, 1]} : vector<8x128xf32> to vector<8x32xf32>
    %214 = arith.negf %213 : vector<8x32xf32>
    %215 = math.exp %214 : vector<8x32xf32>
    %cst_117 = arith.constant 1.000000e+00 : f32
    %216 = vector.broadcast %cst_117 : f32 to vector<8x32xf32>
    %217 = arith.addf %216, %215 : vector<8x32xf32>
    %218 = arith.divf %216, %217 : vector<8x32xf32>
    %219 = vector.extract_strided_slice %210 {offsets = [0, 32], sizes = [8, 32], strides = [1, 1]} : vector<8x128xf32> to vector<8x32xf32>
    %220 = arith.negf %219 : vector<8x32xf32>
    %221 = math.exp %220 : vector<8x32xf32>
    %cst_118 = arith.constant 1.000000e+00 : f32
    %222 = vector.broadcast %cst_118 : f32 to vector<8x32xf32>
    %223 = arith.addf %222, %221 : vector<8x32xf32>
    %224 = arith.divf %222, %223 : vector<8x32xf32>
    %225 = vector.extract_strided_slice %210 {offsets = [0, 64], sizes = [8, 32], strides = [1, 1]} : vector<8x128xf32> to vector<8x32xf32>
    %226 = math.tanh %225 : vector<8x32xf32>
    %227 = vector.extract_strided_slice %210 {offsets = [0, 96], sizes = [8, 32], strides = [1, 1]} : vector<8x128xf32> to vector<8x32xf32>
    %228 = arith.negf %227 : vector<8x32xf32>
    %229 = math.exp %228 : vector<8x32xf32>
    %cst_119 = arith.constant 1.000000e+00 : f32
    %230 = vector.broadcast %cst_119 : f32 to vector<8x32xf32>
    %231 = arith.addf %230, %229 : vector<8x32xf32>
    %232 = arith.divf %230, %231 : vector<8x32xf32>
    %233 = arith.mulf %224, %212 : vector<8x32xf32>
    %234 = arith.mulf %218, %226 : vector<8x32xf32>
    %235 = arith.addf %233, %234 : vector<8x32xf32>
    %236 = math.tanh %235 : vector<8x32xf32>
    %237 = arith.mulf %232, %236 : vector<8x32xf32>
    %c0_120 = arith.constant 0 : index
    %c0_121 = arith.constant 0 : index
    %c0_122 = arith.constant 0 : index
    %238 = vector.load %arg10[%c0_120, %c0_121, %c0_122] : memref<2x8x32xf32, #tpu.memory_space<vmem>>, vector<1x8x32xf32>
    %239 = vector.shape_cast %238 : vector<1x8x32xf32> to vector<8x32xf32>
    %240 = vector.shape_cast %237 : vector<8x32xf32> to vector<1x8x32xf32>
    tpu.vector_store %arg10[%c0_120, %c0_121, %c0_122], %240 {strides = array<i32>} : memref<2x8x32xf32, #tpu.memory_space<vmem>>, vector<1x8x32xf32>,
    %c0_123 = arith.constant 0 : index
    %c0_124 = arith.constant 0 : index
    %c0_125 = arith.constant 0 : index
    %241 = vector.load %arg11[%c0_123, %c0_124, %c0_125] : memref<2x8x32xf32, #tpu.memory_space<vmem>>, vector<1x8x32xf32>
    %242 = vector.shape_cast %241 : vector<1x8x32xf32> to vector<8x32xf32>
    %243 = vector.shape_cast %235 : vector<8x32xf32> to vector<1x8x32xf32>
    tpu.vector_store %arg11[%c0_123, %c0_124, %c0_125], %243 {strides = array<i32>} : memref<2x8x32xf32, #tpu.memory_space<vmem>>, vector<1x8x32xf32>,
    %244 = arith.truncf %237 : vector<8x32xf32> to vector<8x32xbf16>
    %c1_126 = arith.constant 1 : index
    %c0_127 = arith.constant 0 : index
    %c0_128 = arith.constant 0 : index
    %245 = vector.load %arg4[%c1_126, %c0_127, %c0_128] : memref<2x32x128xbf16, #tpu.memory_space<vmem>>, vector<1x32x128xbf16>
    %246 = vector.shape_cast %245 : vector<1x32x128xbf16> to vector<32x128xbf16>
    %cst_129 = arith.constant dense<0.000000e+00> : vector<8x128xf32>
    %247 = tpu.matmul %244, %246, %cst_129 {dimension_numbers = #tpu.dot_dimension_numbers<[1], [0], [0], [1], [0, 0, 1, 1], [], []>} : vector<8x32xbf16>, vector<32x128xbf16>, vector<8x128xf32> -> vector<8x128xf32>
    %c1_130 = arith.constant 1 : index
    %c0_131 = arith.constant 0 : index
    %c0_132 = arith.constant 0 : index
    %248 = vector.load %arg10[%c1_130, %c0_131, %c0_132] : memref<2x8x32xf32, #tpu.memory_space<vmem>>, vector<1x8x32xf32>
    %249 = vector.shape_cast %248 : vector<1x8x32xf32> to vector<8x32xf32>
    %250 = arith.truncf %249 : vector<8x32xf32> to vector<8x32xbf16>
    %c1_133 = arith.constant 1 : index
    %c0_134 = arith.constant 0 : index
    %c0_135 = arith.constant 0 : index
    %251 = vector.load %arg5[%c1_133, %c0_134, %c0_135] : memref<2x32x128xbf16, #tpu.memory_space<vmem>>, vector<1x32x128xbf16>
    %252 = vector.shape_cast %251 : vector<1x32x128xbf16> to vector<32x128xbf16>
    %cst_136 = arith.constant dense<0.000000e+00> : vector<8x128xf32>
    %253 = tpu.matmul %250, %252, %cst_136 {dimension_numbers = #tpu.dot_dimension_numbers<[1], [0], [0], [1], [0, 0, 1, 1], [], []>} : vector<8x32xbf16>, vector<32x128xbf16>, vector<8x128xf32> -> vector<8x128xf32>
    %254 = arith.addf %247, %253 : vector<8x128xf32>
    %c1_137 = arith.constant 1 : index
    %c0_138 = arith.constant 0 : index
    %c0_139 = arith.constant 0 : index
    %255 = vector.load %arg6[%c1_137, %c0_138, %c0_139] : memref<2x1x128xf32, #tpu.memory_space<vmem>>, vector<1x1x128xf32>
    %256 = vector.shape_cast %255 : vector<1x1x128xf32> to vector<1x128xf32>
    %257 = vector.broadcast %256 : vector<1x128xf32> to vector<8x128xf32>
    %258 = arith.addf %254, %257 : vector<8x128xf32>
    %c1_140 = arith.constant 1 : index
    %c0_141 = arith.constant 0 : index
    %c0_142 = arith.constant 0 : index
    %259 = vector.load %arg11[%c1_140, %c0_141, %c0_142] : memref<2x8x32xf32, #tpu.memory_space<vmem>>, vector<1x8x32xf32>
    %260 = vector.shape_cast %259 : vector<1x8x32xf32> to vector<8x32xf32>
    %261 = vector.extract_strided_slice %258 {offsets = [0, 0], sizes = [8, 32], strides = [1, 1]} : vector<8x128xf32> to vector<8x32xf32>
    %262 = arith.negf %261 : vector<8x32xf32>
    %263 = math.exp %262 : vector<8x32xf32>
    %cst_143 = arith.constant 1.000000e+00 : f32
    %264 = vector.broadcast %cst_143 : f32 to vector<8x32xf32>
    %265 = arith.addf %264, %263 : vector<8x32xf32>
    %266 = arith.divf %264, %265 : vector<8x32xf32>
    %267 = vector.extract_strided_slice %258 {offsets = [0, 32], sizes = [8, 32], strides = [1, 1]} : vector<8x128xf32> to vector<8x32xf32>
    %268 = arith.negf %267 : vector<8x32xf32>
    %269 = math.exp %268 : vector<8x32xf32>
    %cst_144 = arith.constant 1.000000e+00 : f32
    %270 = vector.broadcast %cst_144 : f32 to vector<8x32xf32>
    %271 = arith.addf %270, %269 : vector<8x32xf32>
    %272 = arith.divf %270, %271 : vector<8x32xf32>
    %273 = vector.extract_strided_slice %258 {offsets = [0, 64], sizes = [8, 32], strides = [1, 1]} : vector<8x128xf32> to vector<8x32xf32>
    %274 = math.tanh %273 : vector<8x32xf32>
    %275 = vector.extract_strided_slice %258 {offsets = [0, 96], sizes = [8, 32], strides = [1, 1]} : vector<8x128xf32> to vector<8x32xf32>
    %276 = arith.negf %275 : vector<8x32xf32>
    %277 = math.exp %276 : vector<8x32xf32>
    %cst_145 = arith.constant 1.000000e+00 : f32
    %278 = vector.broadcast %cst_145 : f32 to vector<8x32xf32>
    %279 = arith.addf %278, %277 : vector<8x32xf32>
    %280 = arith.divf %278, %279 : vector<8x32xf32>
    %281 = arith.mulf %272, %260 : vector<8x32xf32>
    %282 = arith.mulf %266, %274 : vector<8x32xf32>
    %283 = arith.addf %281, %282 : vector<8x32xf32>
    %284 = math.tanh %283 : vector<8x32xf32>
    %285 = arith.mulf %280, %284 : vector<8x32xf32>
    %c1_146 = arith.constant 1 : index
    %c0_147 = arith.constant 0 : index
    %c0_148 = arith.constant 0 : index
    %286 = vector.load %arg10[%c1_146, %c0_147, %c0_148] : memref<2x8x32xf32, #tpu.memory_space<vmem>>, vector<1x8x32xf32>
    %287 = vector.shape_cast %286 : vector<1x8x32xf32> to vector<8x32xf32>
    %288 = vector.shape_cast %285 : vector<8x32xf32> to vector<1x8x32xf32>
    tpu.vector_store %arg10[%c1_146, %c0_147, %c0_148], %288 {strides = array<i32>} : memref<2x8x32xf32, #tpu.memory_space<vmem>>, vector<1x8x32xf32>,
    %c1_149 = arith.constant 1 : index
    %c0_150 = arith.constant 0 : index
    %c0_151 = arith.constant 0 : index
    %289 = vector.load %arg11[%c1_149, %c0_150, %c0_151] : memref<2x8x32xf32, #tpu.memory_space<vmem>>, vector<1x8x32xf32>
    %290 = vector.shape_cast %289 : vector<1x8x32xf32> to vector<8x32xf32>
    %291 = vector.shape_cast %283 : vector<8x32xf32> to vector<1x8x32xf32>
    tpu.vector_store %arg11[%c1_149, %c0_150, %c0_151], %291 {strides = array<i32>} : memref<2x8x32xf32, #tpu.memory_space<vmem>>, vector<1x8x32xf32>,
    %292 = arith.index_cast %201 : i32 to index
    %c0_152 = arith.constant 0 : index
    %293 = vector.load %arg13[%292, %c0_152] : memref<64x32xf32, #tpu.memory_space<vmem>>, vector<8x32xf32>
    tpu.vector_store %arg13[%292, %c0_152], %285 {strides = array<i32>} : memref<64x32xf32, #tpu.memory_space<vmem>>, vector<8x32xf32>,
    %c3_i32 = arith.constant 3 : i32
    %c8_i32_153 = arith.constant 8 : i32
    %294 = arith.muli %c3_i32, %c8_i32_153 : i32
    %295 = tpu.assume_multiple %294, 8 : i32
    %296 = arith.index_cast %295 : i32 to index
    %c0_154 = arith.constant 0 : index
    %297 = vector.load %arg12[%296, %c0_154] : memref<64x128xf32, #tpu.memory_space<vmem>>, vector<8x128xf32>
    %c0_155 = arith.constant 0 : index
    %c0_156 = arith.constant 0 : index
    %c0_157 = arith.constant 0 : index
    %298 = vector.load %arg10[%c0_155, %c0_156, %c0_157] : memref<2x8x32xf32, #tpu.memory_space<vmem>>, vector<1x8x32xf32>
    %299 = vector.shape_cast %298 : vector<1x8x32xf32> to vector<8x32xf32>
    %300 = arith.truncf %299 : vector<8x32xf32> to vector<8x32xbf16>
    %c0_158 = arith.constant 0 : index
    %c0_159 = arith.constant 0 : index
    %c0_160 = arith.constant 0 : index
    %301 = vector.load %arg5[%c0_158, %c0_159, %c0_160] : memref<2x32x128xbf16, #tpu.memory_space<vmem>>, vector<1x32x128xbf16>
    %302 = vector.shape_cast %301 : vector<1x32x128xbf16> to vector<32x128xbf16>
    %cst_161 = arith.constant dense<0.000000e+00> : vector<8x128xf32>
    %303 = tpu.matmul %300, %302, %cst_161 {dimension_numbers = #tpu.dot_dimension_numbers<[1], [0], [0], [1], [0, 0, 1, 1], [], []>} : vector<8x32xbf16>, vector<32x128xbf16>, vector<8x128xf32> -> vector<8x128xf32>
    %304 = arith.addf %297, %303 : vector<8x128xf32>
    %c0_162 = arith.constant 0 : index
    %c0_163 = arith.constant 0 : index
    %c0_164 = arith.constant 0 : index
    %305 = vector.load %arg11[%c0_162, %c0_163, %c0_164] : memref<2x8x32xf32, #tpu.memory_space<vmem>>, vector<1x8x32xf32>
    %306 = vector.shape_cast %305 : vector<1x8x32xf32> to vector<8x32xf32>
    %307 = vector.extract_strided_slice %304 {offsets = [0, 0], sizes = [8, 32], strides = [1, 1]} : vector<8x128xf32> to vector<8x32xf32>
    %308 = arith.negf %307 : vector<8x32xf32>
    %309 = math.exp %308 : vector<8x32xf32>
    %cst_165 = arith.constant 1.000000e+00 : f32
    %310 = vector.broadcast %cst_165 : f32 to vector<8x32xf32>
    %311 = arith.addf %310, %309 : vector<8x32xf32>
    %312 = arith.divf %310, %311 : vector<8x32xf32>
    %313 = vector.extract_strided_slice %304 {offsets = [0, 32], sizes = [8, 32], strides = [1, 1]} : vector<8x128xf32> to vector<8x32xf32>
    %314 = arith.negf %313 : vector<8x32xf32>
    %315 = math.exp %314 : vector<8x32xf32>
    %cst_166 = arith.constant 1.000000e+00 : f32
    %316 = vector.broadcast %cst_166 : f32 to vector<8x32xf32>
    %317 = arith.addf %316, %315 : vector<8x32xf32>
    %318 = arith.divf %316, %317 : vector<8x32xf32>
    %319 = vector.extract_strided_slice %304 {offsets = [0, 64], sizes = [8, 32], strides = [1, 1]} : vector<8x128xf32> to vector<8x32xf32>
    %320 = math.tanh %319 : vector<8x32xf32>
    %321 = vector.extract_strided_slice %304 {offsets = [0, 96], sizes = [8, 32], strides = [1, 1]} : vector<8x128xf32> to vector<8x32xf32>
    %322 = arith.negf %321 : vector<8x32xf32>
    %323 = math.exp %322 : vector<8x32xf32>
    %cst_167 = arith.constant 1.000000e+00 : f32
    %324 = vector.broadcast %cst_167 : f32 to vector<8x32xf32>
    %325 = arith.addf %324, %323 : vector<8x32xf32>
    %326 = arith.divf %324, %325 : vector<8x32xf32>
    %327 = arith.mulf %318, %306 : vector<8x32xf32>
    %328 = arith.mulf %312, %320 : vector<8x32xf32>
    %329 = arith.addf %327, %328 : vector<8x32xf32>
    %330 = math.tanh %329 : vector<8x32xf32>
    %331 = arith.mulf %326, %330 : vector<8x32xf32>
    %c0_168 = arith.constant 0 : index
    %c0_169 = arith.constant 0 : index
    %c0_170 = arith.constant 0 : index
    %332 = vector.load %arg10[%c0_168, %c0_169, %c0_170] : memref<2x8x32xf32, #tpu.memory_space<vmem>>, vector<1x8x32xf32>
    %333 = vector.shape_cast %332 : vector<1x8x32xf32> to vector<8x32xf32>
    %334 = vector.shape_cast %331 : vector<8x32xf32> to vector<1x8x32xf32>
    tpu.vector_store %arg10[%c0_168, %c0_169, %c0_170], %334 {strides = array<i32>} : memref<2x8x32xf32, #tpu.memory_space<vmem>>, vector<1x8x32xf32>,
    %c0_171 = arith.constant 0 : index
    %c0_172 = arith.constant 0 : index
    %c0_173 = arith.constant 0 : index
    %335 = vector.load %arg11[%c0_171, %c0_172, %c0_173] : memref<2x8x32xf32, #tpu.memory_space<vmem>>, vector<1x8x32xf32>
    %336 = vector.shape_cast %335 : vector<1x8x32xf32> to vector<8x32xf32>
    %337 = vector.shape_cast %329 : vector<8x32xf32> to vector<1x8x32xf32>
    tpu.vector_store %arg11[%c0_171, %c0_172, %c0_173], %337 {strides = array<i32>} : memref<2x8x32xf32, #tpu.memory_space<vmem>>, vector<1x8x32xf32>,
    %338 = arith.truncf %331 : vector<8x32xf32> to vector<8x32xbf16>
    %c1_174 = arith.constant 1 : index
    %c0_175 = arith.constant 0 : index
    %c0_176 = arith.constant 0 : index
    %339 = vector.load %arg4[%c1_174, %c0_175, %c0_176] : memref<2x32x128xbf16, #tpu.memory_space<vmem>>, vector<1x32x128xbf16>
    %340 = vector.shape_cast %339 : vector<1x32x128xbf16> to vector<32x128xbf16>
    %cst_177 = arith.constant dense<0.000000e+00> : vector<8x128xf32>
    %341 = tpu.matmul %338, %340, %cst_177 {dimension_numbers = #tpu.dot_dimension_numbers<[1], [0], [0], [1], [0, 0, 1, 1], [], []>} : vector<8x32xbf16>, vector<32x128xbf16>, vector<8x128xf32> -> vector<8x128xf32>
    %c1_178 = arith.constant 1 : index
    %c0_179 = arith.constant 0 : index
    %c0_180 = arith.constant 0 : index
    %342 = vector.load %arg10[%c1_178, %c0_179, %c0_180] : memref<2x8x32xf32, #tpu.memory_space<vmem>>, vector<1x8x32xf32>
    %343 = vector.shape_cast %342 : vector<1x8x32xf32> to vector<8x32xf32>
    %344 = arith.truncf %343 : vector<8x32xf32> to vector<8x32xbf16>
    %c1_181 = arith.constant 1 : index
    %c0_182 = arith.constant 0 : index
    %c0_183 = arith.constant 0 : index
    %345 = vector.load %arg5[%c1_181, %c0_182, %c0_183] : memref<2x32x128xbf16, #tpu.memory_space<vmem>>, vector<1x32x128xbf16>
    %346 = vector.shape_cast %345 : vector<1x32x128xbf16> to vector<32x128xbf16>
    %cst_184 = arith.constant dense<0.000000e+00> : vector<8x128xf32>
    %347 = tpu.matmul %344, %346, %cst_184 {dimension_numbers = #tpu.dot_dimension_numbers<[1], [0], [0], [1], [0, 0, 1, 1], [], []>} : vector<8x32xbf16>, vector<32x128xbf16>, vector<8x128xf32> -> vector<8x128xf32>
    %348 = arith.addf %341, %347 : vector<8x128xf32>
    %c1_185 = arith.constant 1 : index
    %c0_186 = arith.constant 0 : index
    %c0_187 = arith.constant 0 : index
    %349 = vector.load %arg6[%c1_185, %c0_186, %c0_187] : memref<2x1x128xf32, #tpu.memory_space<vmem>>, vector<1x1x128xf32>
    %350 = vector.shape_cast %349 : vector<1x1x128xf32> to vector<1x128xf32>
    %351 = vector.broadcast %350 : vector<1x128xf32> to vector<8x128xf32>
    %352 = arith.addf %348, %351 : vector<8x128xf32>
    %c1_188 = arith.constant 1 : index
    %c0_189 = arith.constant 0 : index
    %c0_190 = arith.constant 0 : index
    %353 = vector.load %arg11[%c1_188, %c0_189, %c0_190] : memref<2x8x32xf32, #tpu.memory_space<vmem>>, vector<1x8x32xf32>
    %354 = vector.shape_cast %353 : vector<1x8x32xf32> to vector<8x32xf32>
    %355 = vector.extract_strided_slice %352 {offsets = [0, 0], sizes = [8, 32], strides = [1, 1]} : vector<8x128xf32> to vector<8x32xf32>
    %356 = arith.negf %355 : vector<8x32xf32>
    %357 = math.exp %356 : vector<8x32xf32>
    %cst_191 = arith.constant 1.000000e+00 : f32
    %358 = vector.broadcast %cst_191 : f32 to vector<8x32xf32>
    %359 = arith.addf %358, %357 : vector<8x32xf32>
    %360 = arith.divf %358, %359 : vector<8x32xf32>
    %361 = vector.extract_strided_slice %352 {offsets = [0, 32], sizes = [8, 32], strides = [1, 1]} : vector<8x128xf32> to vector<8x32xf32>
    %362 = arith.negf %361 : vector<8x32xf32>
    %363 = math.exp %362 : vector<8x32xf32>
    %cst_192 = arith.constant 1.000000e+00 : f32
    %364 = vector.broadcast %cst_192 : f32 to vector<8x32xf32>
    %365 = arith.addf %364, %363 : vector<8x32xf32>
    %366 = arith.divf %364, %365 : vector<8x32xf32>
    %367 = vector.extract_strided_slice %352 {offsets = [0, 64], sizes = [8, 32], strides = [1, 1]} : vector<8x128xf32> to vector<8x32xf32>
    %368 = math.tanh %367 : vector<8x32xf32>
    %369 = vector.extract_strided_slice %352 {offsets = [0, 96], sizes = [8, 32], strides = [1, 1]} : vector<8x128xf32> to vector<8x32xf32>
    %370 = arith.negf %369 : vector<8x32xf32>
    %371 = math.exp %370 : vector<8x32xf32>
    %cst_193 = arith.constant 1.000000e+00 : f32
    %372 = vector.broadcast %cst_193 : f32 to vector<8x32xf32>
    %373 = arith.addf %372, %371 : vector<8x32xf32>
    %374 = arith.divf %372, %373 : vector<8x32xf32>
    %375 = arith.mulf %366, %354 : vector<8x32xf32>
    %376 = arith.mulf %360, %368 : vector<8x32xf32>
    %377 = arith.addf %375, %376 : vector<8x32xf32>
    %378 = math.tanh %377 : vector<8x32xf32>
    %379 = arith.mulf %374, %378 : vector<8x32xf32>
    %c1_194 = arith.constant 1 : index
    %c0_195 = arith.constant 0 : index
    %c0_196 = arith.constant 0 : index
    %380 = vector.load %arg10[%c1_194, %c0_195, %c0_196] : memref<2x8x32xf32, #tpu.memory_space<vmem>>, vector<1x8x32xf32>
    %381 = vector.shape_cast %380 : vector<1x8x32xf32> to vector<8x32xf32>
    %382 = vector.shape_cast %379 : vector<8x32xf32> to vector<1x8x32xf32>
    tpu.vector_store %arg10[%c1_194, %c0_195, %c0_196], %382 {strides = array<i32>} : memref<2x8x32xf32, #tpu.memory_space<vmem>>, vector<1x8x32xf32>,
    %c1_197 = arith.constant 1 : index
    %c0_198 = arith.constant 0 : index
    %c0_199 = arith.constant 0 : index
    %383 = vector.load %arg11[%c1_197, %c0_198, %c0_199] : memref<2x8x32xf32, #tpu.memory_space<vmem>>, vector<1x8x32xf32>
    %384 = vector.shape_cast %383 : vector<1x8x32xf32> to vector<8x32xf32>
    %385 = vector.shape_cast %377 : vector<8x32xf32> to vector<1x8x32xf32>
    tpu.vector_store %arg11[%c1_197, %c0_198, %c0_199], %385 {strides = array<i32>} : memref<2x8x32xf32, #tpu.memory_space<vmem>>, vector<1x8x32xf32>,
    %386 = arith.index_cast %295 : i32 to index
    %c0_200 = arith.constant 0 : index
    %387 = vector.load %arg13[%386, %c0_200] : memref<64x32xf32, #tpu.memory_space<vmem>>, vector<8x32xf32>
    tpu.vector_store %arg13[%386, %c0_200], %379 {strides = array<i32>} : memref<64x32xf32, #tpu.memory_space<vmem>>, vector<8x32xf32>,
    %c4_i32 = arith.constant 4 : i32
    %c8_i32_201 = arith.constant 8 : i32
    %388 = arith.muli %c4_i32, %c8_i32_201 : i32
    %389 = tpu.assume_multiple %388, 8 : i32
    %390 = arith.index_cast %389 : i32 to index
    %c0_202 = arith.constant 0 : index
    %391 = vector.load %arg12[%390, %c0_202] : memref<64x128xf32, #tpu.memory_space<vmem>>, vector<8x128xf32>
    %c0_203 = arith.constant 0 : index
    %c0_204 = arith.constant 0 : index
    %c0_205 = arith.constant 0 : index
    %392 = vector.load %arg10[%c0_203, %c0_204, %c0_205] : memref<2x8x32xf32, #tpu.memory_space<vmem>>, vector<1x8x32xf32>
    %393 = vector.shape_cast %392 : vector<1x8x32xf32> to vector<8x32xf32>
    %394 = arith.truncf %393 : vector<8x32xf32> to vector<8x32xbf16>
    %c0_206 = arith.constant 0 : index
    %c0_207 = arith.constant 0 : index
    %c0_208 = arith.constant 0 : index
    %395 = vector.load %arg5[%c0_206, %c0_207, %c0_208] : memref<2x32x128xbf16, #tpu.memory_space<vmem>>, vector<1x32x128xbf16>
    %396 = vector.shape_cast %395 : vector<1x32x128xbf16> to vector<32x128xbf16>
    %cst_209 = arith.constant dense<0.000000e+00> : vector<8x128xf32>
    %397 = tpu.matmul %394, %396, %cst_209 {dimension_numbers = #tpu.dot_dimension_numbers<[1], [0], [0], [1], [0, 0, 1, 1], [], []>} : vector<8x32xbf16>, vector<32x128xbf16>, vector<8x128xf32> -> vector<8x128xf32>
    %398 = arith.addf %391, %397 : vector<8x128xf32>
    %c0_210 = arith.constant 0 : index
    %c0_211 = arith.constant 0 : index
    %c0_212 = arith.constant 0 : index
    %399 = vector.load %arg11[%c0_210, %c0_211, %c0_212] : memref<2x8x32xf32, #tpu.memory_space<vmem>>, vector<1x8x32xf32>
    %400 = vector.shape_cast %399 : vector<1x8x32xf32> to vector<8x32xf32>
    %401 = vector.extract_strided_slice %398 {offsets = [0, 0], sizes = [8, 32], strides = [1, 1]} : vector<8x128xf32> to vector<8x32xf32>
    %402 = arith.negf %401 : vector<8x32xf32>
    %403 = math.exp %402 : vector<8x32xf32>
    %cst_213 = arith.constant 1.000000e+00 : f32
    %404 = vector.broadcast %cst_213 : f32 to vector<8x32xf32>
    %405 = arith.addf %404, %403 : vector<8x32xf32>
    %406 = arith.divf %404, %405 : vector<8x32xf32>
    %407 = vector.extract_strided_slice %398 {offsets = [0, 32], sizes = [8, 32], strides = [1, 1]} : vector<8x128xf32> to vector<8x32xf32>
    %408 = arith.negf %407 : vector<8x32xf32>
    %409 = math.exp %408 : vector<8x32xf32>
    %cst_214 = arith.constant 1.000000e+00 : f32
    %410 = vector.broadcast %cst_214 : f32 to vector<8x32xf32>
    %411 = arith.addf %410, %409 : vector<8x32xf32>
    %412 = arith.divf %410, %411 : vector<8x32xf32>
    %413 = vector.extract_strided_slice %398 {offsets = [0, 64], sizes = [8, 32], strides = [1, 1]} : vector<8x128xf32> to vector<8x32xf32>
    %414 = math.tanh %413 : vector<8x32xf32>
    %415 = vector.extract_strided_slice %398 {offsets = [0, 96], sizes = [8, 32], strides = [1, 1]} : vector<8x128xf32> to vector<8x32xf32>
    %416 = arith.negf %415 : vector<8x32xf32>
    %417 = math.exp %416 : vector<8x32xf32>
    %cst_215 = arith.constant 1.000000e+00 : f32
    %418 = vector.broadcast %cst_215 : f32 to vector<8x32xf32>
    %419 = arith.addf %418, %417 : vector<8x32xf32>
    %420 = arith.divf %418, %419 : vector<8x32xf32>
    %421 = arith.mulf %412, %400 : vector<8x32xf32>
    %422 = arith.mulf %406, %414 : vector<8x32xf32>
    %423 = arith.addf %421, %422 : vector<8x32xf32>
    %424 = math.tanh %423 : vector<8x32xf32>
    %425 = arith.mulf %420, %424 : vector<8x32xf32>
    %c0_216 = arith.constant 0 : index
    %c0_217 = arith.constant 0 : index
    %c0_218 = arith.constant 0 : index
    %426 = vector.load %arg10[%c0_216, %c0_217, %c0_218] : memref<2x8x32xf32, #tpu.memory_space<vmem>>, vector<1x8x32xf32>
    %427 = vector.shape_cast %426 : vector<1x8x32xf32> to vector<8x32xf32>
    %428 = vector.shape_cast %425 : vector<8x32xf32> to vector<1x8x32xf32>
    tpu.vector_store %arg10[%c0_216, %c0_217, %c0_218], %428 {strides = array<i32>} : memref<2x8x32xf32, #tpu.memory_space<vmem>>, vector<1x8x32xf32>,
    %c0_219 = arith.constant 0 : index
    %c0_220 = arith.constant 0 : index
    %c0_221 = arith.constant 0 : index
    %429 = vector.load %arg11[%c0_219, %c0_220, %c0_221] : memref<2x8x32xf32, #tpu.memory_space<vmem>>, vector<1x8x32xf32>
    %430 = vector.shape_cast %429 : vector<1x8x32xf32> to vector<8x32xf32>
    %431 = vector.shape_cast %423 : vector<8x32xf32> to vector<1x8x32xf32>
    tpu.vector_store %arg11[%c0_219, %c0_220, %c0_221], %431 {strides = array<i32>} : memref<2x8x32xf32, #tpu.memory_space<vmem>>, vector<1x8x32xf32>,
    %432 = arith.truncf %425 : vector<8x32xf32> to vector<8x32xbf16>
    %c1_222 = arith.constant 1 : index
    %c0_223 = arith.constant 0 : index
    %c0_224 = arith.constant 0 : index
    %433 = vector.load %arg4[%c1_222, %c0_223, %c0_224] : memref<2x32x128xbf16, #tpu.memory_space<vmem>>, vector<1x32x128xbf16>
    %434 = vector.shape_cast %433 : vector<1x32x128xbf16> to vector<32x128xbf16>
    %cst_225 = arith.constant dense<0.000000e+00> : vector<8x128xf32>
    %435 = tpu.matmul %432, %434, %cst_225 {dimension_numbers = #tpu.dot_dimension_numbers<[1], [0], [0], [1], [0, 0, 1, 1], [], []>} : vector<8x32xbf16>, vector<32x128xbf16>, vector<8x128xf32> -> vector<8x128xf32>
    %c1_226 = arith.constant 1 : index
    %c0_227 = arith.constant 0 : index
    %c0_228 = arith.constant 0 : index
    %436 = vector.load %arg10[%c1_226, %c0_227, %c0_228] : memref<2x8x32xf32, #tpu.memory_space<vmem>>, vector<1x8x32xf32>
    %437 = vector.shape_cast %436 : vector<1x8x32xf32> to vector<8x32xf32>
    %438 = arith.truncf %437 : vector<8x32xf32> to vector<8x32xbf16>
    %c1_229 = arith.constant 1 : index
    %c0_230 = arith.constant 0 : index
    %c0_231 = arith.constant 0 : index
    %439 = vector.load %arg5[%c1_229, %c0_230, %c0_231] : memref<2x32x128xbf16, #tpu.memory_space<vmem>>, vector<1x32x128xbf16>
    %440 = vector.shape_cast %439 : vector<1x32x128xbf16> to vector<32x128xbf16>
    %cst_232 = arith.constant dense<0.000000e+00> : vector<8x128xf32>
    %441 = tpu.matmul %438, %440, %cst_232 {dimension_numbers = #tpu.dot_dimension_numbers<[1], [0], [0], [1], [0, 0, 1, 1], [], []>} : vector<8x32xbf16>, vector<32x128xbf16>, vector<8x128xf32> -> vector<8x128xf32>
    %442 = arith.addf %435, %441 : vector<8x128xf32>
    %c1_233 = arith.constant 1 : index
    %c0_234 = arith.constant 0 : index
    %c0_235 = arith.constant 0 : index
    %443 = vector.load %arg6[%c1_233, %c0_234, %c0_235] : memref<2x1x128xf32, #tpu.memory_space<vmem>>, vector<1x1x128xf32>
    %444 = vector.shape_cast %443 : vector<1x1x128xf32> to vector<1x128xf32>
    %445 = vector.broadcast %444 : vector<1x128xf32> to vector<8x128xf32>
    %446 = arith.addf %442, %445 : vector<8x128xf32>
    %c1_236 = arith.constant 1 : index
    %c0_237 = arith.constant 0 : index
    %c0_238 = arith.constant 0 : index
    %447 = vector.load %arg11[%c1_236, %c0_237, %c0_238] : memref<2x8x32xf32, #tpu.memory_space<vmem>>, vector<1x8x32xf32>
    %448 = vector.shape_cast %447 : vector<1x8x32xf32> to vector<8x32xf32>
    %449 = vector.extract_strided_slice %446 {offsets = [0, 0], sizes = [8, 32], strides = [1, 1]} : vector<8x128xf32> to vector<8x32xf32>
    %450 = arith.negf %449 : vector<8x32xf32>
    %451 = math.exp %450 : vector<8x32xf32>
    %cst_239 = arith.constant 1.000000e+00 : f32
    %452 = vector.broadcast %cst_239 : f32 to vector<8x32xf32>
    %453 = arith.addf %452, %451 : vector<8x32xf32>
    %454 = arith.divf %452, %453 : vector<8x32xf32>
    %455 = vector.extract_strided_slice %446 {offsets = [0, 32], sizes = [8, 32], strides = [1, 1]} : vector<8x128xf32> to vector<8x32xf32>
    %456 = arith.negf %455 : vector<8x32xf32>
    %457 = math.exp %456 : vector<8x32xf32>
    %cst_240 = arith.constant 1.000000e+00 : f32
    %458 = vector.broadcast %cst_240 : f32 to vector<8x32xf32>
    %459 = arith.addf %458, %457 : vector<8x32xf32>
    %460 = arith.divf %458, %459 : vector<8x32xf32>
    %461 = vector.extract_strided_slice %446 {offsets = [0, 64], sizes = [8, 32], strides = [1, 1]} : vector<8x128xf32> to vector<8x32xf32>
    %462 = math.tanh %461 : vector<8x32xf32>
    %463 = vector.extract_strided_slice %446 {offsets = [0, 96], sizes = [8, 32], strides = [1, 1]} : vector<8x128xf32> to vector<8x32xf32>
    %464 = arith.negf %463 : vector<8x32xf32>
    %465 = math.exp %464 : vector<8x32xf32>
    %cst_241 = arith.constant 1.000000e+00 : f32
    %466 = vector.broadcast %cst_241 : f32 to vector<8x32xf32>
    %467 = arith.addf %466, %465 : vector<8x32xf32>
    %468 = arith.divf %466, %467 : vector<8x32xf32>
    %469 = arith.mulf %460, %448 : vector<8x32xf32>
    %470 = arith.mulf %454, %462 : vector<8x32xf32>
    %471 = arith.addf %469, %470 : vector<8x32xf32>
    %472 = math.tanh %471 : vector<8x32xf32>
    %473 = arith.mulf %468, %472 : vector<8x32xf32>
    %c1_242 = arith.constant 1 : index
    %c0_243 = arith.constant 0 : index
    %c0_244 = arith.constant 0 : index
    %474 = vector.load %arg10[%c1_242, %c0_243, %c0_244] : memref<2x8x32xf32, #tpu.memory_space<vmem>>, vector<1x8x32xf32>
    %475 = vector.shape_cast %474 : vector<1x8x32xf32> to vector<8x32xf32>
    %476 = vector.shape_cast %473 : vector<8x32xf32> to vector<1x8x32xf32>
    tpu.vector_store %arg10[%c1_242, %c0_243, %c0_244], %476 {strides = array<i32>} : memref<2x8x32xf32, #tpu.memory_space<vmem>>, vector<1x8x32xf32>,
    %c1_245 = arith.constant 1 : index
    %c0_246 = arith.constant 0 : index
    %c0_247 = arith.constant 0 : index
    %477 = vector.load %arg11[%c1_245, %c0_246, %c0_247] : memref<2x8x32xf32, #tpu.memory_space<vmem>>, vector<1x8x32xf32>
    %478 = vector.shape_cast %477 : vector<1x8x32xf32> to vector<8x32xf32>
    %479 = vector.shape_cast %471 : vector<8x32xf32> to vector<1x8x32xf32>
    tpu.vector_store %arg11[%c1_245, %c0_246, %c0_247], %479 {strides = array<i32>} : memref<2x8x32xf32, #tpu.memory_space<vmem>>, vector<1x8x32xf32>,
    %480 = arith.index_cast %389 : i32 to index
    %c0_248 = arith.constant 0 : index
    %481 = vector.load %arg13[%480, %c0_248] : memref<64x32xf32, #tpu.memory_space<vmem>>, vector<8x32xf32>
    tpu.vector_store %arg13[%480, %c0_248], %473 {strides = array<i32>} : memref<64x32xf32, #tpu.memory_space<vmem>>, vector<8x32xf32>,
    %c5_i32 = arith.constant 5 : i32
    %c8_i32_249 = arith.constant 8 : i32
    %482 = arith.muli %c5_i32, %c8_i32_249 : i32
    %483 = tpu.assume_multiple %482, 8 : i32
    %484 = arith.index_cast %483 : i32 to index
    %c0_250 = arith.constant 0 : index
    %485 = vector.load %arg12[%484, %c0_250] : memref<64x128xf32, #tpu.memory_space<vmem>>, vector<8x128xf32>
    %c0_251 = arith.constant 0 : index
    %c0_252 = arith.constant 0 : index
    %c0_253 = arith.constant 0 : index
    %486 = vector.load %arg10[%c0_251, %c0_252, %c0_253] : memref<2x8x32xf32, #tpu.memory_space<vmem>>, vector<1x8x32xf32>
    %487 = vector.shape_cast %486 : vector<1x8x32xf32> to vector<8x32xf32>
    %488 = arith.truncf %487 : vector<8x32xf32> to vector<8x32xbf16>
    %c0_254 = arith.constant 0 : index
    %c0_255 = arith.constant 0 : index
    %c0_256 = arith.constant 0 : index
    %489 = vector.load %arg5[%c0_254, %c0_255, %c0_256] : memref<2x32x128xbf16, #tpu.memory_space<vmem>>, vector<1x32x128xbf16>
    %490 = vector.shape_cast %489 : vector<1x32x128xbf16> to vector<32x128xbf16>
    %cst_257 = arith.constant dense<0.000000e+00> : vector<8x128xf32>
    %491 = tpu.matmul %488, %490, %cst_257 {dimension_numbers = #tpu.dot_dimension_numbers<[1], [0], [0], [1], [0, 0, 1, 1], [], []>} : vector<8x32xbf16>, vector<32x128xbf16>, vector<8x128xf32> -> vector<8x128xf32>
    %492 = arith.addf %485, %491 : vector<8x128xf32>
    %c0_258 = arith.constant 0 : index
    %c0_259 = arith.constant 0 : index
    %c0_260 = arith.constant 0 : index
    %493 = vector.load %arg11[%c0_258, %c0_259, %c0_260] : memref<2x8x32xf32, #tpu.memory_space<vmem>>, vector<1x8x32xf32>
    %494 = vector.shape_cast %493 : vector<1x8x32xf32> to vector<8x32xf32>
    %495 = vector.extract_strided_slice %492 {offsets = [0, 0], sizes = [8, 32], strides = [1, 1]} : vector<8x128xf32> to vector<8x32xf32>
    %496 = arith.negf %495 : vector<8x32xf32>
    %497 = math.exp %496 : vector<8x32xf32>
    %cst_261 = arith.constant 1.000000e+00 : f32
    %498 = vector.broadcast %cst_261 : f32 to vector<8x32xf32>
    %499 = arith.addf %498, %497 : vector<8x32xf32>
    %500 = arith.divf %498, %499 : vector<8x32xf32>
    %501 = vector.extract_strided_slice %492 {offsets = [0, 32], sizes = [8, 32], strides = [1, 1]} : vector<8x128xf32> to vector<8x32xf32>
    %502 = arith.negf %501 : vector<8x32xf32>
    %503 = math.exp %502 : vector<8x32xf32>
    %cst_262 = arith.constant 1.000000e+00 : f32
    %504 = vector.broadcast %cst_262 : f32 to vector<8x32xf32>
    %505 = arith.addf %504, %503 : vector<8x32xf32>
    %506 = arith.divf %504, %505 : vector<8x32xf32>
    %507 = vector.extract_strided_slice %492 {offsets = [0, 64], sizes = [8, 32], strides = [1, 1]} : vector<8x128xf32> to vector<8x32xf32>
    %508 = math.tanh %507 : vector<8x32xf32>
    %509 = vector.extract_strided_slice %492 {offsets = [0, 96], sizes = [8, 32], strides = [1, 1]} : vector<8x128xf32> to vector<8x32xf32>
    %510 = arith.negf %509 : vector<8x32xf32>
    %511 = math.exp %510 : vector<8x32xf32>
    %cst_263 = arith.constant 1.000000e+00 : f32
    %512 = vector.broadcast %cst_263 : f32 to vector<8x32xf32>
    %513 = arith.addf %512, %511 : vector<8x32xf32>
    %514 = arith.divf %512, %513 : vector<8x32xf32>
    %515 = arith.mulf %506, %494 : vector<8x32xf32>
    %516 = arith.mulf %500, %508 : vector<8x32xf32>
    %517 = arith.addf %515, %516 : vector<8x32xf32>
    %518 = math.tanh %517 : vector<8x32xf32>
    %519 = arith.mulf %514, %518 : vector<8x32xf32>
    %c0_264 = arith.constant 0 : index
    %c0_265 = arith.constant 0 : index
    %c0_266 = arith.constant 0 : index
    %520 = vector.load %arg10[%c0_264, %c0_265, %c0_266] : memref<2x8x32xf32, #tpu.memory_space<vmem>>, vector<1x8x32xf32>
    %521 = vector.shape_cast %520 : vector<1x8x32xf32> to vector<8x32xf32>
    %522 = vector.shape_cast %519 : vector<8x32xf32> to vector<1x8x32xf32>
    tpu.vector_store %arg10[%c0_264, %c0_265, %c0_266], %522 {strides = array<i32>} : memref<2x8x32xf32, #tpu.memory_space<vmem>>, vector<1x8x32xf32>,
    %c0_267 = arith.constant 0 : index
    %c0_268 = arith.constant 0 : index
    %c0_269 = arith.constant 0 : index
    %523 = vector.load %arg11[%c0_267, %c0_268, %c0_269] : memref<2x8x32xf32, #tpu.memory_space<vmem>>, vector<1x8x32xf32>
    %524 = vector.shape_cast %523 : vector<1x8x32xf32> to vector<8x32xf32>
    %525 = vector.shape_cast %517 : vector<8x32xf32> to vector<1x8x32xf32>
    tpu.vector_store %arg11[%c0_267, %c0_268, %c0_269], %525 {strides = array<i32>} : memref<2x8x32xf32, #tpu.memory_space<vmem>>, vector<1x8x32xf32>,
    %526 = arith.truncf %519 : vector<8x32xf32> to vector<8x32xbf16>
    %c1_270 = arith.constant 1 : index
    %c0_271 = arith.constant 0 : index
    %c0_272 = arith.constant 0 : index
    %527 = vector.load %arg4[%c1_270, %c0_271, %c0_272] : memref<2x32x128xbf16, #tpu.memory_space<vmem>>, vector<1x32x128xbf16>
    %528 = vector.shape_cast %527 : vector<1x32x128xbf16> to vector<32x128xbf16>
    %cst_273 = arith.constant dense<0.000000e+00> : vector<8x128xf32>
    %529 = tpu.matmul %526, %528, %cst_273 {dimension_numbers = #tpu.dot_dimension_numbers<[1], [0], [0], [1], [0, 0, 1, 1], [], []>} : vector<8x32xbf16>, vector<32x128xbf16>, vector<8x128xf32> -> vector<8x128xf32>
    %c1_274 = arith.constant 1 : index
    %c0_275 = arith.constant 0 : index
    %c0_276 = arith.constant 0 : index
    %530 = vector.load %arg10[%c1_274, %c0_275, %c0_276] : memref<2x8x32xf32, #tpu.memory_space<vmem>>, vector<1x8x32xf32>
    %531 = vector.shape_cast %530 : vector<1x8x32xf32> to vector<8x32xf32>
    %532 = arith.truncf %531 : vector<8x32xf32> to vector<8x32xbf16>
    %c1_277 = arith.constant 1 : index
    %c0_278 = arith.constant 0 : index
    %c0_279 = arith.constant 0 : index
    %533 = vector.load %arg5[%c1_277, %c0_278, %c0_279] : memref<2x32x128xbf16, #tpu.memory_space<vmem>>, vector<1x32x128xbf16>
    %534 = vector.shape_cast %533 : vector<1x32x128xbf16> to vector<32x128xbf16>
    %cst_280 = arith.constant dense<0.000000e+00> : vector<8x128xf32>
    %535 = tpu.matmul %532, %534, %cst_280 {dimension_numbers = #tpu.dot_dimension_numbers<[1], [0], [0], [1], [0, 0, 1, 1], [], []>} : vector<8x32xbf16>, vector<32x128xbf16>, vector<8x128xf32> -> vector<8x128xf32>
    %536 = arith.addf %529, %535 : vector<8x128xf32>
    %c1_281 = arith.constant 1 : index
    %c0_282 = arith.constant 0 : index
    %c0_283 = arith.constant 0 : index
    %537 = vector.load %arg6[%c1_281, %c0_282, %c0_283] : memref<2x1x128xf32, #tpu.memory_space<vmem>>, vector<1x1x128xf32>
    %538 = vector.shape_cast %537 : vector<1x1x128xf32> to vector<1x128xf32>
    %539 = vector.broadcast %538 : vector<1x128xf32> to vector<8x128xf32>
    %540 = arith.addf %536, %539 : vector<8x128xf32>
    %c1_284 = arith.constant 1 : index
    %c0_285 = arith.constant 0 : index
    %c0_286 = arith.constant 0 : index
    %541 = vector.load %arg11[%c1_284, %c0_285, %c0_286] : memref<2x8x32xf32, #tpu.memory_space<vmem>>, vector<1x8x32xf32>
    %542 = vector.shape_cast %541 : vector<1x8x32xf32> to vector<8x32xf32>
    %543 = vector.extract_strided_slice %540 {offsets = [0, 0], sizes = [8, 32], strides = [1, 1]} : vector<8x128xf32> to vector<8x32xf32>
    %544 = arith.negf %543 : vector<8x32xf32>
    %545 = math.exp %544 : vector<8x32xf32>
    %cst_287 = arith.constant 1.000000e+00 : f32
    %546 = vector.broadcast %cst_287 : f32 to vector<8x32xf32>
    %547 = arith.addf %546, %545 : vector<8x32xf32>
    %548 = arith.divf %546, %547 : vector<8x32xf32>
    %549 = vector.extract_strided_slice %540 {offsets = [0, 32], sizes = [8, 32], strides = [1, 1]} : vector<8x128xf32> to vector<8x32xf32>
    %550 = arith.negf %549 : vector<8x32xf32>
    %551 = math.exp %550 : vector<8x32xf32>
    %cst_288 = arith.constant 1.000000e+00 : f32
    %552 = vector.broadcast %cst_288 : f32 to vector<8x32xf32>
    %553 = arith.addf %552, %551 : vector<8x32xf32>
    %554 = arith.divf %552, %553 : vector<8x32xf32>
    %555 = vector.extract_strided_slice %540 {offsets = [0, 64], sizes = [8, 32], strides = [1, 1]} : vector<8x128xf32> to vector<8x32xf32>
    %556 = math.tanh %555 : vector<8x32xf32>
    %557 = vector.extract_strided_slice %540 {offsets = [0, 96], sizes = [8, 32], strides = [1, 1]} : vector<8x128xf32> to vector<8x32xf32>
    %558 = arith.negf %557 : vector<8x32xf32>
    %559 = math.exp %558 : vector<8x32xf32>
    %cst_289 = arith.constant 1.000000e+00 : f32
    %560 = vector.broadcast %cst_289 : f32 to vector<8x32xf32>
    %561 = arith.addf %560, %559 : vector<8x32xf32>
    %562 = arith.divf %560, %561 : vector<8x32xf32>
    %563 = arith.mulf %554, %542 : vector<8x32xf32>
    %564 = arith.mulf %548, %556 : vector<8x32xf32>
    %565 = arith.addf %563, %564 : vector<8x32xf32>
    %566 = math.tanh %565 : vector<8x32xf32>
    %567 = arith.mulf %562, %566 : vector<8x32xf32>
    %c1_290 = arith.constant 1 : index
    %c0_291 = arith.constant 0 : index
    %c0_292 = arith.constant 0 : index
    %568 = vector.load %arg10[%c1_290, %c0_291, %c0_292] : memref<2x8x32xf32, #tpu.memory_space<vmem>>, vector<1x8x32xf32>
    %569 = vector.shape_cast %568 : vector<1x8x32xf32> to vector<8x32xf32>
    %570 = vector.shape_cast %567 : vector<8x32xf32> to vector<1x8x32xf32>
    tpu.vector_store %arg10[%c1_290, %c0_291, %c0_292], %570 {strides = array<i32>} : memref<2x8x32xf32, #tpu.memory_space<vmem>>, vector<1x8x32xf32>,
    %c1_293 = arith.constant 1 : index
    %c0_294 = arith.constant 0 : index
    %c0_295 = arith.constant 0 : index
    %571 = vector.load %arg11[%c1_293, %c0_294, %c0_295] : memref<2x8x32xf32, #tpu.memory_space<vmem>>, vector<1x8x32xf32>
    %572 = vector.shape_cast %571 : vector<1x8x32xf32> to vector<8x32xf32>
    %573 = vector.shape_cast %565 : vector<8x32xf32> to vector<1x8x32xf32>
    tpu.vector_store %arg11[%c1_293, %c0_294, %c0_295], %573 {strides = array<i32>} : memref<2x8x32xf32, #tpu.memory_space<vmem>>, vector<1x8x32xf32>,
    %574 = arith.index_cast %483 : i32 to index
    %c0_296 = arith.constant 0 : index
    %575 = vector.load %arg13[%574, %c0_296] : memref<64x32xf32, #tpu.memory_space<vmem>>, vector<8x32xf32>
    tpu.vector_store %arg13[%574, %c0_296], %567 {strides = array<i32>} : memref<64x32xf32, #tpu.memory_space<vmem>>, vector<8x32xf32>,
    %c6_i32 = arith.constant 6 : i32
    %c8_i32_297 = arith.constant 8 : i32
    %576 = arith.muli %c6_i32, %c8_i32_297 : i32
    %577 = tpu.assume_multiple %576, 8 : i32
    %578 = arith.index_cast %577 : i32 to index
    %c0_298 = arith.constant 0 : index
    %579 = vector.load %arg12[%578, %c0_298] : memref<64x128xf32, #tpu.memory_space<vmem>>, vector<8x128xf32>
    %c0_299 = arith.constant 0 : index
    %c0_300 = arith.constant 0 : index
    %c0_301 = arith.constant 0 : index
    %580 = vector.load %arg10[%c0_299, %c0_300, %c0_301] : memref<2x8x32xf32, #tpu.memory_space<vmem>>, vector<1x8x32xf32>
    %581 = vector.shape_cast %580 : vector<1x8x32xf32> to vector<8x32xf32>
    %582 = arith.truncf %581 : vector<8x32xf32> to vector<8x32xbf16>
    %c0_302 = arith.constant 0 : index
    %c0_303 = arith.constant 0 : index
    %c0_304 = arith.constant 0 : index
    %583 = vector.load %arg5[%c0_302, %c0_303, %c0_304] : memref<2x32x128xbf16, #tpu.memory_space<vmem>>, vector<1x32x128xbf16>
    %584 = vector.shape_cast %583 : vector<1x32x128xbf16> to vector<32x128xbf16>
    %cst_305 = arith.constant dense<0.000000e+00> : vector<8x128xf32>
    %585 = tpu.matmul %582, %584, %cst_305 {dimension_numbers = #tpu.dot_dimension_numbers<[1], [0], [0], [1], [0, 0, 1, 1], [], []>} : vector<8x32xbf16>, vector<32x128xbf16>, vector<8x128xf32> -> vector<8x128xf32>
    %586 = arith.addf %579, %585 : vector<8x128xf32>
    %c0_306 = arith.constant 0 : index
    %c0_307 = arith.constant 0 : index
    %c0_308 = arith.constant 0 : index
    %587 = vector.load %arg11[%c0_306, %c0_307, %c0_308] : memref<2x8x32xf32, #tpu.memory_space<vmem>>, vector<1x8x32xf32>
    %588 = vector.shape_cast %587 : vector<1x8x32xf32> to vector<8x32xf32>
    %589 = vector.extract_strided_slice %586 {offsets = [0, 0], sizes = [8, 32], strides = [1, 1]} : vector<8x128xf32> to vector<8x32xf32>
    %590 = arith.negf %589 : vector<8x32xf32>
    %591 = math.exp %590 : vector<8x32xf32>
    %cst_309 = arith.constant 1.000000e+00 : f32
    %592 = vector.broadcast %cst_309 : f32 to vector<8x32xf32>
    %593 = arith.addf %592, %591 : vector<8x32xf32>
    %594 = arith.divf %592, %593 : vector<8x32xf32>
    %595 = vector.extract_strided_slice %586 {offsets = [0, 32], sizes = [8, 32], strides = [1, 1]} : vector<8x128xf32> to vector<8x32xf32>
    %596 = arith.negf %595 : vector<8x32xf32>
    %597 = math.exp %596 : vector<8x32xf32>
    %cst_310 = arith.constant 1.000000e+00 : f32
    %598 = vector.broadcast %cst_310 : f32 to vector<8x32xf32>
    %599 = arith.addf %598, %597 : vector<8x32xf32>
    %600 = arith.divf %598, %599 : vector<8x32xf32>
    %601 = vector.extract_strided_slice %586 {offsets = [0, 64], sizes = [8, 32], strides = [1, 1]} : vector<8x128xf32> to vector<8x32xf32>
    %602 = math.tanh %601 : vector<8x32xf32>
    %603 = vector.extract_strided_slice %586 {offsets = [0, 96], sizes = [8, 32], strides = [1, 1]} : vector<8x128xf32> to vector<8x32xf32>
    %604 = arith.negf %603 : vector<8x32xf32>
    %605 = math.exp %604 : vector<8x32xf32>
    %cst_311 = arith.constant 1.000000e+00 : f32
    %606 = vector.broadcast %cst_311 : f32 to vector<8x32xf32>
    %607 = arith.addf %606, %605 : vector<8x32xf32>
    %608 = arith.divf %606, %607 : vector<8x32xf32>
    %609 = arith.mulf %600, %588 : vector<8x32xf32>
    %610 = arith.mulf %594, %602 : vector<8x32xf32>
    %611 = arith.addf %609, %610 : vector<8x32xf32>
    %612 = math.tanh %611 : vector<8x32xf32>
    %613 = arith.mulf %608, %612 : vector<8x32xf32>
    %c0_312 = arith.constant 0 : index
    %c0_313 = arith.constant 0 : index
    %c0_314 = arith.constant 0 : index
    %614 = vector.load %arg10[%c0_312, %c0_313, %c0_314] : memref<2x8x32xf32, #tpu.memory_space<vmem>>, vector<1x8x32xf32>
    %615 = vector.shape_cast %614 : vector<1x8x32xf32> to vector<8x32xf32>
    %616 = vector.shape_cast %613 : vector<8x32xf32> to vector<1x8x32xf32>
    tpu.vector_store %arg10[%c0_312, %c0_313, %c0_314], %616 {strides = array<i32>} : memref<2x8x32xf32, #tpu.memory_space<vmem>>, vector<1x8x32xf32>,
    %c0_315 = arith.constant 0 : index
    %c0_316 = arith.constant 0 : index
    %c0_317 = arith.constant 0 : index
    %617 = vector.load %arg11[%c0_315, %c0_316, %c0_317] : memref<2x8x32xf32, #tpu.memory_space<vmem>>, vector<1x8x32xf32>
    %618 = vector.shape_cast %617 : vector<1x8x32xf32> to vector<8x32xf32>
    %619 = vector.shape_cast %611 : vector<8x32xf32> to vector<1x8x32xf32>
    tpu.vector_store %arg11[%c0_315, %c0_316, %c0_317], %619 {strides = array<i32>} : memref<2x8x32xf32, #tpu.memory_space<vmem>>, vector<1x8x32xf32>,
    %620 = arith.truncf %613 : vector<8x32xf32> to vector<8x32xbf16>
    %c1_318 = arith.constant 1 : index
    %c0_319 = arith.constant 0 : index
    %c0_320 = arith.constant 0 : index
    %621 = vector.load %arg4[%c1_318, %c0_319, %c0_320] : memref<2x32x128xbf16, #tpu.memory_space<vmem>>, vector<1x32x128xbf16>
    %622 = vector.shape_cast %621 : vector<1x32x128xbf16> to vector<32x128xbf16>
    %cst_321 = arith.constant dense<0.000000e+00> : vector<8x128xf32>
    %623 = tpu.matmul %620, %622, %cst_321 {dimension_numbers = #tpu.dot_dimension_numbers<[1], [0], [0], [1], [0, 0, 1, 1], [], []>} : vector<8x32xbf16>, vector<32x128xbf16>, vector<8x128xf32> -> vector<8x128xf32>
    %c1_322 = arith.constant 1 : index
    %c0_323 = arith.constant 0 : index
    %c0_324 = arith.constant 0 : index
    %624 = vector.load %arg10[%c1_322, %c0_323, %c0_324] : memref<2x8x32xf32, #tpu.memory_space<vmem>>, vector<1x8x32xf32>
    %625 = vector.shape_cast %624 : vector<1x8x32xf32> to vector<8x32xf32>
    %626 = arith.truncf %625 : vector<8x32xf32> to vector<8x32xbf16>
    %c1_325 = arith.constant 1 : index
    %c0_326 = arith.constant 0 : index
    %c0_327 = arith.constant 0 : index
    %627 = vector.load %arg5[%c1_325, %c0_326, %c0_327] : memref<2x32x128xbf16, #tpu.memory_space<vmem>>, vector<1x32x128xbf16>
    %628 = vector.shape_cast %627 : vector<1x32x128xbf16> to vector<32x128xbf16>
    %cst_328 = arith.constant dense<0.000000e+00> : vector<8x128xf32>
    %629 = tpu.matmul %626, %628, %cst_328 {dimension_numbers = #tpu.dot_dimension_numbers<[1], [0], [0], [1], [0, 0, 1, 1], [], []>} : vector<8x32xbf16>, vector<32x128xbf16>, vector<8x128xf32> -> vector<8x128xf32>
    %630 = arith.addf %623, %629 : vector<8x128xf32>
    %c1_329 = arith.constant 1 : index
    %c0_330 = arith.constant 0 : index
    %c0_331 = arith.constant 0 : index
    %631 = vector.load %arg6[%c1_329, %c0_330, %c0_331] : memref<2x1x128xf32, #tpu.memory_space<vmem>>, vector<1x1x128xf32>
    %632 = vector.shape_cast %631 : vector<1x1x128xf32> to vector<1x128xf32>
    %633 = vector.broadcast %632 : vector<1x128xf32> to vector<8x128xf32>
    %634 = arith.addf %630, %633 : vector<8x128xf32>
    %c1_332 = arith.constant 1 : index
    %c0_333 = arith.constant 0 : index
    %c0_334 = arith.constant 0 : index
    %635 = vector.load %arg11[%c1_332, %c0_333, %c0_334] : memref<2x8x32xf32, #tpu.memory_space<vmem>>, vector<1x8x32xf32>
    %636 = vector.shape_cast %635 : vector<1x8x32xf32> to vector<8x32xf32>
    %637 = vector.extract_strided_slice %634 {offsets = [0, 0], sizes = [8, 32], strides = [1, 1]} : vector<8x128xf32> to vector<8x32xf32>
    %638 = arith.negf %637 : vector<8x32xf32>
    %639 = math.exp %638 : vector<8x32xf32>
    %cst_335 = arith.constant 1.000000e+00 : f32
    %640 = vector.broadcast %cst_335 : f32 to vector<8x32xf32>
    %641 = arith.addf %640, %639 : vector<8x32xf32>
    %642 = arith.divf %640, %641 : vector<8x32xf32>
    %643 = vector.extract_strided_slice %634 {offsets = [0, 32], sizes = [8, 32], strides = [1, 1]} : vector<8x128xf32> to vector<8x32xf32>
    %644 = arith.negf %643 : vector<8x32xf32>
    %645 = math.exp %644 : vector<8x32xf32>
    %cst_336 = arith.constant 1.000000e+00 : f32
    %646 = vector.broadcast %cst_336 : f32 to vector<8x32xf32>
    %647 = arith.addf %646, %645 : vector<8x32xf32>
    %648 = arith.divf %646, %647 : vector<8x32xf32>
    %649 = vector.extract_strided_slice %634 {offsets = [0, 64], sizes = [8, 32], strides = [1, 1]} : vector<8x128xf32> to vector<8x32xf32>
    %650 = math.tanh %649 : vector<8x32xf32>
    %651 = vector.extract_strided_slice %634 {offsets = [0, 96], sizes = [8, 32], strides = [1, 1]} : vector<8x128xf32> to vector<8x32xf32>
    %652 = arith.negf %651 : vector<8x32xf32>
    %653 = math.exp %652 : vector<8x32xf32>
    %cst_337 = arith.constant 1.000000e+00 : f32
    %654 = vector.broadcast %cst_337 : f32 to vector<8x32xf32>
    %655 = arith.addf %654, %653 : vector<8x32xf32>
    %656 = arith.divf %654, %655 : vector<8x32xf32>
    %657 = arith.mulf %648, %636 : vector<8x32xf32>
    %658 = arith.mulf %642, %650 : vector<8x32xf32>
    %659 = arith.addf %657, %658 : vector<8x32xf32>
    %660 = math.tanh %659 : vector<8x32xf32>
    %661 = arith.mulf %656, %660 : vector<8x32xf32>
    %c1_338 = arith.constant 1 : index
    %c0_339 = arith.constant 0 : index
    %c0_340 = arith.constant 0 : index
    %662 = vector.load %arg10[%c1_338, %c0_339, %c0_340] : memref<2x8x32xf32, #tpu.memory_space<vmem>>, vector<1x8x32xf32>
    %663 = vector.shape_cast %662 : vector<1x8x32xf32> to vector<8x32xf32>
    %664 = vector.shape_cast %661 : vector<8x32xf32> to vector<1x8x32xf32>
    tpu.vector_store %arg10[%c1_338, %c0_339, %c0_340], %664 {strides = array<i32>} : memref<2x8x32xf32, #tpu.memory_space<vmem>>, vector<1x8x32xf32>,
    %c1_341 = arith.constant 1 : index
    %c0_342 = arith.constant 0 : index
    %c0_343 = arith.constant 0 : index
    %665 = vector.load %arg11[%c1_341, %c0_342, %c0_343] : memref<2x8x32xf32, #tpu.memory_space<vmem>>, vector<1x8x32xf32>
    %666 = vector.shape_cast %665 : vector<1x8x32xf32> to vector<8x32xf32>
    %667 = vector.shape_cast %659 : vector<8x32xf32> to vector<1x8x32xf32>
    tpu.vector_store %arg11[%c1_341, %c0_342, %c0_343], %667 {strides = array<i32>} : memref<2x8x32xf32, #tpu.memory_space<vmem>>, vector<1x8x32xf32>,
    %668 = arith.index_cast %577 : i32 to index
    %c0_344 = arith.constant 0 : index
    %669 = vector.load %arg13[%668, %c0_344] : memref<64x32xf32, #tpu.memory_space<vmem>>, vector<8x32xf32>
    tpu.vector_store %arg13[%668, %c0_344], %661 {strides = array<i32>} : memref<64x32xf32, #tpu.memory_space<vmem>>, vector<8x32xf32>,
    %c7_i32 = arith.constant 7 : i32
    %c8_i32_345 = arith.constant 8 : i32
    %670 = arith.muli %c7_i32, %c8_i32_345 : i32
    %671 = tpu.assume_multiple %670, 8 : i32
    %672 = arith.index_cast %671 : i32 to index
    %c0_346 = arith.constant 0 : index
    %673 = vector.load %arg12[%672, %c0_346] : memref<64x128xf32, #tpu.memory_space<vmem>>, vector<8x128xf32>
    %c0_347 = arith.constant 0 : index
    %c0_348 = arith.constant 0 : index
    %c0_349 = arith.constant 0 : index
    %674 = vector.load %arg10[%c0_347, %c0_348, %c0_349] : memref<2x8x32xf32, #tpu.memory_space<vmem>>, vector<1x8x32xf32>
    %675 = vector.shape_cast %674 : vector<1x8x32xf32> to vector<8x32xf32>
    %676 = arith.truncf %675 : vector<8x32xf32> to vector<8x32xbf16>
    %c0_350 = arith.constant 0 : index
    %c0_351 = arith.constant 0 : index
    %c0_352 = arith.constant 0 : index
    %677 = vector.load %arg5[%c0_350, %c0_351, %c0_352] : memref<2x32x128xbf16, #tpu.memory_space<vmem>>, vector<1x32x128xbf16>
    %678 = vector.shape_cast %677 : vector<1x32x128xbf16> to vector<32x128xbf16>
    %cst_353 = arith.constant dense<0.000000e+00> : vector<8x128xf32>
    %679 = tpu.matmul %676, %678, %cst_353 {dimension_numbers = #tpu.dot_dimension_numbers<[1], [0], [0], [1], [0, 0, 1, 1], [], []>} : vector<8x32xbf16>, vector<32x128xbf16>, vector<8x128xf32> -> vector<8x128xf32>
    %680 = arith.addf %673, %679 : vector<8x128xf32>
    %c0_354 = arith.constant 0 : index
    %c0_355 = arith.constant 0 : index
    %c0_356 = arith.constant 0 : index
    %681 = vector.load %arg11[%c0_354, %c0_355, %c0_356] : memref<2x8x32xf32, #tpu.memory_space<vmem>>, vector<1x8x32xf32>
    %682 = vector.shape_cast %681 : vector<1x8x32xf32> to vector<8x32xf32>
    %683 = vector.extract_strided_slice %680 {offsets = [0, 0], sizes = [8, 32], strides = [1, 1]} : vector<8x128xf32> to vector<8x32xf32>
    %684 = arith.negf %683 : vector<8x32xf32>
    %685 = math.exp %684 : vector<8x32xf32>
    %cst_357 = arith.constant 1.000000e+00 : f32
    %686 = vector.broadcast %cst_357 : f32 to vector<8x32xf32>
    %687 = arith.addf %686, %685 : vector<8x32xf32>
    %688 = arith.divf %686, %687 : vector<8x32xf32>
    %689 = vector.extract_strided_slice %680 {offsets = [0, 32], sizes = [8, 32], strides = [1, 1]} : vector<8x128xf32> to vector<8x32xf32>
    %690 = arith.negf %689 : vector<8x32xf32>
    %691 = math.exp %690 : vector<8x32xf32>
    %cst_358 = arith.constant 1.000000e+00 : f32
    %692 = vector.broadcast %cst_358 : f32 to vector<8x32xf32>
    %693 = arith.addf %692, %691 : vector<8x32xf32>
    %694 = arith.divf %692, %693 : vector<8x32xf32>
    %695 = vector.extract_strided_slice %680 {offsets = [0, 64], sizes = [8, 32], strides = [1, 1]} : vector<8x128xf32> to vector<8x32xf32>
    %696 = math.tanh %695 : vector<8x32xf32>
    %697 = vector.extract_strided_slice %680 {offsets = [0, 96], sizes = [8, 32], strides = [1, 1]} : vector<8x128xf32> to vector<8x32xf32>
    %698 = arith.negf %697 : vector<8x32xf32>
    %699 = math.exp %698 : vector<8x32xf32>
    %cst_359 = arith.constant 1.000000e+00 : f32
    %700 = vector.broadcast %cst_359 : f32 to vector<8x32xf32>
    %701 = arith.addf %700, %699 : vector<8x32xf32>
    %702 = arith.divf %700, %701 : vector<8x32xf32>
    %703 = arith.mulf %694, %682 : vector<8x32xf32>
    %704 = arith.mulf %688, %696 : vector<8x32xf32>
    %705 = arith.addf %703, %704 : vector<8x32xf32>
    %706 = math.tanh %705 : vector<8x32xf32>
    %707 = arith.mulf %702, %706 : vector<8x32xf32>
    %c0_360 = arith.constant 0 : index
    %c0_361 = arith.constant 0 : index
    %c0_362 = arith.constant 0 : index
    %708 = vector.load %arg10[%c0_360, %c0_361, %c0_362] : memref<2x8x32xf32, #tpu.memory_space<vmem>>, vector<1x8x32xf32>
    %709 = vector.shape_cast %708 : vector<1x8x32xf32> to vector<8x32xf32>
    %710 = vector.shape_cast %707 : vector<8x32xf32> to vector<1x8x32xf32>
    tpu.vector_store %arg10[%c0_360, %c0_361, %c0_362], %710 {strides = array<i32>} : memref<2x8x32xf32, #tpu.memory_space<vmem>>, vector<1x8x32xf32>,
    %c0_363 = arith.constant 0 : index
    %c0_364 = arith.constant 0 : index
    %c0_365 = arith.constant 0 : index
    %711 = vector.load %arg11[%c0_363, %c0_364, %c0_365] : memref<2x8x32xf32, #tpu.memory_space<vmem>>, vector<1x8x32xf32>
    %712 = vector.shape_cast %711 : vector<1x8x32xf32> to vector<8x32xf32>
    %713 = vector.shape_cast %705 : vector<8x32xf32> to vector<1x8x32xf32>
    tpu.vector_store %arg11[%c0_363, %c0_364, %c0_365], %713 {strides = array<i32>} : memref<2x8x32xf32, #tpu.memory_space<vmem>>, vector<1x8x32xf32>,
    %714 = arith.truncf %707 : vector<8x32xf32> to vector<8x32xbf16>
    %c1_366 = arith.constant 1 : index
    %c0_367 = arith.constant 0 : index
    %c0_368 = arith.constant 0 : index
    %715 = vector.load %arg4[%c1_366, %c0_367, %c0_368] : memref<2x32x128xbf16, #tpu.memory_space<vmem>>, vector<1x32x128xbf16>
    %716 = vector.shape_cast %715 : vector<1x32x128xbf16> to vector<32x128xbf16>
    %cst_369 = arith.constant dense<0.000000e+00> : vector<8x128xf32>
    %717 = tpu.matmul %714, %716, %cst_369 {dimension_numbers = #tpu.dot_dimension_numbers<[1], [0], [0], [1], [0, 0, 1, 1], [], []>} : vector<8x32xbf16>, vector<32x128xbf16>, vector<8x128xf32> -> vector<8x128xf32>
    %c1_370 = arith.constant 1 : index
    %c0_371 = arith.constant 0 : index
    %c0_372 = arith.constant 0 : index
    %718 = vector.load %arg10[%c1_370, %c0_371, %c0_372] : memref<2x8x32xf32, #tpu.memory_space<vmem>>, vector<1x8x32xf32>
    %719 = vector.shape_cast %718 : vector<1x8x32xf32> to vector<8x32xf32>
    %720 = arith.truncf %719 : vector<8x32xf32> to vector<8x32xbf16>
    %c1_373 = arith.constant 1 : index
    %c0_374 = arith.constant 0 : index
    %c0_375 = arith.constant 0 : index
    %721 = vector.load %arg5[%c1_373, %c0_374, %c0_375] : memref<2x32x128xbf16, #tpu.memory_space<vmem>>, vector<1x32x128xbf16>
    %722 = vector.shape_cast %721 : vector<1x32x128xbf16> to vector<32x128xbf16>
    %cst_376 = arith.constant dense<0.000000e+00> : vector<8x128xf32>
    %723 = tpu.matmul %720, %722, %cst_376 {dimension_numbers = #tpu.dot_dimension_numbers<[1], [0], [0], [1], [0, 0, 1, 1], [], []>} : vector<8x32xbf16>, vector<32x128xbf16>, vector<8x128xf32> -> vector<8x128xf32>
    %724 = arith.addf %717, %723 : vector<8x128xf32>
    %c1_377 = arith.constant 1 : index
    %c0_378 = arith.constant 0 : index
    %c0_379 = arith.constant 0 : index
    %725 = vector.load %arg6[%c1_377, %c0_378, %c0_379] : memref<2x1x128xf32, #tpu.memory_space<vmem>>, vector<1x1x128xf32>
    %726 = vector.shape_cast %725 : vector<1x1x128xf32> to vector<1x128xf32>
    %727 = vector.broadcast %726 : vector<1x128xf32> to vector<8x128xf32>
    %728 = arith.addf %724, %727 : vector<8x128xf32>
    %c1_380 = arith.constant 1 : index
    %c0_381 = arith.constant 0 : index
    %c0_382 = arith.constant 0 : index
    %729 = vector.load %arg11[%c1_380, %c0_381, %c0_382] : memref<2x8x32xf32, #tpu.memory_space<vmem>>, vector<1x8x32xf32>
    %730 = vector.shape_cast %729 : vector<1x8x32xf32> to vector<8x32xf32>
    %731 = vector.extract_strided_slice %728 {offsets = [0, 0], sizes = [8, 32], strides = [1, 1]} : vector<8x128xf32> to vector<8x32xf32>
    %732 = arith.negf %731 : vector<8x32xf32>
    %733 = math.exp %732 : vector<8x32xf32>
    %cst_383 = arith.constant 1.000000e+00 : f32
    %734 = vector.broadcast %cst_383 : f32 to vector<8x32xf32>
    %735 = arith.addf %734, %733 : vector<8x32xf32>
    %736 = arith.divf %734, %735 : vector<8x32xf32>
    %737 = vector.extract_strided_slice %728 {offsets = [0, 32], sizes = [8, 32], strides = [1, 1]} : vector<8x128xf32> to vector<8x32xf32>
    %738 = arith.negf %737 : vector<8x32xf32>
    %739 = math.exp %738 : vector<8x32xf32>
    %cst_384 = arith.constant 1.000000e+00 : f32
    %740 = vector.broadcast %cst_384 : f32 to vector<8x32xf32>
    %741 = arith.addf %740, %739 : vector<8x32xf32>
    %742 = arith.divf %740, %741 : vector<8x32xf32>
    %743 = vector.extract_strided_slice %728 {offsets = [0, 64], sizes = [8, 32], strides = [1, 1]} : vector<8x128xf32> to vector<8x32xf32>
    %744 = math.tanh %743 : vector<8x32xf32>
    %745 = vector.extract_strided_slice %728 {offsets = [0, 96], sizes = [8, 32], strides = [1, 1]} : vector<8x128xf32> to vector<8x32xf32>
    %746 = arith.negf %745 : vector<8x32xf32>
    %747 = math.exp %746 : vector<8x32xf32>
    %cst_385 = arith.constant 1.000000e+00 : f32
    %748 = vector.broadcast %cst_385 : f32 to vector<8x32xf32>
    %749 = arith.addf %748, %747 : vector<8x32xf32>
    %750 = arith.divf %748, %749 : vector<8x32xf32>
    %751 = arith.mulf %742, %730 : vector<8x32xf32>
    %752 = arith.mulf %736, %744 : vector<8x32xf32>
    %753 = arith.addf %751, %752 : vector<8x32xf32>
    %754 = math.tanh %753 : vector<8x32xf32>
    %755 = arith.mulf %750, %754 : vector<8x32xf32>
    %c1_386 = arith.constant 1 : index
    %c0_387 = arith.constant 0 : index
    %c0_388 = arith.constant 0 : index
    %756 = vector.load %arg10[%c1_386, %c0_387, %c0_388] : memref<2x8x32xf32, #tpu.memory_space<vmem>>, vector<1x8x32xf32>
    %757 = vector.shape_cast %756 : vector<1x8x32xf32> to vector<8x32xf32>
    %758 = vector.shape_cast %755 : vector<8x32xf32> to vector<1x8x32xf32>
    tpu.vector_store %arg10[%c1_386, %c0_387, %c0_388], %758 {strides = array<i32>} : memref<2x8x32xf32, #tpu.memory_space<vmem>>, vector<1x8x32xf32>,
    %c1_389 = arith.constant 1 : index
    %c0_390 = arith.constant 0 : index
    %c0_391 = arith.constant 0 : index
    %759 = vector.load %arg11[%c1_389, %c0_390, %c0_391] : memref<2x8x32xf32, #tpu.memory_space<vmem>>, vector<1x8x32xf32>
    %760 = vector.shape_cast %759 : vector<1x8x32xf32> to vector<8x32xf32>
    %761 = vector.shape_cast %753 : vector<8x32xf32> to vector<1x8x32xf32>
    tpu.vector_store %arg11[%c1_389, %c0_390, %c0_391], %761 {strides = array<i32>} : memref<2x8x32xf32, #tpu.memory_space<vmem>>, vector<1x8x32xf32>,
    %762 = arith.index_cast %671 : i32 to index
    %c0_392 = arith.constant 0 : index
    %763 = vector.load %arg13[%762, %c0_392] : memref<64x32xf32, #tpu.memory_space<vmem>>, vector<8x32xf32>
    tpu.vector_store %arg13[%762, %c0_392], %755 {strides = array<i32>} : memref<64x32xf32, #tpu.memory_space<vmem>>, vector<8x32xf32>,
    %c8_i32_393 = arith.constant 8 : i32
    %c0_394 = arith.constant 0 : index
    %c0_395 = arith.constant 0 : index
    %764 = vector.load %arg13[%c0_394, %c0_395] : memref<64x32xf32, #tpu.memory_space<vmem>>, vector<64x32xf32>
    %765 = arith.truncf %764 : vector<64x32xf32> to vector<64x32xbf16>
    %c0_396 = arith.constant 0 : index
    %c0_397 = arith.constant 0 : index
    %766 = vector.load %arg7[%c0_396, %c0_397] : memref<32x128xbf16, #tpu.memory_space<vmem>>, vector<32x128xbf16>
    %cst_398 = arith.constant dense<0.000000e+00> : vector<64x128xf32>
    %767 = tpu.matmul %765, %766, %cst_398 {dimension_numbers = #tpu.dot_dimension_numbers<[1], [0], [0], [1], [0, 0, 1, 1], [], []>} : vector<64x32xbf16>, vector<32x128xbf16>, vector<64x128xf32> -> vector<64x128xf32>
    %c0_399 = arith.constant 0 : index
    %c0_400 = arith.constant 0 : index
    %768 = vector.load %arg8[%c0_399, %c0_400] : memref<1x128xf32, #tpu.memory_space<vmem>>, vector<1x128xf32>
    %769 = vector.broadcast %768 : vector<1x128xf32> to vector<64x128xf32>
    %770 = arith.addf %767, %769 : vector<64x128xf32>
    %cst_401 = arith.constant dense<0xFF800000> : vector<64xf32>
    %771 = vector.multi_reduction <maximumf>, %770, %cst_401 [1] : vector<64x128xf32> to vector<64xf32>
    %772 = vector.shape_cast %771 : vector<64xf32> to vector<64x1xf32>
    %773 = vector.broadcast %772 : vector<64x1xf32> to vector<64x128xf32>
    %774 = arith.subf %770, %773 : vector<64x128xf32>
    %775 = math.exp %774 : vector<64x128xf32>
    %cst_402 = arith.constant dense<0.000000e+00> : vector<64xf32>
    %776 = vector.multi_reduction <add>, %775, %cst_402 [1] : vector<64x128xf32> to vector<64xf32>
    %777 = vector.shape_cast %776 : vector<64xf32> to vector<64x1xf32>
    %778 = math.log %777 : vector<64x1xf32>
    %779 = arith.addf %778, %772 : vector<64x1xf32>
    %780 = tpu.iota {dimensions = array<i32: 1>} : vector<64x128xi32>
    %c0_403 = arith.constant 0 : index
    %c0_404 = arith.constant 0 : index
    %781 = vector.load %arg2[%c0_403, %c0_404] : memref<64x1xi32, #tpu.memory_space<vmem>>, vector<64x1xi32>
    %782 = vector.broadcast %781 : vector<64x1xi32> to vector<64x128xi32>
    %783 = arith.cmpi eq, %780, %782 : vector<64x128xi32>
    %cst_405 = arith.constant 0.000000e+00 : f32
    %784 = vector.broadcast %cst_405 : f32 to vector<64x128xf32>
    %785 = arith.select %783, %770, %784 : vector<64x128xi1>, vector<64x128xf32>
    %cst_406 = arith.constant dense<0.000000e+00> : vector<64xf32>
    %786 = vector.multi_reduction <add>, %785, %cst_406 [1] : vector<64x128xf32> to vector<64xf32>
    %787 = vector.shape_cast %786 : vector<64xf32> to vector<64x1xf32>
    %788 = arith.subf %779, %787 : vector<64x1xf32>
    %c0_407 = arith.constant 0 : index
    %c0_408 = arith.constant 0 : index
    %789 = vector.load %arg9[%c0_407, %c0_408] : memref<1x1xf32, #tpu.memory_space<vmem>>, vector<1x1xf32>
    %c0_409 = arith.constant 0 : index
    %c0_410 = arith.constant 0 : index
    %790 = vector.load %arg3[%c0_409, %c0_410] : memref<64x1xf32, #tpu.memory_space<vmem>>, vector<64x1xf32>
    %791 = arith.mulf %788, %790 : vector<64x1xf32>
    %cst_411 = arith.constant dense<0.000000e+00> : vector<1xf32>
    %792 = vector.multi_reduction <add>, %791, %cst_411 [0] : vector<64x1xf32> to vector<1xf32>
    %793 = vector.shape_cast %792 : vector<1xf32> to vector<1x1xf32>
    %794 = arith.addf %789, %793 : vector<1x1xf32>
    %c0_412 = arith.constant 0 : index
    %c0_413 = arith.constant 0 : index
    %795 = vector.load %arg9[%c0_412, %c0_413] : memref<1x1xf32, #tpu.memory_space<vmem>>, vector<1x1xf32>
    tpu.vector_store %arg9[%c0_412, %c0_413], %794 {strides = array<i32>} : memref<1x1xf32, #tpu.memory_space<vmem>>, vector<1x1xf32>,
    return
  }
  func.func @transform_0(%arg0: i32) -> (i32, i32) {
    %c0_i32 = arith.constant 0 : i32
    %c0_i32_0 = arith.constant 0 : i32
    return %arg0, %c0_i32 : i32, i32
  }
  func.func @transform_1(%arg0: i32) -> (i32, i32) {
    %c0_i32 = arith.constant 0 : i32
    %c0_i32_0 = arith.constant 0 : i32
    return %arg0, %c0_i32 : i32, i32
  }
  func.func @transform_2(%arg0: i32) -> (i32, i32) {
    %c0_i32 = arith.constant 0 : i32
    %c0_i32_0 = arith.constant 0 : i32
    return %arg0, %c0_i32 : i32, i32
  }
  func.func @transform_3(%arg0: i32) -> (i32, i32, i32) {
    %c0_i32 = arith.constant 0 : i32
    %c0_i32_0 = arith.constant 0 : i32
    %c0_i32_1 = arith.constant 0 : i32
    %c0_i32_2 = arith.constant 0 : i32
    return %c0_i32, %c0_i32_0, %c0_i32_1 : i32, i32, i32
  }
  func.func @transform_4(%arg0: i32) -> (i32, i32, i32) {
    %c0_i32 = arith.constant 0 : i32
    %c0_i32_0 = arith.constant 0 : i32
    %c0_i32_1 = arith.constant 0 : i32
    %c0_i32_2 = arith.constant 0 : i32
    return %c0_i32, %c0_i32_0, %c0_i32_1 : i32, i32, i32
  }
  func.func @transform_5(%arg0: i32) -> (i32, i32, i32) {
    %c0_i32 = arith.constant 0 : i32
    %c0_i32_0 = arith.constant 0 : i32
    %c0_i32_1 = arith.constant 0 : i32
    %c0_i32_2 = arith.constant 0 : i32
    return %c0_i32, %c0_i32_0, %c0_i32_1 : i32, i32, i32
  }
  func.func @transform_6(%arg0: i32) -> (i32, i32) {
    %c0_i32 = arith.constant 0 : i32
    %c0_i32_0 = arith.constant 0 : i32
    %c0_i32_1 = arith.constant 0 : i32
    return %c0_i32, %c0_i32_0 : i32, i32
  }
  func.func @transform_7(%arg0: i32) -> (i32, i32) {
    %c0_i32 = arith.constant 0 : i32
    %c0_i32_0 = arith.constant 0 : i32
    %c0_i32_1 = arith.constant 0 : i32
    return %c0_i32, %c0_i32_0 : i32, i32
  }
  func.func @transform_8(%arg0: i32) -> (i32, i32) {
    %c0_i32 = arith.constant 0 : i32
    %c0_i32_0 = arith.constant 0 : i32
    %c0_i32_1 = arith.constant 0 : i32
    return %c0_i32, %c0_i32_0 : i32, i32
  }
}

</mosaic_0001>

<llo_original>
// kernel: tpu_custom_call.1
$region0: #{tpu_custom_call.1}
  #allocation0 [shape = 'u32[]', space=smem, size = 0x4, offset = 0x4, fixed_abs, tag = 'smem constant byte address 0x4 - core index']
  #allocation1 [shape = 'u32[144,128]{1,0:T(1,128)}', space=vmem, size = 0x12000, scoped, tag = 'internal scratch']
  #allocation2 [shape = 'f32[2,8,32]{2,1,0:T(8,128)}', space=vmem, size = 0x2000, scoped, tag = 'scratch operand']
  #allocation3 [shape = 'f32[2,8,32]{2,1,0:T(8,128)}', space=vmem, size = 0x2000, scoped, tag = 'scratch operand']
  #allocation4 [shape = 'f32[64,128]{1,0:T(8,128)}', space=vmem, size = 0x8000, scoped, tag = 'scratch operand']
  #allocation5 [shape = 'f32[64,32]{1,0:T(8,128)}', space=vmem, size = 0x8000, scoped, tag = 'scratch operand']
  %s0 = inlined_call_operand.hbm [shape: bf16[64,32], index: 0, kind: input, shape index: {}]
  %s1 = inlined_call_operand.hbm [shape: s32[64,1], index: 1, kind: input, shape index: {}]
  %s2 = inlined_call_operand.hbm [shape: f32[64,1], index: 2, kind: input, shape index: {}]
  %s3 = inlined_call_operand.hbm [shape: bf16[2,32,128], index: 3, kind: input, shape index: {}]
  %s4 = inlined_call_operand.hbm [shape: bf16[2,32,128], index: 4, kind: input, shape index: {}]
  %s5 = inlined_call_operand.hbm [shape: f32[2,1,128], index: 5, kind: input, shape index: {}]
  %s6 = inlined_call_operand.hbm [shape: bf16[32,128], index: 6, kind: input, shape index: {}]
  %s7 = inlined_call_operand.hbm [shape: f32[1,128], index: 7, kind: input, shape index: {}]
  %s8 = inlined_call_operand.hbm [shape: f32[1,1], index: 8, kind: output, shape index: {}]
  %s9 = sld [smem:[#allocation0]]
  $region78: #{tpu_custom_call.1} parent=0
    _
  %s11 = ssub.s32 1, %s9
  %s12 = scalar_select 0, %s11, %s9
  $region1: #{tpu_custom_call.1} parent=0
    #allocation6 [shape = 'u8[16384]{0}', space=vmem, size = 0x4000, scoped, tag = 'input window, operand 0, single buffered']
    #allocation7 [shape = 's32[1]{0}', space=sflag, size = 0x4, scoped, tag = 'scoped memory for tpu_custom_call.1']
    #allocation8 [shape = 's32[1]{0}', space=sflag, size = 0x4, scoped, tag = 'scoped memory for tpu_custom_call.1']
    #allocation9 [shape = 'u8[32768]{0}', space=vmem, size = 0x8000, scoped, tag = 'input window, operand 1, single buffered']
    #allocation10 [shape = 's32[1]{0}', space=sflag, size = 0x4, scoped, tag = 'scoped memory for tpu_custom_call.1']
    #allocation11 [shape = 'u8[32768]{0}', space=vmem, size = 0x8000, scoped, tag = 'input window, operand 2, single buffered']
    #allocation12 [shape = 'u8[16384]{0}', space=vmem, size = 0x4000, scoped, tag = 'input window, operand 3, single buffered']
    #allocation13 [shape = 's32[1]{0}', space=sflag, size = 0x4, scoped, tag = 'scoped memory for tpu_custom_call.1']
    #allocation14 [shape = 'u8[16384]{0}', space=vmem, size = 0x4000, scoped, tag = 'input window, operand 4, single buffered']
    #allocation15 [shape = 'u8[1024]{0}', space=vmem, size = 0x400, scoped, tag = 'input window, operand 5, single buffered']
    #allocation16 [shape = 's32[1]{0}', space=sflag, size = 0x4, scoped, tag = 'scoped memory for tpu_custom_call.1']
    #allocation17 [shape = 'u8[8192]{0}', space=vmem, size = 0x2000, scoped, tag = 'input window, operand 6, single buffered']
    #allocation18 [shape = 'u8[512]{0}', space=vmem, size = 0x400, scoped, tag = 'input window, operand 7, single buffered']
    #allocation19 [shape = 's32[1]{0}', space=sflag, size = 0x4, scoped, tag = 'scoped memory for tpu_custom_call.1']
    #allocation20 [shape = 'u8[512]{0}', space=vmem, size = 0x400, scoped, tag = 'output window, operand 0, single buffered']
    %13 = vsyncpa [#allocation7], 0
    %14 = vsyncpa [#allocation10], 0
    %15 = vsyncpa [#allocation13], 0
    %16 = vsyncpa [#allocation16], 0
    %17 = vsyncpa [#allocation19], 0
    %18 = vsyncpa [#allocation8], 0
    // Predicated region
    $region2: #{tpu_custom_call.1} parent=1 // pred_check
      _
    $region3: #{tpu_custom_call.1} parent=1 // pred_check_branch
      %20 = sbr.rel (0) target = $region5
    $region4: #{tpu_custom_call.1} parent=1 // pred_region
      %s22 = ssub.s32 512, 512
      %23 = vsyncadd [#allocation7], %s22
      %s24 = sshll.u32 [#allocation6], 4
      %s25 = int_to_ptr.vmem [resolvable:$true] %s24
      %30 = dma.hbm_to_vmem [thread:$0]  %s0, 512, %s25, [#allocation7], 64, 64, 4
    $region5: #{tpu_custom_call.1} parent=1 // pred_fallthru
      _
    // Predicated region
    $region6: #{tpu_custom_call.1} parent=1 // pred_check
      _
    $region7: #{tpu_custom_call.1} parent=1 // pred_check_branch
      %32 = sbr.rel (0) target = $region9
    $region8: #{tpu_custom_call.1} parent=1 // pred_region
      %s34 = ssub.s32 1024, 1024
      %35 = vsyncadd [#allocation10], %s34
      %s36 = sshll.u32 [#allocation9], 4
      %s37 = int_to_ptr.vmem [resolvable:$true] %s36
      %42 = dma.hbm_to_vmem [thread:$0]  %s1, 1024, %s37, [#allocation10], 128, 128, 8
    $region9: #{tpu_custom_call.1} parent=1 // pred_fallthru
      _
    // Predicated region
    $region10: #{tpu_custom_call.1} parent=1 // pred_check
      _
    $region11: #{tpu_custom_call.1} parent=1 // pred_check_branch
      %44 = sbr.rel (0) target = $region13
    $region12: #{tpu_custom_call.1} parent=1 // pred_region
      %s46 = ssub.s32 1024, 1024
      %47 = vsyncadd [#allocation10], %s46
      %s48 = sshll.u32 [#allocation11], 4
      %s49 = int_to_ptr.vmem [resolvable:$true] %s48
      %54 = dma.hbm_to_vmem [thread:$0]  %s2, 1024, %s49, [#allocation10], 128, 128, 8
    $region13: #{tpu_custom_call.1} parent=1 // pred_fallthru
      _
    // Predicated region
    $region14: #{tpu_custom_call.1} parent=1 // pred_check
      _
    $region15: #{tpu_custom_call.1} parent=1 // pred_check_branch
      %56 = sbr.rel (0) target = $region17
    $region16: #{tpu_custom_call.1} parent=1 // pred_region
      %s58 = ssub.s32 512, 512
      %59 = vsyncadd [#allocation13], %s58
      %s60 = sshll.u32 [#allocation12], 4
      %s61 = int_to_ptr.vmem [resolvable:$true] %s60
      %66 = dma.hbm_to_vmem [thread:$0]  %s3, 512, %s61, [#allocation13], 64, 64, 4
    $region17: #{tpu_custom_call.1} parent=1 // pred_fallthru
      _
    // Predicated region
    $region18: #{tpu_custom_call.1} parent=1 // pred_check
      _
    $region19: #{tpu_custom_call.1} parent=1 // pred_check_branch
      %68 = sbr.rel (0) target = $region21
    $region20: #{tpu_custom_call.1} parent=1 // pred_region
      %s70 = ssub.s32 512, 512
      %71 = vsyncadd [#allocation13], %s70
      %s72 = sshll.u32 [#allocation14], 4
      %s73 = int_to_ptr.vmem [resolvable:$true] %s72
      %78 = dma.hbm_to_vmem [thread:$0]  %s4, 512, %s73, [#allocation13], 64, 64, 4
    $region21: #{tpu_custom_call.1} parent=1 // pred_fallthru
      _
    // Predicated region
    $region22: #{tpu_custom_call.1} parent=1 // pred_check
      _
    $region23: #{tpu_custom_call.1} parent=1 // pred_check_branch
      %80 = sbr.rel (0) target = $region25
    $region24: #{tpu_custom_call.1} parent=1 // pred_region
      %s82 = ssub.s32 32, 32
      %83 = vsyncadd [#allocation16], %s82
      %s84 = sshll.u32 [#allocation15], 4
      %s85 = int_to_ptr.vmem [resolvable:$true] %s84
      %90 = dma.hbm_to_vmem [thread:$0]  %s5, 32, %s85, [#allocation16], 16, 16, 1
    $region25: #{tpu_custom_call.1} parent=1 // pred_fallthru
      _
    // Predicated region
    $region26: #{tpu_custom_call.1} parent=1 // pred_check
      _
    $region27: #{tpu_custom_call.1} parent=1 // pred_check_branch
      %92 = sbr.rel (0) target = $region29
    $region28: #{tpu_custom_call.1} parent=1 // pred_region
      %s94 = ssub.s32 256, 256
      %95 = vsyncadd [#allocation16], %s94
      %s96 = sshll.u32 [#allocation17], 4
      %s97 = int_to_ptr.vmem [resolvable:$true] %s96
      %102 = dma.hbm_to_vmem [thread:$0]  %s6, 256, %s97, [#allocation16], 64, 64, 4
    $region29: #{tpu_custom_call.1} parent=1 // pred_fallthru
      _
    // Predicated region
    $region30: #{tpu_custom_call.1} parent=1 // pred_check
      _
    $region31: #{tpu_custom_call.1} parent=1 // pred_check_branch
      %104 = sbr.rel (0) target = $region33
    $region32: #{tpu_custom_call.1} parent=1 // pred_region
      %s106 = ssub.s32 16, 16
      %107 = vsyncadd [#allocation19], %s106
      %s109 = sshll.u32 [#allocation18], 4
      %s110 = int_to_ptr.vmem [resolvable:$true] %s109
      %112 = dma.hbm_to_vmem [thread:$0]  %s7, 16, %s110, [#allocation19]
    $region33: #{tpu_custom_call.1} parent=1 // pred_fallthru
      _
    // Predicated region
    $region34: #{tpu_custom_call.1} parent=1 // pred_check
      _
    $region35: #{tpu_custom_call.1} parent=1 // pred_check_branch
      %114 = sbr.rel (0) target = $region37
    $region36: #{tpu_custom_call.1} parent=1 // pred_region
      %115 = dma.done [#allocation7], 512
    $region37: #{tpu_custom_call.1} parent=1 // pred_fallthru
      _
    // Predicated region
    $region38: #{tpu_custom_call.1} parent=1 // pred_check
      _
    $region39: #{tpu_custom_call.1} parent=1 // pred_check_branch
      %117 = sbr.rel (0) target = $region41
    $region40: #{tpu_custom_call.1} parent=1 // pred_region
      %118 = dma.done [#allocation10], 1024
    $region41: #{tpu_custom_call.1} parent=1 // pred_fallthru
      _
    // Predicated region
    $region42: #{tpu_custom_call.1} parent=1 // pred_check
      _
    $region43: #{tpu_custom_call.1} parent=1 // pred_check_branch
      %120 = sbr.rel (0) target = $region45
    $region44: #{tpu_custom_call.1} parent=1 // pred_region
      %121 = dma.done [#allocation10], 1024
    $region45: #{tpu_custom_call.1} parent=1 // pred_fallthru
      _
    // Predicated region
    $region46: #{tpu_custom_call.1} parent=1 // pred_check
      _
    $region47: #{tpu_custom_call.1} parent=1 // pred_check_branch
      %123 = sbr.rel (0) target = $region49
    $region48: #{tpu_custom_call.1} parent=1 // pred_region
      %124 = dma.done [#allocation13], 512
    $region49: #{tpu_custom_call.1} parent=1 // pred_fallthru
      _
    // Predicated region
    $region50: #{tpu_custom_call.1} parent=1 // pred_check
      _
    $region51: #{tpu_custom_call.1} parent=1 // pred_check_branch
      %126 = sbr.rel (0) target = $region53
    $region52: #{tpu_custom_call.1} parent=1 // pred_region
      %127 = dma.done [#allocation13], 512
    $region53: #{tpu_custom_call.1} parent=1 // pred_fallthru
      _
    // Predicated region
    $region54: #{tpu_custom_call.1} parent=1 // pred_check
      _
    $region55: #{tpu_custom_call.1} parent=1 // pred_check_branch
      %129 = sbr.rel (0) target = $region57
    $region56: #{tpu_custom_call.1} parent=1 // pred_region
      %130 = dma.done [#allocation16], 32
    $region57: #{tpu_custom_call.1} parent=1 // pred_fallthru
      _
    // Predicated region
    $region58: #{tpu_custom_call.1} parent=1 // pred_check
      _
    $region59: #{tpu_custom_call.1} parent=1 // pred_check_branch
      %132 = sbr.rel (0) target = $region61
    $region60: #{tpu_custom_call.1} parent=1 // pred_region
      %133 = dma.done [#allocation16], 256
    $region61: #{tpu_custom_call.1} parent=1 // pred_fallthru
      _
    // Predicated region
    $region62: #{tpu_custom_call.1} parent=1 // pred_check
      _
    $region63: #{tpu_custom_call.1} parent=1 // pred_check_branch
      %135 = sbr.rel (0) target = $region65
    $region64: #{tpu_custom_call.1} parent=1 // pred_region
      %136 = dma.done [#allocation19], 16
    $region65: #{tpu_custom_call.1} parent=1 // pred_fallthru
      _
    %p138 = scmp.eq.s32.totalorder 0, 0
    // Predicated region
    $region66: #{tpu_custom_call.1} parent=1 // pred_check
      %p139 = pneg %p138
    $region67: #{tpu_custom_call.1} parent=1 // pred_check_branch
      %141 = sbr.rel (%p139) target = $region69
    $region68: #{tpu_custom_call.1} parent=1 // pred_region
      %vm142 = vcmask 261120
      %143 = vst.msk [vmem:[#allocation2] sm:$0xff] %vm142, 0.0
      %144 = vst.msk [vmem:[#allocation2 + $0x8] sm:$0xff] %vm142, 0.0
      %145 = vst.msk [vmem:[#allocation3] sm:$0xff] %vm142, 0.0
      %146 = vst.msk [vmem:[#allocation3 + $0x8] sm:$0xff] %vm142, 0.0
      %vm147 = vcmask 0
      %148 = vst.msk [vmem:[#allocation20] sm:$0x1] %vm147, 0.0
    $region69: #{tpu_custom_call.1} parent=1 // pred_fallthru
      _
    %v149 = vld [vmem:[#allocation6] sm:$0xf]
    %v150 = vld [vmem:[#allocation6 + $0x4] sm:$0xf]
    %v151 = vld [vmem:[#allocation6 + $0x8] sm:$0xf]
    %v152 = vld [vmem:[#allocation6 + $0xc] sm:$0xf]
    %v153 = vld [vmem:[#allocation6 + $0x10] sm:$0xf]
    %v154 = vld [vmem:[#allocation6 + $0x14] sm:$0xf]
    %v155 = vld [vmem:[#allocation6 + $0x18] sm:$0xf]
    %v156 = vld [vmem:[#allocation6 + $0x1c] sm:$0xf]
    %v157 = vld [vmem:[#allocation12] sm:$0xf]
    %v158 = vld [vmem:[#allocation12 + $0x4] sm:$0xf]
    %v159 = vld [vmem:[#allocation12 + $0x8] sm:$0xf]
    %v160 = vld [vmem:[#allocation12 + $0xc] sm:$0xf]
    %v161 = vld [vmem:[#allocation15] sm:$0x1]
    %v163 = vlaneseq
    %v164 = vshrl.u32 %v163, 7
    %v165 = vsub.s32 0, %v164
    %v166 = vrot.slane %v161, %v165
    %v176 = vunpack.c.l.b16 %v149
    %v177 = vunpack.c.l.b16 %v150
    %v178 = vunpack.c.l.b16 %v151
    %v179 = vunpack.c.l.b16 %v152
    %v180 = vunpack.c.l.b16 %v153
    %v181 = vunpack.c.l.b16 %v154
    %v182 = vunpack.c.l.b16 %v155
    %v183 = vunpack.c.l.b16 %v156
    %v184 = vpack.c.b16 %v177, %v176
    %v185 = vpack.c.b16 %v179, %v178
    %v186 = vpack.c.b16 %v181, %v180
    %v187 = vpack.c.b16 %v183, %v182
    %v192 = vunpack.c.l.b16 %v157
    %v193 = vunpack.c.l.b16 %v158
    %v194 = vunpack.c.l.b16 %v159
    %v195 = vunpack.c.l.b16 %v160
    %v196 = vpack.c.b16 %v193, %v192
    %v197 = vpack.c.b16 %v195, %v194
    %vm200 = vcmask 261120
    %v202 = vsel %vm200, %v184, 0
    %v205 = vsel %vm200, %v185, 0
    %v208 = vsel %vm200, %v186, 0
    %v211 = vsel %vm200, %v187, 0
    %213 = vmatprep.subr.bf16.mxu0 0
    %214 = vmatpush1.bf16.msra.mxu0 %v196
    %215 = vmatprep.subr.bf16.mxu0 0
    %216 = vmatpush1.bf16.msra.mxu0 %v197
    %217 = vmatprep.subr.bf16.mxu0 0
    %218 = vmatpush1.bf16.msra.mxu0 0
    %219 = vmatprep.subr.bf16.mxu0 0
    %220 = vmatpush1.bf16.msra.mxu0 0
    %221 = vmatprep.subr.bf16.mxu0 0
    %222 = vmatpush1.bf16.msra.mxu0 0
    %223 = vmatprep.subr.bf16.mxu0 0
    %224 = vmatpush1.bf16.msra.mxu0 0
    %225 = vmatprep.subr.bf16.mxu0 0
    %226 = vmatpush1.bf16.msra.mxu0 0
    %227 = vmatprep.subr.bf16.mxu0 0
    %228 = vmatpush1.bf16.msra.mxu0 0
    %229 = vmatprep.subr.bf16.mxu0 0
    %230 = vmatpush1.bf16.msra.mxu0 0
    %231 = vmatprep.subr.bf16.mxu0 0
    %232 = vmatpush1.bf16.msra.mxu0 0
    %233 = vmatprep.subr.bf16.mxu0 0
    %234 = vmatpush1.bf16.msra.mxu0 0
    %235 = vmatprep.subr.bf16.mxu0 0
    %236 = vmatpush1.bf16.msra.mxu0 0
    %237 = vmatprep.subr.bf16.mxu0 0
    %238 = vmatpush1.bf16.msra.mxu0 0
    %239 = vmatprep.subr.bf16.mxu0 0
    %240 = vmatpush1.bf16.msra.mxu0 0
    %241 = vmatprep.subr.bf16.mxu0 0
    %242 = vmatpush1.bf16.msra.mxu0 0
    %243 = vmatprep.subr.bf16.mxu0 0
    %244 = vmatpush1.bf16.msra.mxu0 0
    %245 = vmatprep.mubr.bf16.mxu0 0
    %246 = vmatmul.mubr.bf16.gmra.mrb[0].mxu0 %v202
    %v247 = vpop.f32.mrb[0].mxu0
    %v248 = vadd.f32 %v166, %v247
    %v249 = vpop.f32.mrb[0].mxu0
    %v250 = vpop.f32.mrb[0].mxu0
    %v251 = vadd.f32 %v166, %v250
    %v252 = vpop.f32.mrb[0].mxu0
    %253 = vmatprep.mubr.bf16.mxu0 0
    %254 = vmatmul.mubr.bf16.gmra.mrb[0].mxu0 %v205
    %v255 = vpop.f32.mrb[0].mxu0
    %v256 = vadd.f32 %v166, %v255
    %v257 = vpop.f32.mrb[0].mxu0
    %v258 = vpop.f32.mrb[0].mxu0
    %v259 = vadd.f32 %v166, %v258
    %v260 = vpop.f32.mrb[0].mxu0
    %261 = vmatprep.mubr.bf16.mxu0 0
    %262 = vmatmul.mubr.bf16.gmra.mrb[0].mxu0 %v208
    %v263 = vpop.f32.mrb[0].mxu0
    %v264 = vadd.f32 %v166, %v263
    %v265 = vpop.f32.mrb[0].mxu0
    %v266 = vpop.f32.mrb[0].mxu0
    %v267 = vadd.f32 %v166, %v266
    %v268 = vpop.f32.mrb[0].mxu0
    %269 = vmatprep.mubr.bf16.mxu0 0
    %270 = vmatmul.mubr.bf16.gmra.mrb[0].mxu0 %v211
    %v271 = vpop.f32.mrb[0].mxu0
    %v272 = vadd.f32 %v166, %v271
    %v273 = vpop.f32.mrb[0].mxu0
    %v274 = vpop.f32.mrb[0].mxu0
    %v275 = vadd.f32 %v166, %v274
    %v276 = vpop.f32.mrb[0].mxu0
    %277 = vdwg.mxu0
    %278 = vst [vmem:[#allocation4] sm:$0xff] %v248
    %279 = vst [vmem:[#allocation4 + $0x8] sm:$0xff] %v251
    %280 = vst [vmem:[#allocation4 + $0x10] sm:$0xff] %v256
    %281 = vst [vmem:[#allocation4 + $0x18] sm:$0xff] %v259
    %282 = vst [vmem:[#allocation4 + $0x20] sm:$0xff] %v264
    %283 = vst [vmem:[#allocation4 + $0x28] sm:$0xff] %v267
    %284 = vst [vmem:[#allocation4 + $0x30] sm:$0xff] %v272
    %285 = vst [vmem:[#allocation4 + $0x38] sm:$0xff] %v275
    %v286 = vld [vmem:[#allocation4] sm:$0xff]
    %v287 = vld [vmem:[#allocation2] sm:$0xff]
    %v288 = vpack.c.bf16 %v287, %v287
    %v289 = vld [vmem:[#allocation14] sm:$0xf]
    %v290 = vld [vmem:[#allocation14 + $0x4] sm:$0xf]
    %v291 = vld [vmem:[#allocation14 + $0x8] sm:$0xf]
    %v292 = vld [vmem:[#allocation14 + $0xc] sm:$0xf]
    %v297 = vunpack.c.l.b16 %v289
    %v298 = vunpack.c.l.b16 %v290
    %v299 = vunpack.c.l.b16 %v291
    %v300 = vunpack.c.l.b16 %v292
    %v301 = vpack.c.b16 %v298, %v297
    %v302 = vpack.c.b16 %v300, %v299
    %v306 = vsel %vm200, %v288, 0
    %308 = vmatprep.subr.bf16.mxu0 0
    %309 = vmatpush1.bf16.msra.mxu0 %v301
    %310 = vmatprep.subr.bf16.mxu0 0
    %311 = vmatpush1.bf16.msra.mxu0 %v302
    %312 = vmatprep.subr.bf16.mxu0 0
    %313 = vmatpush1.bf16.msra.mxu0 0
    %314 = vmatprep.subr.bf16.mxu0 0
    %315 = vmatpush1.bf16.msra.mxu0 0
    %316 = vmatprep.subr.bf16.mxu0 0
    %317 = vmatpush1.bf16.msra.mxu0 0
    %318 = vmatprep.subr.bf16.mxu0 0
    %319 = vmatpush1.bf16.msra.mxu0 0
    %320 = vmatprep.subr.bf16.mxu0 0
    %321 = vmatpush1.bf16.msra.mxu0 0
    %322 = vmatprep.subr.bf16.mxu0 0
    %323 = vmatpush1.bf16.msra.mxu0 0
    %324 = vmatprep.subr.bf16.mxu0 0
    %325 = vmatpush1.bf16.msra.mxu0 0
    %326 = vmatprep.subr.bf16.mxu0 0
    %327 = vmatpush1.bf16.msra.mxu0 0
    %328 = vmatprep.subr.bf16.mxu0 0
    %329 = vmatpush1.bf16.msra.mxu0 0
    %330 = vmatprep.subr.bf16.mxu0 0
    %331 = vmatpush1.bf16.msra.mxu0 0
    %332 = vmatprep.subr.bf16.mxu0 0
    %333 = vmatpush1.bf16.msra.mxu0 0
    %334 = vmatprep.subr.bf16.mxu0 0
    %335 = vmatpush1.bf16.msra.mxu0 0
    %336 = vmatprep.subr.bf16.mxu0 0
    %337 = vmatpush1.bf16.msra.mxu0 0
    %338 = vmatprep.subr.bf16.mxu0 0
    %339 = vmatpush1.bf16.msra.mxu0 0
    %340 = vmatprep.mubr.bf16.mxu0 0
    %341 = vmatmul.mubr.bf16.gmra.mrb[0].mxu0 %v306
    %v342 = vpop.f32.mrb[0].mxu0
    %v343 = vadd.f32 0.0, %v342
    %v344 = vpop.f32.mrb[0].mxu0
    %v345 = vpop.f32.mrb[0].mxu0
    %v346 = vpop.f32.mrb[0].mxu0
    %347 = vdwg.mxu0
    %v348 = vadd.f32 %v286, %v343
    %v349 = vld [vmem:[#allocation3] sm:$0xff]
    %v350 = vxor.u32 %v348, 2147483648
    %v351 = vmul.f32 %v350, 1.442695
    %v352 = vpow.pop %v351
    %v353 = vadd.f32 %v352, 1.0
    %v354 = vrcp.pop %v353
    %v355 = vmul.f32 1.0, %v354
    %v356 = vtanh.pop %v348
    %358 = vrot.lane.b32.xlu0 %v349, 32
    %v359 = vpop.permute.xlu0 %358
    %v361 = vmul.f32 %v355, %v359
    %363 = vrot.lane.b32.xlu0 %v356, 64
    %v364 = vpop.permute.xlu0 %363
    %v366 = vmul.f32 %v355, %v364
    %368 = vrot.lane.b32.xlu0 %v366, 32
    %v369 = vpop.permute.xlu0 %368
    %v371 = vadd.f32 %v361, %v369
    %v372 = vtanh.pop %v371
    %374 = vrot.lane.b32.xlu0 %v372, 64
    %v375 = vpop.permute.xlu0 %374
    %v377 = vmul.f32 %v355, %v375
    %379 = vrot.lane.b32.xlu0 %v377, 32
    %v380 = vpop.permute.xlu0 %379
    %382 = vst.msk [vmem:[#allocation2] sm:$0xff] %vm200, %v380
    %384 = vrot.lane.b32.xlu0 %v371, 96
    %v385 = vpop.permute.xlu0 %384
    %387 = vst.msk [vmem:[#allocation3] sm:$0xff] %vm200, %v385
    %v388 = vpack.c.bf16 %v377, %v377
    %s389 = scalar_lea.vmem [#allocation12], 16
    %v390 = vld [vmem:[%s389] sm:$0xf]
    %v391 = vld [vmem:[%s389 + $0x4] sm:$0xf]
    %v392 = vld [vmem:[%s389 + $0x8] sm:$0xf]
    %v393 = vld [vmem:[%s389 + $0xc] sm:$0xf]
    %s394 = scalar_lea.vmem [#allocation2], 8
    %v395 = vld [vmem:[%s394] sm:$0xff]
    %v396 = vpack.c.bf16 %v395, %v395
    %s397 = scalar_lea.vmem [#allocation14], 16
    %v398 = vld [vmem:[%s397] sm:$0xf]
    %v399 = vld [vmem:[%s397 + $0x4] sm:$0xf]
    %v400 = vld [vmem:[%s397 + $0x8] sm:$0xf]
    %v401 = vld [vmem:[%s397 + $0xc] sm:$0xf]
    %v406 = vunpack.c.l.b16 %v398
    %v407 = vunpack.c.l.b16 %v399
    %v408 = vunpack.c.l.b16 %v400
    %v409 = vunpack.c.l.b16 %v401
    %v410 = vpack.c.b16 %v407, %v406
    %v411 = vpack.c.b16 %v409, %v408
    %v415 = vsel %vm200, %v396, 0
    %417 = vmatprep.subr.bf16.mxu0 0
    %418 = vmatpush1.bf16.msra.mxu0 %v410
    %419 = vmatprep.subr.bf16.mxu0 0
    %420 = vmatpush1.bf16.msra.mxu0 %v411
    %421 = vmatprep.subr.bf16.mxu0 0
    %422 = vmatpush1.bf16.msra.mxu0 0
    %423 = vmatprep.subr.bf16.mxu0 0
    %424 = vmatpush1.bf16.msra.mxu0 0
    %425 = vmatprep.subr.bf16.mxu0 0
    %426 = vmatpush1.bf16.msra.mxu0 0
    %427 = vmatprep.subr.bf16.mxu0 0
    %428 = vmatpush1.bf16.msra.mxu0 0
    %429 = vmatprep.subr.bf16.mxu0 0
    %430 = vmatpush1.bf16.msra.mxu0 0
    %431 = vmatprep.subr.bf16.mxu0 0
    %432 = vmatpush1.bf16.msra.mxu0 0
    %433 = vmatprep.subr.bf16.mxu0 0
    %434 = vmatpush1.bf16.msra.mxu0 0
    %435 = vmatprep.subr.bf16.mxu0 0
    %436 = vmatpush1.bf16.msra.mxu0 0
    %437 = vmatprep.subr.bf16.mxu0 0
    %438 = vmatpush1.bf16.msra.mxu0 0
    %439 = vmatprep.subr.bf16.mxu0 0
    %440 = vmatpush1.bf16.msra.mxu0 0
    %441 = vmatprep.subr.bf16.mxu0 0
    %442 = vmatpush1.bf16.msra.mxu0 0
    %443 = vmatprep.subr.bf16.mxu0 0
    %444 = vmatpush1.bf16.msra.mxu0 0
    %445 = vmatprep.subr.bf16.mxu0 0
    %446 = vmatpush1.bf16.msra.mxu0 0
    %447 = vmatprep.subr.bf16.mxu0 0
    %448 = vmatpush1.bf16.msra.mxu0 0
    %449 = vmatprep.mubr.bf16.mxu0 0
    %450 = vmatmul.mubr.bf16.gmra.mrb[0].mxu0 %v415
    %v451 = vpop.f32.mrb[0].mxu0
    %v452 = vadd.f32 0.0, %v451
    %v453 = vpop.f32.mrb[0].mxu0
    %v454 = vpop.f32.mrb[0].mxu0
    %v455 = vpop.f32.mrb[0].mxu0
    %456 = vdwg.mxu0
    %458 = vrot.lane.b32.xlu0 %v388, 32
    %v459 = vpop.permute.xlu0 %458
    %v464 = vunpack.c.l.b16 %v390
    %v465 = vunpack.c.l.b16 %v391
    %v466 = vunpack.c.l.b16 %v392
    %v467 = vunpack.c.l.b16 %v393
    %v468 = vpack.c.b16 %v465, %v464
    %v469 = vpack.c.b16 %v467, %v466
    %v473 = vsel %vm200, %v459, 0
    %475 = vmatprep.subr.bf16.mxu0 0
    %476 = vmatpush1.bf16.msra.mxu0 %v468
    %477 = vmatprep.subr.bf16.mxu0 0
    %478 = vmatpush1.bf16.msra.mxu0 %v469
    %479 = vmatprep.subr.bf16.mxu0 0
    %480 = vmatpush1.bf16.msra.mxu0 0
    %481 = vmatprep.subr.bf16.mxu0 0
    %482 = vmatpush1.bf16.msra.mxu0 0
    %483 = vmatprep.subr.bf16.mxu0 0
    %484 = vmatpush1.bf16.msra.mxu0 0
    %485 = vmatprep.subr.bf16.mxu0 0
    %486 = vmatpush1.bf16.msra.mxu0 0
    %487 = vmatprep.subr.bf16.mxu0 0
    %488 = vmatpush1.bf16.msra.mxu0 0
    %489 = vmatprep.subr.bf16.mxu0 0
    %490 = vmatpush1.bf16.msra.mxu0 0
    %491 = vmatprep.subr.bf16.mxu0 0
    %492 = vmatpush1.bf16.msra.mxu0 0
    %493 = vmatprep.subr.bf16.mxu0 0
    %494 = vmatpush1.bf16.msra.mxu0 0
    %495 = vmatprep.subr.bf16.mxu0 0
    %496 = vmatpush1.bf16.msra.mxu0 0
    %497 = vmatprep.subr.bf16.mxu0 0
    %498 = vmatpush1.bf16.msra.mxu0 0
    %499 = vmatprep.subr.bf16.mxu0 0
    %500 = vmatpush1.bf16.msra.mxu0 0
    %501 = vmatprep.subr.bf16.mxu0 0
    %502 = vmatpush1.bf16.msra.mxu0 0
    %503 = vmatprep.subr.bf16.mxu0 0
    %504 = vmatpush1.bf16.msra.mxu0 0
    %505 = vmatprep.subr.bf16.mxu0 0
    %506 = vmatpush1.bf16.msra.mxu0 0
    %507 = vmatprep.mubr.bf16.mxu0 0
    %508 = vmatmul.mubr.bf16.gmra.mrb[0].mxu0 %v473
    %v509 = vpop.f32.mrb[0].mxu0
    %v510 = vadd.f32 %v452, %v509
    %v511 = vpop.f32.mrb[0].mxu0
    %v512 = vpop.f32.mrb[0].mxu0
    %v513 = vpop.f32.mrb[0].mxu0
    %514 = vdwg.mxu0
    %s515 = scalar_lea.vmem [#allocation15], 1
    %v516 = vld [vmem:[%s515] sm:$0x1]
    %v518 = vlaneseq
    %v519 = vshrl.u32 %v518, 7
    %v520 = vsub.s32 0, %v519
    %v521 = vrot.slane %v516, %v520
    %v523 = vadd.f32 %v510, %v521
    %s524 = scalar_lea.vmem [#allocation3], 8
    %v525 = vld [vmem:[%s524] sm:$0xff]
    %v526 = vxor.u32 %v523, 2147483648
    %v527 = vmul.f32 %v526, 1.442695
    %v528 = vpow.pop %v527
    %v529 = vadd.f32 %v528, 1.0
    %v530 = vrcp.pop %v529
    %v531 = vmul.f32 1.0, %v530
    %v532 = vtanh.pop %v523
    %534 = vrot.lane.b32.xlu0 %v525, 32
    %v535 = vpop.permute.xlu0 %534
    %v537 = vmul.f32 %v531, %v535
    %539 = vrot.lane.b32.xlu0 %v532, 64
    %v540 = vpop.permute.xlu0 %539
    %v542 = vmul.f32 %v531, %v540
    %544 = vrot.lane.b32.xlu0 %v542, 32
    %v545 = vpop.permute.xlu0 %544
    %v547 = vadd.f32 %v537, %v545
    %v548 = vtanh.pop %v547
    %550 = vrot.lane.b32.xlu0 %v548, 64
    %v551 = vpop.permute.xlu0 %550
    %v553 = vmul.f32 %v531, %v551
    %555 = vrot.lane.b32.xlu0 %v553, 32
    %v556 = vpop.permute.xlu0 %555
    %558 = vst.msk [vmem:[%s394] sm:$0xff] %vm200, %v556
    %560 = vrot.lane.b32.xlu0 %v547, 96
    %v561 = vpop.permute.xlu0 %560
    %563 = vst.msk [vmem:[%s524] sm:$0xff] %vm200, %v561
    %564 = vst.msk [vmem:[#allocation5] sm:$0xff] %vm200, %v556
    %s565 = scalar_lea.vmem [#allocation4], 8
    %v566 = vld [vmem:[%s565] sm:$0xff]
    %v567 = vld [vmem:[#allocation2] sm:$0xff]
    %v568 = vpack.c.bf16 %v567, %v567
    %v569 = vld [vmem:[#allocation14] sm:$0xf]
    %v570 = vld [vmem:[#allocation14 + $0x4] sm:$0xf]
    %v571 = vld [vmem:[#allocation14 + $0x8] sm:$0xf]
    %v572 = vld [vmem:[#allocation14 + $0xc] sm:$0xf]
    %v577 = vunpack.c.l.b16 %v569
    %v578 = vunpack.c.l.b16 %v570
    %v579 = vunpack.c.l.b16 %v571
    %v580 = vunpack.c.l.b16 %v572
    %v581 = vpack.c.b16 %v578, %v577
    %v582 = vpack.c.b16 %v580, %v579
    %v586 = vsel %vm200, %v568, 0
    %588 = vmatprep.subr.bf16.mxu0 0
    %589 = vmatpush1.bf16.msra.mxu0 %v581
    %590 = vmatprep.subr.bf16.mxu0 0
    %591 = vmatpush1.bf16.msra.mxu0 %v582
    %592 = vmatprep.subr.bf16.mxu0 0
    %593 = vmatpush1.bf16.msra.mxu0 0
    %594 = vmatprep.subr.bf16.mxu0 0
    %595 = vmatpush1.bf16.msra.mxu0 0
    %596 = vmatprep.subr.bf16.mxu0 0
    %597 = vmatpush1.bf16.msra.mxu0 0
    %598 = vmatprep.subr.bf16.mxu0 0
    %599 = vmatpush1.bf16.msra.mxu0 0
    %600 = vmatprep.subr.bf16.mxu0 0
    %601 = vmatpush1.bf16.msra.mxu0 0
    %602 = vmatprep.subr.bf16.mxu0 0
    %603 = vmatpush1.bf16.msra.mxu0 0
    %604 = vmatprep.subr.bf16.mxu0 0
    %605 = vmatpush1.bf16.msra.mxu0 0
    %606 = vmatprep.subr.bf16.mxu0 0
    %607 = vmatpush1.bf16.msra.mxu0 0
    %608 = vmatprep.subr.bf16.mxu0 0
    %609 = vmatpush1.bf16.msra.mxu0 0
    %610 = vmatprep.subr.bf16.mxu0 0
    %611 = vmatpush1.bf16.msra.mxu0 0
    %612 = vmatprep.subr.bf16.mxu0 0
    %613 = vmatpush1.bf16.msra.mxu0 0
    %614 = vmatprep.subr.bf16.mxu0 0
    %615 = vmatpush1.bf16.msra.mxu0 0
    %616 = vmatprep.subr.bf16.mxu0 0
    %617 = vmatpush1.bf16.msra.mxu0 0
    %618 = vmatprep.subr.bf16.mxu0 0
    %619 = vmatpush1.bf16.msra.mxu0 0
    %620 = vmatprep.mubr.bf16.mxu0 0
    %621 = vmatmul.mubr.bf16.gmra.mrb[0].mxu0 %v586
    %v622 = vpop.f32.mrb[0].mxu0
    %v623 = vadd.f32 0.0, %v622
    %v624 = vpop.f32.mrb[0].mxu0
    %v625 = vpop.f32.mrb[0].mxu0
    %v626 = vpop.f32.mrb[0].mxu0
    %627 = vdwg.mxu0
    %v628 = vadd.f32 %v566, %v623
    %v629 = vld [vmem:[#allocation3] sm:$0xff]
    %v630 = vxor.u32 %v628, 2147483648
    %v631 = vmul.f32 %v630, 1.442695
    %v632 = vpow.pop %v631
    %v633 = vadd.f32 %v632, 1.0
    %v634 = vrcp.pop %v633
    %v635 = vmul.f32 1.0, %v634
    %v636 = vtanh.pop %v628
    %638 = vrot.lane.b32.xlu0 %v629, 32
    %v639 = vpop.permute.xlu0 %638
    %v641 = vmul.f32 %v635, %v639
    %643 = vrot.lane.b32.xlu0 %v636, 64
    %v644 = vpop.permute.xlu0 %643
    %v646 = vmul.f32 %v635, %v644
    %648 = vrot.lane.b32.xlu0 %v646, 32
    %v649 = vpop.permute.xlu0 %648
    %v651 = vadd.f32 %v641, %v649
    %v652 = vtanh.pop %v651
    %654 = vrot.lane.b32.xlu0 %v652, 64
    %v655 = vpop.permute.xlu0 %654
    %v657 = vmul.f32 %v635, %v655
    %659 = vrot.lane.b32.xlu0 %v657, 32
    %v660 = vpop.permute.xlu0 %659
    %662 = vst.msk [vmem:[#allocation2] sm:$0xff] %vm200, %v660
    %664 = vrot.lane.b32.xlu0 %v651, 96
    %v665 = vpop.permute.xlu0 %664
    %667 = vst.msk [vmem:[#allocation3] sm:$0xff] %vm200, %v665
    %v668 = vpack.c.bf16 %v657, %v657
    %v669 = vld [vmem:[%s389] sm:$0xf]
    %v670 = vld [vmem:[%s389 + $0x4] sm:$0xf]
    %v671 = vld [vmem:[%s389 + $0x8] sm:$0xf]
    %v672 = vld [vmem:[%s389 + $0xc] sm:$0xf]
    %v673 = vld [vmem:[%s394] sm:$0xff]
    %v674 = vpack.c.bf16 %v673, %v673
    %v675 = vld [vmem:[%s397] sm:$0xf]
    %v676 = vld [vmem:[%s397 + $0x4] sm:$0xf]
    %v677 = vld [vmem:[%s397 + $0x8] sm:$0xf]
    %v678 = vld [vmem:[%s397 + $0xc] sm:$0xf]
    %v683 = vunpack.c.l.b16 %v675
    %v684 = vunpack.c.l.b16 %v676
    %v685 = vunpack.c.l.b16 %v677
    %v686 = vunpack.c.l.b16 %v678
    %v687 = vpack.c.b16 %v684, %v683
    %v688 = vpack.c.b16 %v686, %v685
    %v692 = vsel %vm200, %v674, 0
    %694 = vmatprep.subr.bf16.mxu0 0
    %695 = vmatpush1.bf16.msra.mxu0 %v687
    %696 = vmatprep.subr.bf16.mxu0 0
    %697 = vmatpush1.bf16.msra.mxu0 %v688
    %698 = vmatprep.subr.bf16.mxu0 0
    %699 = vmatpush1.bf16.msra.mxu0 0
    %700 = vmatprep.subr.bf16.mxu0 0
    %701 = vmatpush1.bf16.msra.mxu0 0
    %702 = vmatprep.subr.bf16.mxu0 0
    %703 = vmatpush1.bf16.msra.mxu0 0
    %704 = vmatprep.subr.bf16.mxu0 0
    %705 = vmatpush1.bf16.msra.mxu0 0
    %706 = vmatprep.subr.bf16.mxu0 0
    %707 = vmatpush1.bf16.msra.mxu0 0
    %708 = vmatprep.subr.bf16.mxu0 0
    %709 = vmatpush1.bf16.msra.mxu0 0
    %710 = vmatprep.subr.bf16.mxu0 0
    %711 = vmatpush1.bf16.msra.mxu0 0
    %712 = vmatprep.subr.bf16.mxu0 0
    %713 = vmatpush1.bf16.msra.mxu0 0
    %714 = vmatprep.subr.bf16.mxu0 0
    %715 = vmatpush1.bf16.msra.mxu0 0
    %716 = vmatprep.subr.bf16.mxu0 0
    %717 = vmatpush1.bf16.msra.mxu0 0
    %718 = vmatprep.subr.bf16.mxu0 0
    %719 = vmatpush1.bf16.msra.mxu0 0
    %720 = vmatprep.subr.bf16.mxu0 0
    %721 = vmatpush1.bf16.msra.mxu0 0
    %722 = vmatprep.subr.bf16.mxu0 0
    %723 = vmatpush1.bf16.msra.mxu0 0
    %724 = vmatprep.subr.bf16.mxu0 0
    %725 = vmatpush1.bf16.msra.mxu0 0
    %726 = vmatprep.mubr.bf16.mxu0 0
    %727 = vmatmul.mubr.bf16.gmra.mrb[0].mxu0 %v692
    %v728 = vpop.f32.mrb[0].mxu0
    %v729 = vadd.f32 0.0, %v728
    %v730 = vpop.f32.mrb[0].mxu0
    %v731 = vpop.f32.mrb[0].mxu0
    %v732 = vpop.f32.mrb[0].mxu0
    %733 = vdwg.mxu0
    %735 = vrot.lane.b32.xlu0 %v668, 32
    %v736 = vpop.permute.xlu0 %735
    %v741 = vunpack.c.l.b16 %v669
    %v742 = vunpack.c.l.b16 %v670
    %v743 = vunpack.c.l.b16 %v671
    %v744 = vunpack.c.l.b16 %v672
    %v745 = vpack.c.b16 %v742, %v741
    %v746 = vpack.c.b16 %v744, %v743
    %v750 = vsel %vm200, %v736, 0
    %752 = vmatprep.subr.bf16.mxu0 0
    %753 = vmatpush1.bf16.msra.mxu0 %v745
    %754 = vmatprep.subr.bf16.mxu0 0
    %755 = vmatpush1.bf16.msra.mxu0 %v746
    %756 = vmatprep.subr.bf16.mxu0 0
    %757 = vmatpush1.bf16.msra.mxu0 0
    %758 = vmatprep.subr.bf16.mxu0 0
    %759 = vmatpush1.bf16.msra.mxu0 0
    %760 = vmatprep.subr.bf16.mxu0 0
    %761 = vmatpush1.bf16.msra.mxu0 0
    %762 = vmatprep.subr.bf16.mxu0 0
    %763 = vmatpush1.bf16.msra.mxu0 0
    %764 = vmatprep.subr.bf16.mxu0 0
    %765 = vmatpush1.bf16.msra.mxu0 0
    %766 = vmatprep.subr.bf16.mxu0 0
    %767 = vmatpush1.bf16.msra.mxu0 0
    %768 = vmatprep.subr.bf16.mxu0 0
    %769 = vmatpush1.bf16.msra.mxu0 0
    %770 = vmatprep.subr.bf16.mxu0 0
    %771 = vmatpush1.bf16.msra.mxu0 0
    %772 = vmatprep.subr.bf16.mxu0 0
    %773 = vmatpush1.bf16.msra.mxu0 0
    %774 = vmatprep.subr.bf16.mxu0 0
    %775 = vmatpush1.bf16.msra.mxu0 0
    %776 = vmatprep.subr.bf16.mxu0 0
    %777 = vmatpush1.bf16.msra.mxu0 0
    %778 = vmatprep.subr.bf16.mxu0 0
    %779 = vmatpush1.bf16.msra.mxu0 0
    %780 = vmatprep.subr.bf16.mxu0 0
    %781 = vmatpush1.bf16.msra.mxu0 0
    %782 = vmatprep.subr.bf16.mxu0 0
    %783 = vmatpush1.bf16.msra.mxu0 0
    %784 = vmatprep.mubr.bf16.mxu0 0
    %785 = vmatmul.mubr.bf16.gmra.mrb[0].mxu0 %v750
    %v786 = vpop.f32.mrb[0].mxu0
    %v787 = vadd.f32 %v729, %v786
    %v788 = vpop.f32.mrb[0].mxu0
    %v789 = vpop.f32.mrb[0].mxu0
    %v790 = vpop.f32.mrb[0].mxu0
    %791 = vdwg.mxu0
    %v792 = vld [vmem:[%s515] sm:$0x1]
    %v794 = vlaneseq
    %v795 = vshrl.u32 %v794, 7
    %v796 = vsub.s32 0, %v795
    %v797 = vrot.slane %v792, %v796
    %v799 = vadd.f32 %v787, %v797
    %v800 = vld [vmem:[%s524] sm:$0xff]
    %v801 = vxor.u32 %v799, 2147483648
    %v802 = vmul.f32 %v801, 1.442695
    %v803 = vpow.pop %v802
    %v804 = vadd.f32 %v803, 1.0
    %v805 = vrcp.pop %v804
    %v806 = vmul.f32 1.0, %v805
    %v807 = vtanh.pop %v799
    %809 = vrot.lane.b32.xlu0 %v800, 32
    %v810 = vpop.permute.xlu0 %809
    %v812 = vmul.f32 %v806, %v810
    %814 = vrot.lane.b32.xlu0 %v807, 64
    %v815 = vpop.permute.xlu0 %814
    %v817 = vmul.f32 %v806, %v815
    %819 = vrot.lane.b32.xlu0 %v817, 32
    %v820 = vpop.permute.xlu0 %819
    %v822 = vadd.f32 %v812, %v820
    %v823 = vtanh.pop %v822
    %825 = vrot.lane.b32.xlu0 %v823, 64
    %v826 = vpop.permute.xlu0 %825
    %v828 = vmul.f32 %v806, %v826
    %830 = vrot.lane.b32.xlu0 %v828, 32
    %v831 = vpop.permute.xlu0 %830
    %833 = vst.msk [vmem:[%s394] sm:$0xff] %vm200, %v831
    %835 = vrot.lane.b32.xlu0 %v822, 96
    %v836 = vpop.permute.xlu0 %835
    %838 = vst.msk [vmem:[%s524] sm:$0xff] %vm200, %v836
    %s839 = scalar_lea.vmem [#allocation5], 8
    %840 = vst.msk [vmem:[%s839] sm:$0xff] %vm200, %v831
    %s841 = scalar_lea.vmem [#allocation4], 16
    %v842 = vld [vmem:[%s841] sm:$0xff]
    %v843 = vld [vmem:[#allocation2] sm:$0xff]
    %v844 = vpack.c.bf16 %v843, %v843
    %v845 = vld [vmem:[#allocation14] sm:$0xf]
    %v846 = vld [vmem:[#allocation14 + $0x4] sm:$0xf]
    %v847 = vld [vmem:[#allocation14 + $0x8] sm:$0xf]
    %v848 = vld [vmem:[#allocation14 + $0xc] sm:$0xf]
    %v853 = vunpack.c.l.b16 %v845
    %v854 = vunpack.c.l.b16 %v846
    %v855 = vunpack.c.l.b16 %v847
    %v856 = vunpack.c.l.b16 %v848
    %v857 = vpack.c.b16 %v854, %v853
    %v858 = vpack.c.b16 %v856, %v855
    %v862 = vsel %vm200, %v844, 0
    %864 = vmatprep.subr.bf16.mxu0 0
    %865 = vmatpush1.bf16.msra.mxu0 %v857
    %866 = vmatprep.subr.bf16.mxu0 0
    %867 = vmatpush1.bf16.msra.mxu0 %v858
    %868 = vmatprep.subr.bf16.mxu0 0
    %869 = vmatpush1.bf16.msra.mxu0 0
    %870 = vmatprep.subr.bf16.mxu0 0
    %871 = vmatpush1.bf16.msra.mxu0 0
    %872 = vmatprep.subr.bf16.mxu0 0
    %873 = vmatpush1.bf16.msra.mxu0 0
    %874 = vmatprep.subr.bf16.mxu0 0
    %875 = vmatpush1.bf16.msra.mxu0 0
    %876 = vmatprep.subr.bf16.mxu0 0
    %877 = vmatpush1.bf16.msra.mxu0 0
    %878 = vmatprep.subr.bf16.mxu0 0
    %879 = vmatpush1.bf16.msra.mxu0 0
    %880 = vmatprep.subr.bf16.mxu0 0
    %881 = vmatpush1.bf16.msra.mxu0 0
    %882 = vmatprep.subr.bf16.mxu0 0
    %883 = vmatpush1.bf16.msra.mxu0 0
    %884 = vmatprep.subr.bf16.mxu0 0
    %885 = vmatpush1.bf16.msra.mxu0 0
    %886 = vmatprep.subr.bf16.mxu0 0
    %887 = vmatpush1.bf16.msra.mxu0 0
    %888 = vmatprep.subr.bf16.mxu0 0
    %889 = vmatpush1.bf16.msra.mxu0 0
    %890 = vmatprep.subr.bf16.mxu0 0
    %891 = vmatpush1.bf16.msra.mxu0 0
    %892 = vmatprep.subr.bf16.mxu0 0
    %893 = vmatpush1.bf16.msra.mxu0 0
    %894 = vmatprep.subr.bf16.mxu0 0
    %895 = vmatpush1.bf16.msra.mxu0 0
    %896 = vmatprep.mubr.bf16.mxu0 0
    %897 = vmatmul.mubr.bf16.gmra.mrb[0].mxu0 %v862
    %v898 = vpop.f32.mrb[0].mxu0
    %v899 = vadd.f32 0.0, %v898
    %v900 = vpop.f32.mrb[0].mxu0
    %v901 = vpop.f32.mrb[0].mxu0
    %v902 = vpop.f32.mrb[0].mxu0
    %903 = vdwg.mxu0
    %v904 = vadd.f32 %v842, %v899
    %v905 = vld [vmem:[#allocation3] sm:$0xff]
    %v906 = vxor.u32 %v904, 2147483648
    %v907 = vmul.f32 %v906, 1.442695
    %v908 = vpow.pop %v907
    %v909 = vadd.f32 %v908, 1.0
    %v910 = vrcp.pop %v909
    %v911 = vmul.f32 1.0, %v910
    %v912 = vtanh.pop %v904
    %914 = vrot.lane.b32.xlu0 %v905, 32
    %v915 = vpop.permute.xlu0 %914
    %v917 = vmul.f32 %v911, %v915
    %919 = vrot.lane.b32.xlu0 %v912, 64
    %v920 = vpop.permute.xlu0 %919
    %v922 = vmul.f32 %v911, %v920
    %924 = vrot.lane.b32.xlu0 %v922, 32
    %v925 = vpop.permute.xlu0 %924
    %v927 = vadd.f32 %v917, %v925
    %v928 = vtanh.pop %v927
    %930 = vrot.lane.b32.xlu0 %v928, 64
    %v931 = vpop.permute.xlu0 %930
    %v933 = vmul.f32 %v911, %v931
    %935 = vrot.lane.b32.xlu0 %v933, 32
    %v936 = vpop.permute.xlu0 %935
    %938 = vst.msk [vmem:[#allocation2] sm:$0xff] %vm200, %v936
    %940 = vrot.lane.b32.xlu0 %v927, 96
    %v941 = vpop.permute.xlu0 %940
    %943 = vst.msk [vmem:[#allocation3] sm:$0xff] %vm200, %v941
    %v944 = vpack.c.bf16 %v933, %v933
    %v945 = vld [vmem:[%s389] sm:$0xf]
    %v946 = vld [vmem:[%s389 + $0x4] sm:$0xf]
    %v947 = vld [vmem:[%s389 + $0x8] sm:$0xf]
    %v948 = vld [vmem:[%s389 + $0xc] sm:$0xf]
    %v949 = vld [vmem:[%s394] sm:$0xff]
    %v950 = vpack.c.bf16 %v949, %v949
    %v951 = vld [vmem:[%s397] sm:$0xf]
    %v952 = vld [vmem:[%s397 + $0x4] sm:$0xf]
    %v953 = vld [vmem:[%s397 + $0x8] sm:$0xf]
    %v954 = vld [vmem:[%s397 + $0xc] sm:$0xf]
    %v959 = vunpack.c.l.b16 %v951
    %v960 = vunpack.c.l.b16 %v952
    %v961 = vunpack.c.l.b16 %v953
    %v962 = vunpack.c.l.b16 %v954
    %v963 = vpack.c.b16 %v960, %v959
    %v964 = vpack.c.b16 %v962, %v961
    %v968 = vsel %vm200, %v950, 0
    %970 = vmatprep.subr.bf16.mxu0 0
    %971 = vmatpush1.bf16.msra.mxu0 %v963
    %972 = vmatprep.subr.bf16.mxu0 0
    %973 = vmatpush1.bf16.msra.mxu0 %v964
    %974 = vmatprep.subr.bf16.mxu0 0
    %975 = vmatpush1.bf16.msra.mxu0 0
    %976 = vmatprep.subr.bf16.mxu0 0
    %977 = vmatpush1.bf16.msra.mxu0 0
    %978 = vmatprep.subr.bf16.mxu0 0
    %979 = vmatpush1.bf16.msra.mxu0 0
    %980 = vmatprep.subr.bf16.mxu0 0
    %981 = vmatpush1.bf16.msra.mxu0 0
    %982 = vmatprep.subr.bf16.mxu0 0
    %983 = vmatpush1.bf16.msra.mxu0 0
    %984 = vmatprep.subr.bf16.mxu0 0
    %985 = vmatpush1.bf16.msra.mxu0 0
    %986 = vmatprep.subr.bf16.mxu0 0
    %987 = vmatpush1.bf16.msra.mxu0 0
    %988 = vmatprep.subr.bf16.mxu0 0
    %989 = vmatpush1.bf16.msra.mxu0 0
    %990 = vmatprep.subr.bf16.mxu0 0
    %991 = vmatpush1.bf16.msra.mxu0 0
    %992 = vmatprep.subr.bf16.mxu0 0
    %993 = vmatpush1.bf16.msra.mxu0 0
    %994 = vmatprep.subr.bf16.mxu0 0
    %995 = vmatpush1.bf16.msra.mxu0 0
    %996 = vmatprep.subr.bf16.mxu0 0
    %997 = vmatpush1.bf16.msra.mxu0 0
    %998 = vmatprep.subr.bf16.mxu0 0
    %999 = vmatpush1.bf16.msra.mxu0 0
    %1000 = vmatprep.subr.bf16.mxu0 0
    %1001 = vmatpush1.bf16.msra.mxu0 0
    %1002 = vmatprep.mubr.bf16.mxu0 0
    %1003 = vmatmul.mubr.bf16.gmra.mrb[0].mxu0 %v968
    %v1004 = vpop.f32.mrb[0].mxu0
    %v1005 = vadd.f32 0.0, %v1004
    %v1006 = vpop.f32.mrb[0].mxu0
    %v1007 = vpop.f32.mrb[0].mxu0
    %v1008 = vpop.f32.mrb[0].mxu0
    %1009 = vdwg.mxu0
    %1011 = vrot.lane.b32.xlu0 %v944, 32
    %v1012 = vpop.permute.xlu0 %1011
    %v1017 = vunpack.c.l.b16 %v945
    %v1018 = vunpack.c.l.b16 %v946
    %v1019 = vunpack.c.l.b16 %v947
    %v1020 = vunpack.c.l.b16 %v948
    %v1021 = vpack.c.b16 %v1018, %v1017
    %v1022 = vpack.c.b16 %v1020, %v1019
    %v1026 = vsel %vm200, %v1012, 0
    %1028 = vmatprep.subr.bf16.mxu0 0
    %1029 = vmatpush1.bf16.msra.mxu0 %v1021
    %1030 = vmatprep.subr.bf16.mxu0 0
    %1031 = vmatpush1.bf16.msra.mxu0 %v1022
    %1032 = vmatprep.subr.bf16.mxu0 0
    %1033 = vmatpush1.bf16.msra.mxu0 0
    %1034 = vmatprep.subr.bf16.mxu0 0
    %1035 = vmatpush1.bf16.msra.mxu0 0
    %1036 = vmatprep.subr.bf16.mxu0 0
    %1037 = vmatpush1.bf16.msra.mxu0 0
    %1038 = vmatprep.subr.bf16.mxu0 0
    %1039 = vmatpush1.bf16.msra.mxu0 0
    %1040 = vmatprep.subr.bf16.mxu0 0
    %1041 = vmatpush1.bf16.msra.mxu0 0
    %1042 = vmatprep.subr.bf16.mxu0 0
    %1043 = vmatpush1.bf16.msra.mxu0 0
    %1044 = vmatprep.subr.bf16.mxu0 0
    %1045 = vmatpush1.bf16.msra.mxu0 0
    %1046 = vmatprep.subr.bf16.mxu0 0
    %1047 = vmatpush1.bf16.msra.mxu0 0
    %1048 = vmatprep.subr.bf16.mxu0 0
    %1049 = vmatpush1.bf16.msra.mxu0 0
    %1050 = vmatprep.subr.bf16.mxu0 0
    %1051 = vmatpush1.bf16.msra.mxu0 0
    %1052 = vmatprep.subr.bf16.mxu0 0
    %1053 = vmatpush1.bf16.msra.mxu0 0
    %1054 = vmatprep.subr.bf16.mxu0 0
    %1055 = vmatpush1.bf16.msra.mxu0 0
    %1056 = vmatprep.subr.bf16.mxu0 0
    %1057 = vmatpush1.bf16.msra.mxu0 0
    %1058 = vmatprep.subr.bf16.mxu0 0
    %1059 = vmatpush1.bf16.msra.mxu0 0
    %1060 = vmatprep.mubr.bf16.mxu0 0
    %1061 = vmatmul.mubr.bf16.gmra.mrb[0].mxu0 %v1026
    %v1062 = vpop.f32.mrb[0].mxu0
    %v1063 = vadd.f32 %v1005, %v1062
    %v1064 = vpop.f32.mrb[0].mxu0
    %v1065 = vpop.f32.mrb[0].mxu0
    %v1066 = vpop.f32.mrb[0].mxu0
    %1067 = vdwg.mxu0
    %v1068 = vld [vmem:[%s515] sm:$0x1]
    %v1070 = vlaneseq
    %v1071 = vshrl.u32 %v1070, 7
    %v1072 = vsub.s32 0, %v1071
    %v1073 = vrot.slane %v1068, %v1072
    %v1075 = vadd.f32 %v1063, %v1073
    %v1076 = vld [vmem:[%s524] sm:$0xff]
    %v1077 = vxor.u32 %v1075, 2147483648
    %v1078 = vmul.f32 %v1077, 1.442695
    %v1079 = vpow.pop %v1078
    %v1080 = vadd.f32 %v1079, 1.0
    %v1081 = vrcp.pop %v1080
    %v1082 = vmul.f32 1.0, %v1081
    %v1083 = vtanh.pop %v1075
    %1085 = vrot.lane.b32.xlu0 %v1076, 32
    %v1086 = vpop.permute.xlu0 %1085
    %v1088 = vmul.f32 %v1082, %v1086
    %1090 = vrot.lane.b32.xlu0 %v1083, 64
    %v1091 = vpop.permute.xlu0 %1090
    %v1093 = vmul.f32 %v1082, %v1091
    %1095 = vrot.lane.b32.xlu0 %v1093, 32
    %v1096 = vpop.permute.xlu0 %1095
    %v1098 = vadd.f32 %v1088, %v1096
    %v1099 = vtanh.pop %v1098
    %1101 = vrot.lane.b32.xlu0 %v1099, 64
    %v1102 = vpop.permute.xlu0 %1101
    %v1104 = vmul.f32 %v1082, %v1102
    %1106 = vrot.lane.b32.xlu0 %v1104, 32
    %v1107 = vpop.permute.xlu0 %1106
    %1109 = vst.msk [vmem:[%s394] sm:$0xff] %vm200, %v1107
    %1111 = vrot.lane.b32.xlu0 %v1098, 96
    %v1112 = vpop.permute.xlu0 %1111
    %1114 = vst.msk [vmem:[%s524] sm:$0xff] %vm200, %v1112
    %s1115 = scalar_lea.vmem [#allocation5], 16
    %1116 = vst.msk [vmem:[%s1115] sm:$0xff] %vm200, %v1107
    %s1117 = scalar_lea.vmem [#allocation4], 24
    %v1118 = vld [vmem:[%s1117] sm:$0xff]
    %v1119 = vld [vmem:[#allocation2] sm:$0xff]
    %v1120 = vpack.c.bf16 %v1119, %v1119
    %v1121 = vld [vmem:[#allocation14] sm:$0xf]
    %v1122 = vld [vmem:[#allocation14 + $0x4] sm:$0xf]
    %v1123 = vld [vmem:[#allocation14 + $0x8] sm:$0xf]
    %v1124 = vld [vmem:[#allocation14 + $0xc] sm:$0xf]
    %v1129 = vunpack.c.l.b16 %v1121
    %v1130 = vunpack.c.l.b16 %v1122
    %v1131 = vunpack.c.l.b16 %v1123
    %v1132 = vunpack.c.l.b16 %v1124
    %v1133 = vpack.c.b16 %v1130, %v1129
    %v1134 = vpack.c.b16 %v1132, %v1131
    %v1138 = vsel %vm200, %v1120, 0
    %1140 = vmatprep.subr.bf16.mxu0 0
    %1141 = vmatpush1.bf16.msra.mxu0 %v1133
    %1142 = vmatprep.subr.bf16.mxu0 0
    %1143 = vmatpush1.bf16.msra.mxu0 %v1134
    %1144 = vmatprep.subr.bf16.mxu0 0
    %1145 = vmatpush1.bf16.msra.mxu0 0
    %1146 = vmatprep.subr.bf16.mxu0 0
    %1147 = vmatpush1.bf16.msra.mxu0 0
    %1148 = vmatprep.subr.bf16.mxu0 0
    %1149 = vmatpush1.bf16.msra.mxu0 0
    %1150 = vmatprep.subr.bf16.mxu0 0
    %1151 = vmatpush1.bf16.msra.mxu0 0
    %1152 = vmatprep.subr.bf16.mxu0 0
    %1153 = vmatpush1.bf16.msra.mxu0 0
    %1154 = vmatprep.subr.bf16.mxu0 0
    %1155 = vmatpush1.bf16.msra.mxu0 0
    %1156 = vmatprep.subr.bf16.mxu0 0
    %1157 = vmatpush1.bf16.msra.mxu0 0
    %1158 = vmatprep.subr.bf16.mxu0 0
    %1159 = vmatpush1.bf16.msra.mxu0 0
    %1160 = vmatprep.subr.bf16.mxu0 0
    %1161 = vmatpush1.bf16.msra.mxu0 0
    %1162 = vmatprep.subr.bf16.mxu0 0
    %1163 = vmatpush1.bf16.msra.mxu0 0
    %1164 = vmatprep.subr.bf16.mxu0 0
    %1165 = vmatpush1.bf16.msra.mxu0 0
    %1166 = vmatprep.subr.bf16.mxu0 0
    %1167 = vmatpush1.bf16.msra.mxu0 0
    %1168 = vmatprep.subr.bf16.mxu0 0
    %1169 = vmatpush1.bf16.msra.mxu0 0
    %1170 = vmatprep.subr.bf16.mxu0 0
    %1171 = vmatpush1.bf16.msra.mxu0 0
    %1172 = vmatprep.mubr.bf16.mxu0 0
    %1173 = vmatmul.mubr.bf16.gmra.mrb[0].mxu0 %v1138
    %v1174 = vpop.f32.mrb[0].mxu0
    %v1175 = vadd.f32 0.0, %v1174
    %v1176 = vpop.f32.mrb[0].mxu0
    %v1177 = vpop.f32.mrb[0].mxu0
    %v1178 = vpop.f32.mrb[0].mxu0
    %1179 = vdwg.mxu0
    %v1180 = vadd.f32 %v1118, %v1175
    %v1181 = vld [vmem:[#allocation3] sm:$0xff]
    %v1182 = vxor.u32 %v1180, 2147483648
    %v1183 = vmul.f32 %v1182, 1.442695
    %v1184 = vpow.pop %v1183
    %v1185 = vadd.f32 %v1184, 1.0
    %v1186 = vrcp.pop %v1185
    %v1187 = vmul.f32 1.0, %v1186
    %v1188 = vtanh.pop %v1180
    %1190 = vrot.lane.b32.xlu0 %v1181, 32
    %v1191 = vpop.permute.xlu0 %1190
    %v1193 = vmul.f32 %v1187, %v1191
    %1195 = vrot.lane.b32.xlu0 %v1188, 64
    %v1196 = vpop.permute.xlu0 %1195
    %v1198 = vmul.f32 %v1187, %v1196
    %1200 = vrot.lane.b32.xlu0 %v1198, 32
    %v1201 = vpop.permute.xlu0 %1200
    %v1203 = vadd.f32 %v1193, %v1201
    %v1204 = vtanh.pop %v1203
    %1206 = vrot.lane.b32.xlu0 %v1204, 64
    %v1207 = vpop.permute.xlu0 %1206
    %v1209 = vmul.f32 %v1187, %v1207
    %1211 = vrot.lane.b32.xlu0 %v1209, 32
    %v1212 = vpop.permute.xlu0 %1211
    %1214 = vst.msk [vmem:[#allocation2] sm:$0xff] %vm200, %v1212
    %1216 = vrot.lane.b32.xlu0 %v1203, 96
    %v1217 = vpop.permute.xlu0 %1216
    %1219 = vst.msk [vmem:[#allocation3] sm:$0xff] %vm200, %v1217
    %v1220 = vpack.c.bf16 %v1209, %v1209
    %v1221 = vld [vmem:[%s389] sm:$0xf]
    %v1222 = vld [vmem:[%s389 + $0x4] sm:$0xf]
    %v1223 = vld [vmem:[%s389 + $0x8] sm:$0xf]
    %v1224 = vld [vmem:[%s389 + $0xc] sm:$0xf]
    %v1225 = vld [vmem:[%s394] sm:$0xff]
    %v1226 = vpack.c.bf16 %v1225, %v1225
    %v1227 = vld [vmem:[%s397] sm:$0xf]
    %v1228 = vld [vmem:[%s397 + $0x4] sm:$0xf]
    %v1229 = vld [vmem:[%s397 + $0x8] sm:$0xf]
    %v1230 = vld [vmem:[%s397 + $0xc] sm:$0xf]
    %v1235 = vunpack.c.l.b16 %v1227
    %v1236 = vunpack.c.l.b16 %v1228
    %v1237 = vunpack.c.l.b16 %v1229
    %v1238 = vunpack.c.l.b16 %v1230
    %v1239 = vpack.c.b16 %v1236, %v1235
    %v1240 = vpack.c.b16 %v1238, %v1237
    %v1244 = vsel %vm200, %v1226, 0
    %1246 = vmatprep.subr.bf16.mxu0 0
    %1247 = vmatpush1.bf16.msra.mxu0 %v1239
    %1248 = vmatprep.subr.bf16.mxu0 0
    %1249 = vmatpush1.bf16.msra.mxu0 %v1240
    %1250 = vmatprep.subr.bf16.mxu0 0
    %1251 = vmatpush1.bf16.msra.mxu0 0
    %1252 = vmatprep.subr.bf16.mxu0 0
    %1253 = vmatpush1.bf16.msra.mxu0 0
    %1254 = vmatprep.subr.bf16.mxu0 0
    %1255 = vmatpush1.bf16.msra.mxu0 0
    %1256 = vmatprep.subr.bf16.mxu0 0
    %1257 = vmatpush1.bf16.msra.mxu0 0
    %1258 = vmatprep.subr.bf16.mxu0 0
    %1259 = vmatpush1.bf16.msra.mxu0 0
    %1260 = vmatprep.subr.bf16.mxu0 0
    %1261 = vmatpush1.bf16.msra.mxu0 0
    %1262 = vmatprep.subr.bf16.mxu0 0
    %1263 = vmatpush1.bf16.msra.mxu0 0
    %1264 = vmatprep.subr.bf16.mxu0 0
    %1265 = vmatpush1.bf16.msra.mxu0 0
    %1266 = vmatprep.subr.bf16.mxu0 0
    %1267 = vmatpush1.bf16.msra.mxu0 0
    %1268 = vmatprep.subr.bf16.mxu0 0
    %1269 = vmatpush1.bf16.msra.mxu0 0
    %1270 = vmatprep.subr.bf16.mxu0 0
    %1271 = vmatpush1.bf16.msra.mxu0 0
    %1272 = vmatprep.subr.bf16.mxu0 0
    %1273 = vmatpush1.bf16.msra.mxu0 0
    %1274 = vmatprep.subr.bf16.mxu0 0
    %1275 = vmatpush1.bf16.msra.mxu0 0
    %1276 = vmatprep.subr.bf16.mxu0 0
    %1277 = vmatpush1.bf16.msra.mxu0 0
    %1278 = vmatprep.mubr.bf16.mxu0 0
    %1279 = vmatmul.mubr.bf16.gmra.mrb[0].mxu0 %v1244
    %v1280 = vpop.f32.mrb[0].mxu0
    %v1281 = vadd.f32 0.0, %v1280
    %v1282 = vpop.f32.mrb[0].mxu0
    %v1283 = vpop.f32.mrb[0].mxu0
    %v1284 = vpop.f32.mrb[0].mxu0
    %1285 = vdwg.mxu0
    %1287 = vrot.lane.b32.xlu0 %v1220, 32
    %v1288 = vpop.permute.xlu0 %1287
    %v1293 = vunpack.c.l.b16 %v1221
    %v1294 = vunpack.c.l.b16 %v1222
    %v1295 = vunpack.c.l.b16 %v1223
    %v1296 = vunpack.c.l.b16 %v1224
    %v1297 = vpack.c.b16 %v1294, %v1293
    %v1298 = vpack.c.b16 %v1296, %v1295
    %v1302 = vsel %vm200, %v1288, 0
    %1304 = vmatprep.subr.bf16.mxu0 0
    %1305 = vmatpush1.bf16.msra.mxu0 %v1297
    %1306 = vmatprep.subr.bf16.mxu0 0
    %1307 = vmatpush1.bf16.msra.mxu0 %v1298
    %1308 = vmatprep.subr.bf16.mxu0 0
    %1309 = vmatpush1.bf16.msra.mxu0 0
    %1310 = vmatprep.subr.bf16.mxu0 0
    %1311 = vmatpush1.bf16.msra.mxu0 0
    %1312 = vmatprep.subr.bf16.mxu0 0
    %1313 = vmatpush1.bf16.msra.mxu0 0
    %1314 = vmatprep.subr.bf16.mxu0 0
    %1315 = vmatpush1.bf16.msra.mxu0 0
    %1316 = vmatprep.subr.bf16.mxu0 0
    %1317 = vmatpush1.bf16.msra.mxu0 0
    %1318 = vmatprep.subr.bf16.mxu0 0
    %1319 = vmatpush1.bf16.msra.mxu0 0
    %1320 = vmatprep.subr.bf16.mxu0 0
    %1321 = vmatpush1.bf16.msra.mxu0 0
    %1322 = vmatprep.subr.bf16.mxu0 0
    %1323 = vmatpush1.bf16.msra.mxu0 0
    %1324 = vmatprep.subr.bf16.mxu0 0
    %1325 = vmatpush1.bf16.msra.mxu0 0
    %1326 = vmatprep.subr.bf16.mxu0 0
    %1327 = vmatpush1.bf16.msra.mxu0 0
    %1328 = vmatprep.subr.bf16.mxu0 0
    %1329 = vmatpush1.bf16.msra.mxu0 0
    %1330 = vmatprep.subr.bf16.mxu0 0
    %1331 = vmatpush1.bf16.msra.mxu0 0
    %1332 = vmatprep.subr.bf16.mxu0 0
    %1333 = vmatpush1.bf16.msra.mxu0 0
    %1334 = vmatprep.subr.bf16.mxu0 0
    %1335 = vmatpush1.bf16.msra.mxu0 0
    %1336 = vmatprep.mubr.bf16.mxu0 0
    %1337 = vmatmul.mubr.bf16.gmra.mrb[0].mxu0 %v1302
    %v1338 = vpop.f32.mrb[0].mxu0
    %v1339 = vadd.f32 %v1281, %v1338
    %v1340 = vpop.f32.mrb[0].mxu0
    %v1341 = vpop.f32.mrb[0].mxu0
    %v1342 = vpop.f32.mrb[0].mxu0
    %1343 = vdwg.mxu0
    %v1344 = vld [vmem:[%s515] sm:$0x1]
    %v1346 = vlaneseq
    %v1347 = vshrl.u32 %v1346, 7
    %v1348 = vsub.s32 0, %v1347
    %v1349 = vrot.slane %v1344, %v1348
    %v1351 = vadd.f32 %v1339, %v1349
    %v1352 = vld [vmem:[%s524] sm:$0xff]
    %v1353 = vxor.u32 %v1351, 2147483648
    %v1354 = vmul.f32 %v1353, 1.442695
    %v1355 = vpow.pop %v1354
    %v1356 = vadd.f32 %v1355, 1.0
    %v1357 = vrcp.pop %v1356
    %v1358 = vmul.f32 1.0, %v1357
    %v1359 = vtanh.pop %v1351
    %1361 = vrot.lane.b32.xlu0 %v1352, 32
    %v1362 = vpop.permute.xlu0 %1361
    %v1364 = vmul.f32 %v1358, %v1362
    %1366 = vrot.lane.b32.xlu0 %v1359, 64
    %v1367 = vpop.permute.xlu0 %1366
    %v1369 = vmul.f32 %v1358, %v1367
    %1371 = vrot.lane.b32.xlu0 %v1369, 32
    %v1372 = vpop.permute.xlu0 %1371
    %v1374 = vadd.f32 %v1364, %v1372
    %v1375 = vtanh.pop %v1374
    %1377 = vrot.lane.b32.xlu0 %v1375, 64
    %v1378 = vpop.permute.xlu0 %1377
    %v1380 = vmul.f32 %v1358, %v1378
    %1382 = vrot.lane.b32.xlu0 %v1380, 32
    %v1383 = vpop.permute.xlu0 %1382
    %1385 = vst.msk [vmem:[%s394] sm:$0xff] %vm200, %v1383
    %1387 = vrot.lane.b32.xlu0 %v1374, 96
    %v1388 = vpop.permute.xlu0 %1387
    %1390 = vst.msk [vmem:[%s524] sm:$0xff] %vm200, %v1388
    %s1391 = scalar_lea.vmem [#allocation5], 24
    %1392 = vst.msk [vmem:[%s1391] sm:$0xff] %vm200, %v1383
    %s1393 = scalar_lea.vmem [#allocation4], 32
    %v1394 = vld [vmem:[%s1393] sm:$0xff]
    %v1395 = vld [vmem:[#allocation2] sm:$0xff]
    %v1396 = vpack.c.bf16 %v1395, %v1395
    %v1397 = vld [vmem:[#allocation14] sm:$0xf]
    %v1398 = vld [vmem:[#allocation14 + $0x4] sm:$0xf]
    %v1399 = vld [vmem:[#allocation14 + $0x8] sm:$0xf]
    %v1400 = vld [vmem:[#allocation14 + $0xc] sm:$0xf]
    %v1405 = vunpack.c.l.b16 %v1397
    %v1406 = vunpack.c.l.b16 %v1398
    %v1407 = vunpack.c.l.b16 %v1399
    %v1408 = vunpack.c.l.b16 %v1400
    %v1409 = vpack.c.b16 %v1406, %v1405
    %v1410 = vpack.c.b16 %v1408, %v1407
    %v1414 = vsel %vm200, %v1396, 0
    %1416 = vmatprep.subr.bf16.mxu0 0
    %1417 = vmatpush1.bf16.msra.mxu0 %v1409
    %1418 = vmatprep.subr.bf16.mxu0 0
    %1419 = vmatpush1.bf16.msra.mxu0 %v1410
    %1420 = vmatprep.subr.bf16.mxu0 0
    %1421 = vmatpush1.bf16.msra.mxu0 0
    %1422 = vmatprep.subr.bf16.mxu0 0
    %1423 = vmatpush1.bf16.msra.mxu0 0
    %1424 = vmatprep.subr.bf16.mxu0 0
    %1425 = vmatpush1.bf16.msra.mxu0 0
    %1426 = vmatprep.subr.bf16.mxu0 0
    %1427 = vmatpush1.bf16.msra.mxu0 0
    %1428 = vmatprep.subr.bf16.mxu0 0
    %1429 = vmatpush1.bf16.msra.mxu0 0
    %1430 = vmatprep.subr.bf16.mxu0 0
    %1431 = vmatpush1.bf16.msra.mxu0 0
    %1432 = vmatprep.subr.bf16.mxu0 0
    %1433 = vmatpush1.bf16.msra.mxu0 0
    %1434 = vmatprep.subr.bf16.mxu0 0
    %1435 = vmatpush1.bf16.msra.mxu0 0
    %1436 = vmatprep.subr.bf16.mxu0 0
    %1437 = vmatpush1.bf16.msra.mxu0 0
    %1438 = vmatprep.subr.bf16.mxu0 0
    %1439 = vmatpush1.bf16.msra.mxu0 0
    %1440 = vmatprep.subr.bf16.mxu0 0
    %1441 = vmatpush1.bf16.msra.mxu0 0
    %1442 = vmatprep.subr.bf16.mxu0 0
    %1443 = vmatpush1.bf16.msra.mxu0 0
    %1444 = vmatprep.subr.bf16.mxu0 0
    %1445 = vmatpush1.bf16.msra.mxu0 0
    %1446 = vmatprep.subr.bf16.mxu0 0
    %1447 = vmatpush1.bf16.msra.mxu0 0
    %1448 = vmatprep.mubr.bf16.mxu0 0
    %1449 = vmatmul.mubr.bf16.gmra.mrb[0].mxu0 %v1414
    %v1450 = vpop.f32.mrb[0].mxu0
    %v1451 = vadd.f32 0.0, %v1450
    %v1452 = vpop.f32.mrb[0].mxu0
    %v1453 = vpop.f32.mrb[0].mxu0
    %v1454 = vpop.f32.mrb[0].mxu0
    %1455 = vdwg.mxu0
    %v1456 = vadd.f32 %v1394, %v1451
    %v1457 = vld [vmem:[#allocation3] sm:$0xff]
    %v1458 = vxor.u32 %v1456, 2147483648
    %v1459 = vmul.f32 %v1458, 1.442695
    %v1460 = vpow.pop %v1459
    %v1461 = vadd.f32 %v1460, 1.0
    %v1462 = vrcp.pop %v1461
    %v1463 = vmul.f32 1.0, %v1462
    %v1464 = vtanh.pop %v1456
    %1466 = vrot.lane.b32.xlu0 %v1457, 32
    %v1467 = vpop.permute.xlu0 %1466
    %v1469 = vmul.f32 %v1463, %v1467
    %1471 = vrot.lane.b32.xlu0 %v1464, 64
    %v1472 = vpop.permute.xlu0 %1471
    %v1474 = vmul.f32 %v1463, %v1472
    %1476 = vrot.lane.b32.xlu0 %v1474, 32
    %v1477 = vpop.permute.xlu0 %1476
    %v1479 = vadd.f32 %v1469, %v1477
    %v1480 = vtanh.pop %v1479
    %1482 = vrot.lane.b32.xlu0 %v1480, 64
    %v1483 = vpop.permute.xlu0 %1482
    %v1485 = vmul.f32 %v1463, %v1483
    %1487 = vrot.lane.b32.xlu0 %v1485, 32
    %v1488 = vpop.permute.xlu0 %1487
    %1490 = vst.msk [vmem:[#allocation2] sm:$0xff] %vm200, %v1488
    %1492 = vrot.lane.b32.xlu0 %v1479, 96
    %v1493 = vpop.permute.xlu0 %1492
    %1495 = vst.msk [vmem:[#allocation3] sm:$0xff] %vm200, %v1493
    %v1496 = vpack.c.bf16 %v1485, %v1485
    %v1497 = vld [vmem:[%s389] sm:$0xf]
    %v1498 = vld [vmem:[%s389 + $0x4] sm:$0xf]
    %v1499 = vld [vmem:[%s389 + $0x8] sm:$0xf]
    %v1500 = vld [vmem:[%s389 + $0xc] sm:$0xf]
    %v1501 = vld [vmem:[%s394] sm:$0xff]
    %v1502 = vpack.c.bf16 %v1501, %v1501
    %v1503 = vld [vmem:[%s397] sm:$0xf]
    %v1504 = vld [vmem:[%s397 + $0x4] sm:$0xf]
    %v1505 = vld [vmem:[%s397 + $0x8] sm:$0xf]
    %v1506 = vld [vmem:[%s397 + $0xc] sm:$0xf]
    %v1511 = vunpack.c.l.b16 %v1503
    %v1512 = vunpack.c.l.b16 %v1504
    %v1513 = vunpack.c.l.b16 %v1505
    %v1514 = vunpack.c.l.b16 %v1506
    %v1515 = vpack.c.b16 %v1512, %v1511
    %v1516 = vpack.c.b16 %v1514, %v1513
    %v1520 = vsel %vm200, %v1502, 0
    %1522 = vmatprep.subr.bf16.mxu0 0
    %1523 = vmatpush1.bf16.msra.mxu0 %v1515
    %1524 = vmatprep.subr.bf16.mxu0 0
    %1525 = vmatpush1.bf16.msra.mxu0 %v1516
    %1526 = vmatprep.subr.bf16.mxu0 0
    %1527 = vmatpush1.bf16.msra.mxu0 0
    %1528 = vmatprep.subr.bf16.mxu0 0
    %1529 = vmatpush1.bf16.msra.mxu0 0
    %1530 = vmatprep.subr.bf16.mxu0 0
    %1531 = vmatpush1.bf16.msra.mxu0 0
    %1532 = vmatprep.subr.bf16.mxu0 0
    %1533 = vmatpush1.bf16.msra.mxu0 0
    %1534 = vmatprep.subr.bf16.mxu0 0
    %1535 = vmatpush1.bf16.msra.mxu0 0
    %1536 = vmatprep.subr.bf16.mxu0 0
    %1537 = vmatpush1.bf16.msra.mxu0 0
    %1538 = vmatprep.subr.bf16.mxu0 0
    %1539 = vmatpush1.bf16.msra.mxu0 0
    %1540 = vmatprep.subr.bf16.mxu0 0
    %1541 = vmatpush1.bf16.msra.mxu0 0
    %1542 = vmatprep.subr.bf16.mxu0 0
    %1543 = vmatpush1.bf16.msra.mxu0 0
    %1544 = vmatprep.subr.bf16.mxu0 0
    %1545 = vmatpush1.bf16.msra.mxu0 0
    %1546 = vmatprep.subr.bf16.mxu0 0
    %1547 = vmatpush1.bf16.msra.mxu0 0
    %1548 = vmatprep.subr.bf16.mxu0 0
    %1549 = vmatpush1.bf16.msra.mxu0 0
    %1550 = vmatprep.subr.bf16.mxu0 0
    %1551 = vmatpush1.bf16.msra.mxu0 0
    %1552 = vmatprep.subr.bf16.mxu0 0
    %1553 = vmatpush1.bf16.msra.mxu0 0
    %1554 = vmatprep.mubr.bf16.mxu0 0
    %1555 = vmatmul.mubr.bf16.gmra.mrb[0].mxu0 %v1520
    %v1556 = vpop.f32.mrb[0].mxu0
    %v1557 = vadd.f32 0.0, %v1556
    %v1558 = vpop.f32.mrb[0].mxu0
    %v1559 = vpop.f32.mrb[0].mxu0
    %v1560 = vpop.f32.mrb[0].mxu0
    %1561 = vdwg.mxu0
    %1563 = vrot.lane.b32.xlu0 %v1496, 32
    %v1564 = vpop.permute.xlu0 %1563
    %v1569 = vunpack.c.l.b16 %v1497
    %v1570 = vunpack.c.l.b16 %v1498
    %v1571 = vunpack.c.l.b16 %v1499
    %v1572 = vunpack.c.l.b16 %v1500
    %v1573 = vpack.c.b16 %v1570, %v1569
    %v1574 = vpack.c.b16 %v1572, %v1571
    %v1578 = vsel %vm200, %v1564, 0
    %1580 = vmatprep.subr.bf16.mxu0 0
    %1581 = vmatpush1.bf16.msra.mxu0 %v1573
    %1582 = vmatprep.subr.bf16.mxu0 0
    %1583 = vmatpush1.bf16.msra.mxu0 %v1574
    %1584 = vmatprep.subr.bf16.mxu0 0
    %1585 = vmatpush1.bf16.msra.mxu0 0
    %1586 = vmatprep.subr.bf16.mxu0 0
    %1587 = vmatpush1.bf16.msra.mxu0 0
    %1588 = vmatprep.subr.bf16.mxu0 0
    %1589 = vmatpush1.bf16.msra.mxu0 0
    %1590 = vmatprep.subr.bf16.mxu0 0
    %1591 = vmatpush1.bf16.msra.mxu0 0
    %1592 = vmatprep.subr.bf16.mxu0 0
    %1593 = vmatpush1.bf16.msra.mxu0 0
    %1594 = vmatprep.subr.bf16.mxu0 0
    %1595 = vmatpush1.bf16.msra.mxu0 0
    %1596 = vmatprep.subr.bf16.mxu0 0
    %1597 = vmatpush1.bf16.msra.mxu0 0
    %1598 = vmatprep.subr.bf16.mxu0 0
    %1599 = vmatpush1.bf16.msra.mxu0 0
    %1600 = vmatprep.subr.bf16.mxu0 0
    %1601 = vmatpush1.bf16.msra.mxu0 0
    %1602 = vmatprep.subr.bf16.mxu0 0
    %1603 = vmatpush1.bf16.msra.mxu0 0
    %1604 = vmatprep.subr.bf16.mxu0 0
    %1605 = vmatpush1.bf16.msra.mxu0 0
    %1606 = vmatprep.subr.bf16.mxu0 0
    %1607 = vmatpush1.bf16.msra.mxu0 0
    %1608 = vmatprep.subr.bf16.mxu0 0
    %1609 = vmatpush1.bf16.msra.mxu0 0
    %1610 = vmatprep.subr.bf16.mxu0 0
    %1611 = vmatpush1.bf16.msra.mxu0 0
    %1612 = vmatprep.mubr.bf16.mxu0 0
    %1613 = vmatmul.mubr.bf16.gmra.mrb[0].mxu0 %v1578
    %v1614 = vpop.f32.mrb[0].mxu0
    %v1615 = vadd.f32 %v1557, %v1614
    %v1616 = vpop.f32.mrb[0].mxu0
    %v1617 = vpop.f32.mrb[0].mxu0
    %v1618 = vpop.f32.mrb[0].mxu0
    %1619 = vdwg.mxu0
    %v1620 = vld [vmem:[%s515] sm:$0x1]
    %v1622 = vlaneseq
    %v1623 = vshrl.u32 %v1622, 7
    %v1624 = vsub.s32 0, %v1623
    %v1625 = vrot.slane %v1620, %v1624
    %v1627 = vadd.f32 %v1615, %v1625
    %v1628 = vld [vmem:[%s524] sm:$0xff]
    %v1629 = vxor.u32 %v1627, 2147483648
    %v1630 = vmul.f32 %v1629, 1.442695
    %v1631 = vpow.pop %v1630
    %v1632 = vadd.f32 %v1631, 1.0
    %v1633 = vrcp.pop %v1632
    %v1634 = vmul.f32 1.0, %v1633
    %v1635 = vtanh.pop %v1627
    %1637 = vrot.lane.b32.xlu0 %v1628, 32
    %v1638 = vpop.permute.xlu0 %1637
    %v1640 = vmul.f32 %v1634, %v1638
    %1642 = vrot.lane.b32.xlu0 %v1635, 64
    %v1643 = vpop.permute.xlu0 %1642
    %v1645 = vmul.f32 %v1634, %v1643
    %1647 = vrot.lane.b32.xlu0 %v1645, 32
    %v1648 = vpop.permute.xlu0 %1647
    %v1650 = vadd.f32 %v1640, %v1648
    %v1651 = vtanh.pop %v1650
    %1653 = vrot.lane.b32.xlu0 %v1651, 64
    %v1654 = vpop.permute.xlu0 %1653
    %v1656 = vmul.f32 %v1634, %v1654
    %1658 = vrot.lane.b32.xlu0 %v1656, 32
    %v1659 = vpop.permute.xlu0 %1658
    %1661 = vst.msk [vmem:[%s394] sm:$0xff] %vm200, %v1659
    %1663 = vrot.lane.b32.xlu0 %v1650, 96
    %v1664 = vpop.permute.xlu0 %1663
    %1666 = vst.msk [vmem:[%s524] sm:$0xff] %vm200, %v1664
    %s1667 = scalar_lea.vmem [#allocation5], 32
    %1668 = vst.msk [vmem:[%s1667] sm:$0xff] %vm200, %v1659
    %s1669 = scalar_lea.vmem [#allocation4], 40
    %v1670 = vld [vmem:[%s1669] sm:$0xff]
    %v1671 = vld [vmem:[#allocation2] sm:$0xff]
    %v1672 = vpack.c.bf16 %v1671, %v1671
    %v1673 = vld [vmem:[#allocation14] sm:$0xf]
    %v1674 = vld [vmem:[#allocation14 + $0x4] sm:$0xf]
    %v1675 = vld [vmem:[#allocation14 + $0x8] sm:$0xf]
    %v1676 = vld [vmem:[#allocation14 + $0xc] sm:$0xf]
    %v1681 = vunpack.c.l.b16 %v1673
    %v1682 = vunpack.c.l.b16 %v1674
    %v1683 = vunpack.c.l.b16 %v1675
    %v1684 = vunpack.c.l.b16 %v1676
    %v1685 = vpack.c.b16 %v1682, %v1681
    %v1686 = vpack.c.b16 %v1684, %v1683
    %v1690 = vsel %vm200, %v1672, 0
    %1692 = vmatprep.subr.bf16.mxu0 0
    %1693 = vmatpush1.bf16.msra.mxu0 %v1685
    %1694 = vmatprep.subr.bf16.mxu0 0
    %1695 = vmatpush1.bf16.msra.mxu0 %v1686
    %1696 = vmatprep.subr.bf16.mxu0 0
    %1697 = vmatpush1.bf16.msra.mxu0 0
    %1698 = vmatprep.subr.bf16.mxu0 0
    %1699 = vmatpush1.bf16.msra.mxu0 0
    %1700 = vmatprep.subr.bf16.mxu0 0
    %1701 = vmatpush1.bf16.msra.mxu0 0
    %1702 = vmatprep.subr.bf16.mxu0 0
    %1703 = vmatpush1.bf16.msra.mxu0 0
    %1704 = vmatprep.subr.bf16.mxu0 0
    %1705 = vmatpush1.bf16.msra.mxu0 0
    %1706 = vmatprep.subr.bf16.mxu0 0
    %1707 = vmatpush1.bf16.msra.mxu0 0
    %1708 = vmatprep.subr.bf16.mxu0 0
    %1709 = vmatpush1.bf16.msra.mxu0 0
    %1710 = vmatprep.subr.bf16.mxu0 0
    %1711 = vmatpush1.bf16.msra.mxu0 0
    %1712 = vmatprep.subr.bf16.mxu0 0
    %1713 = vmatpush1.bf16.msra.mxu0 0
    %1714 = vmatprep.subr.bf16.mxu0 0
    %1715 = vmatpush1.bf16.msra.mxu0 0
    %1716 = vmatprep.subr.bf16.mxu0 0
    %1717 = vmatpush1.bf16.msra.mxu0 0
    %1718 = vmatprep.subr.bf16.mxu0 0
    %1719 = vmatpush1.bf16.msra.mxu0 0
    %1720 = vmatprep.subr.bf16.mxu0 0
    %1721 = vmatpush1.bf16.msra.mxu0 0
    %1722 = vmatprep.subr.bf16.mxu0 0
    %1723 = vmatpush1.bf16.msra.mxu0 0
    %1724 = vmatprep.mubr.bf16.mxu0 0
    %1725 = vmatmul.mubr.bf16.gmra.mrb[0].mxu0 %v1690
    %v1726 = vpop.f32.mrb[0].mxu0
    %v1727 = vadd.f32 0.0, %v1726
    %v1728 = vpop.f32.mrb[0].mxu0
    %v1729 = vpop.f32.mrb[0].mxu0
    %v1730 = vpop.f32.mrb[0].mxu0
    %1731 = vdwg.mxu0
    %v1732 = vadd.f32 %v1670, %v1727
    %v1733 = vld [vmem:[#allocation3] sm:$0xff]
    %v1734 = vxor.u32 %v1732, 2147483648
    %v1735 = vmul.f32 %v1734, 1.442695
    %v1736 = vpow.pop %v1735
    %v1737 = vadd.f32 %v1736, 1.0
    %v1738 = vrcp.pop %v1737
    %v1739 = vmul.f32 1.0, %v1738
    %v1740 = vtanh.pop %v1732
    %1742 = vrot.lane.b32.xlu0 %v1733, 32
    %v1743 = vpop.permute.xlu0 %1742
    %v1745 = vmul.f32 %v1739, %v1743
    %1747 = vrot.lane.b32.xlu0 %v1740, 64
    %v1748 = vpop.permute.xlu0 %1747
    %v1750 = vmul.f32 %v1739, %v1748
    %1752 = vrot.lane.b32.xlu0 %v1750, 32
    %v1753 = vpop.permute.xlu0 %1752
    %v1755 = vadd.f32 %v1745, %v1753
    %v1756 = vtanh.pop %v1755
    %1758 = vrot.lane.b32.xlu0 %v1756, 64
    %v1759 = vpop.permute.xlu0 %1758
    %v1761 = vmul.f32 %v1739, %v1759
    %1763 = vrot.lane.b32.xlu0 %v1761, 32
    %v1764 = vpop.permute.xlu0 %1763
    %1766 = vst.msk [vmem:[#allocation2] sm:$0xff] %vm200, %v1764
    %1768 = vrot.lane.b32.xlu0 %v1755, 96
    %v1769 = vpop.permute.xlu0 %1768
    %1771 = vst.msk [vmem:[#allocation3] sm:$0xff] %vm200, %v1769
    %v1772 = vpack.c.bf16 %v1761, %v1761
    %v1773 = vld [vmem:[%s389] sm:$0xf]
    %v1774 = vld [vmem:[%s389 + $0x4] sm:$0xf]
    %v1775 = vld [vmem:[%s389 + $0x8] sm:$0xf]
    %v1776 = vld [vmem:[%s389 + $0xc] sm:$0xf]
    %v1777 = vld [vmem:[%s394] sm:$0xff]
    %v1778 = vpack.c.bf16 %v1777, %v1777
    %v1779 = vld [vmem:[%s397] sm:$0xf]
    %v1780 = vld [vmem:[%s397 + $0x4] sm:$0xf]
    %v1781 = vld [vmem:[%s397 + $0x8] sm:$0xf]
    %v1782 = vld [vmem:[%s397 + $0xc] sm:$0xf]
    %v1787 = vunpack.c.l.b16 %v1779
    %v1788 = vunpack.c.l.b16 %v1780
    %v1789 = vunpack.c.l.b16 %v1781
    %v1790 = vunpack.c.l.b16 %v1782
    %v1791 = vpack.c.b16 %v1788, %v1787
    %v1792 = vpack.c.b16 %v1790, %v1789
    %v1796 = vsel %vm200, %v1778, 0
    %1798 = vmatprep.subr.bf16.mxu0 0
    %1799 = vmatpush1.bf16.msra.mxu0 %v1791
    %1800 = vmatprep.subr.bf16.mxu0 0
    %1801 = vmatpush1.bf16.msra.mxu0 %v1792
    %1802 = vmatprep.subr.bf16.mxu0 0
    %1803 = vmatpush1.bf16.msra.mxu0 0
    %1804 = vmatprep.subr.bf16.mxu0 0
    %1805 = vmatpush1.bf16.msra.mxu0 0
    %1806 = vmatprep.subr.bf16.mxu0 0
    %1807 = vmatpush1.bf16.msra.mxu0 0
    %1808 = vmatprep.subr.bf16.mxu0 0
    %1809 = vmatpush1.bf16.msra.mxu0 0
    %1810 = vmatprep.subr.bf16.mxu0 0
    %1811 = vmatpush1.bf16.msra.mxu0 0
    %1812 = vmatprep.subr.bf16.mxu0 0
    %1813 = vmatpush1.bf16.msra.mxu0 0
    %1814 = vmatprep.subr.bf16.mxu0 0
    %1815 = vmatpush1.bf16.msra.mxu0 0
    %1816 = vmatprep.subr.bf16.mxu0 0
    %1817 = vmatpush1.bf16.msra.mxu0 0
    %1818 = vmatprep.subr.bf16.mxu0 0
    %1819 = vmatpush1.bf16.msra.mxu0 0
    %1820 = vmatprep.subr.bf16.mxu0 0
    %1821 = vmatpush1.bf16.msra.mxu0 0
    %1822 = vmatprep.subr.bf16.mxu0 0
    %1823 = vmatpush1.bf16.msra.mxu0 0
    %1824 = vmatprep.subr.bf16.mxu0 0
    %1825 = vmatpush1.bf16.msra.mxu0 0
    %1826 = vmatprep.subr.bf16.mxu0 0
    %1827 = vmatpush1.bf16.msra.mxu0 0
    %1828 = vmatprep.subr.bf16.mxu0 0
    %1829 = vmatpush1.bf16.msra.mxu0 0
    %1830 = vmatprep.mubr.bf16.mxu0 0
    %1831 = vmatmul.mubr.bf16.gmra.mrb[0].mxu0 %v1796
    %v1832 = vpop.f32.mrb[0].mxu0
    %v1833 = vadd.f32 0.0, %v1832
    %v1834 = vpop.f32.mrb[0].mxu0
    %v1835 = vpop.f32.mrb[0].mxu0
    %v1836 = vpop.f32.mrb[0].mxu0
    %1837 = vdwg.mxu0
    %1839 = vrot.lane.b32.xlu0 %v1772, 32
    %v1840 = vpop.permute.xlu0 %1839
    %v1845 = vunpack.c.l.b16 %v1773
    %v1846 = vunpack.c.l.b16 %v1774
    %v1847 = vunpack.c.l.b16 %v1775
    %v1848 = vunpack.c.l.b16 %v1776
    %v1849 = vpack.c.b16 %v1846, %v1845
    %v1850 = vpack.c.b16 %v1848, %v1847
    %v1854 = vsel %vm200, %v1840, 0
    %1856 = vmatprep.subr.bf16.mxu0 0
    %1857 = vmatpush1.bf16.msra.mxu0 %v1849
    %1858 = vmatprep.subr.bf16.mxu0 0
    %1859 = vmatpush1.bf16.msra.mxu0 %v1850
    %1860 = vmatprep.subr.bf16.mxu0 0
    %1861 = vmatpush1.bf16.msra.mxu0 0
    %1862 = vmatprep.subr.bf16.mxu0 0
    %1863 = vmatpush1.bf16.msra.mxu0 0
    %1864 = vmatprep.subr.bf16.mxu0 0
    %1865 = vmatpush1.bf16.msra.mxu0 0
    %1866 = vmatprep.subr.bf16.mxu0 0
    %1867 = vmatpush1.bf16.msra.mxu0 0
    %1868 = vmatprep.subr.bf16.mxu0 0
    %1869 = vmatpush1.bf16.msra.mxu0 0
    %1870 = vmatprep.subr.bf16.mxu0 0
    %1871 = vmatpush1.bf16.msra.mxu0 0
    %1872 = vmatprep.subr.bf16.mxu0 0
    %1873 = vmatpush1.bf16.msra.mxu0 0
    %1874 = vmatprep.subr.bf16.mxu0 0
    %1875 = vmatpush1.bf16.msra.mxu0 0
    %1876 = vmatprep.subr.bf16.mxu0 0
    %1877 = vmatpush1.bf16.msra.mxu0 0
    %1878 = vmatprep.subr.bf16.mxu0 0
    %1879 = vmatpush1.bf16.msra.mxu0 0
    %1880 = vmatprep.subr.bf16.mxu0 0
    %1881 = vmatpush1.bf16.msra.mxu0 0
    %1882 = vmatprep.subr.bf16.mxu0 0
    %1883 = vmatpush1.bf16.msra.mxu0 0
    %1884 = vmatprep.subr.bf16.mxu0 0
    %1885 = vmatpush1.bf16.msra.mxu0 0
    %1886 = vmatprep.subr.bf16.mxu0 0
    %1887 = vmatpush1.bf16.msra.mxu0 0
    %1888 = vmatprep.mubr.bf16.mxu0 0
    %1889 = vmatmul.mubr.bf16.gmra.mrb[0].mxu0 %v1854
    %v1890 = vpop.f32.mrb[0].mxu0
    %v1891 = vadd.f32 %v1833, %v1890
    %v1892 = vpop.f32.mrb[0].mxu0
    %v1893 = vpop.f32.mrb[0].mxu0
    %v1894 = vpop.f32.mrb[0].mxu0
    %1895 = vdwg.mxu0
    %v1896 = vld [vmem:[%s515] sm:$0x1]
    %v1898 = vlaneseq
    %v1899 = vshrl.u32 %v1898, 7
    %v1900 = vsub.s32 0, %v1899
    %v1901 = vrot.slane %v1896, %v1900
    %v1903 = vadd.f32 %v1891, %v1901
    %v1904 = vld [vmem:[%s524] sm:$0xff]
    %v1905 = vxor.u32 %v1903, 2147483648
    %v1906 = vmul.f32 %v1905, 1.442695
    %v1907 = vpow.pop %v1906
    %v1908 = vadd.f32 %v1907, 1.0
    %v1909 = vrcp.pop %v1908
    %v1910 = vmul.f32 1.0, %v1909
    %v1911 = vtanh.pop %v1903
    %1913 = vrot.lane.b32.xlu0 %v1904, 32
    %v1914 = vpop.permute.xlu0 %1913
    %v1916 = vmul.f32 %v1910, %v1914
    %1918 = vrot.lane.b32.xlu0 %v1911, 64
    %v1919 = vpop.permute.xlu0 %1918
    %v1921 = vmul.f32 %v1910, %v1919
    %1923 = vrot.lane.b32.xlu0 %v1921, 32
    %v1924 = vpop.permute.xlu0 %1923
    %v1926 = vadd.f32 %v1916, %v1924
    %v1927 = vtanh.pop %v1926
    %1929 = vrot.lane.b32.xlu0 %v1927, 64
    %v1930 = vpop.permute.xlu0 %1929
    %v1932 = vmul.f32 %v1910, %v1930
    %1934 = vrot.lane.b32.xlu0 %v1932, 32
    %v1935 = vpop.permute.xlu0 %1934
    %1937 = vst.msk [vmem:[%s394] sm:$0xff] %vm200, %v1935
    %1939 = vrot.lane.b32.xlu0 %v1926, 96
    %v1940 = vpop.permute.xlu0 %1939
    %1942 = vst.msk [vmem:[%s524] sm:$0xff] %vm200, %v1940
    %s1943 = scalar_lea.vmem [#allocation5], 40
    %1944 = vst.msk [vmem:[%s1943] sm:$0xff] %vm200, %v1935
    %s1945 = scalar_lea.vmem [#allocation4], 48
    %v1946 = vld [vmem:[%s1945] sm:$0xff]
    %v1947 = vld [vmem:[#allocation2] sm:$0xff]
    %v1948 = vpack.c.bf16 %v1947, %v1947
    %v1949 = vld [vmem:[#allocation14] sm:$0xf]
    %v1950 = vld [vmem:[#allocation14 + $0x4] sm:$0xf]
    %v1951 = vld [vmem:[#allocation14 + $0x8] sm:$0xf]
    %v1952 = vld [vmem:[#allocation14 + $0xc] sm:$0xf]
    %v1957 = vunpack.c.l.b16 %v1949
    %v1958 = vunpack.c.l.b16 %v1950
    %v1959 = vunpack.c.l.b16 %v1951
    %v1960 = vunpack.c.l.b16 %v1952
    %v1961 = vpack.c.b16 %v1958, %v1957
    %v1962 = vpack.c.b16 %v1960, %v1959
    %v1966 = vsel %vm200, %v1948, 0
    %1968 = vmatprep.subr.bf16.mxu0 0
    %1969 = vmatpush1.bf16.msra.mxu0 %v1961
    %1970 = vmatprep.subr.bf16.mxu0 0
    %1971 = vmatpush1.bf16.msra.mxu0 %v1962
    %1972 = vmatprep.subr.bf16.mxu0 0
    %1973 = vmatpush1.bf16.msra.mxu0 0
    %1974 = vmatprep.subr.bf16.mxu0 0
    %1975 = vmatpush1.bf16.msra.mxu0 0
    %1976 = vmatprep.subr.bf16.mxu0 0
    %1977 = vmatpush1.bf16.msra.mxu0 0
    %1978 = vmatprep.subr.bf16.mxu0 0
    %1979 = vmatpush1.bf16.msra.mxu0 0
    %1980 = vmatprep.subr.bf16.mxu0 0
    %1981 = vmatpush1.bf16.msra.mxu0 0
    %1982 = vmatprep.subr.bf16.mxu0 0
    %1983 = vmatpush1.bf16.msra.mxu0 0
    %1984 = vmatprep.subr.bf16.mxu0 0
    %1985 = vmatpush1.bf16.msra.mxu0 0
    %1986 = vmatprep.subr.bf16.mxu0 0
    %1987 = vmatpush1.bf16.msra.mxu0 0
    %1988 = vmatprep.subr.bf16.mxu0 0
    %1989 = vmatpush1.bf16.msra.mxu0 0
    %1990 = vmatprep.subr.bf16.mxu0 0
    %1991 = vmatpush1.bf16.msra.mxu0 0
    %1992 = vmatprep.subr.bf16.mxu0 0
    %1993 = vmatpush1.bf16.msra.mxu0 0
    %1994 = vmatprep.subr.bf16.mxu0 0
    %1995 = vmatpush1.bf16.msra.mxu0 0
    %1996 = vmatprep.subr.bf16.mxu0 0
    %1997 = vmatpush1.bf16.msra.mxu0 0
    %1998 = vmatprep.subr.bf16.mxu0 0
    %1999 = vmatpush1.bf16.msra.mxu0 0
    %2000 = vmatprep.mubr.bf16.mxu0 0
    %2001 = vmatmul.mubr.bf16.gmra.mrb[0].mxu0 %v1966
    %v2002 = vpop.f32.mrb[0].mxu0
    %v2003 = vadd.f32 0.0, %v2002
    %v2004 = vpop.f32.mrb[0].mxu0
    %v2005 = vpop.f32.mrb[0].mxu0
    %v2006 = vpop.f32.mrb[0].mxu0
    %2007 = vdwg.mxu0
    %v2008 = vadd.f32 %v1946, %v2003
    %v2009 = vld [vmem:[#allocation3] sm:$0xff]
    %v2010 = vxor.u32 %v2008, 2147483648
    %v2011 = vmul.f32 %v2010, 1.442695
    %v2012 = vpow.pop %v2011
    %v2013 = vadd.f32 %v2012, 1.0
    %v2014 = vrcp.pop %v2013
    %v2015 = vmul.f32 1.0, %v2014
    %v2016 = vtanh.pop %v2008
    %2018 = vrot.lane.b32.xlu0 %v2009, 32
    %v2019 = vpop.permute.xlu0 %2018
    %v2021 = vmul.f32 %v2015, %v2019
    %2023 = vrot.lane.b32.xlu0 %v2016, 64
    %v2024 = vpop.permute.xlu0 %2023
    %v2026 = vmul.f32 %v2015, %v2024
    %2028 = vrot.lane.b32.xlu0 %v2026, 32
    %v2029 = vpop.permute.xlu0 %2028
    %v2031 = vadd.f32 %v2021, %v2029
    %v2032 = vtanh.pop %v2031
    %2034 = vrot.lane.b32.xlu0 %v2032, 64
    %v2035 = vpop.permute.xlu0 %2034
    %v2037 = vmul.f32 %v2015, %v2035
    %2039 = vrot.lane.b32.xlu0 %v2037, 32
    %v2040 = vpop.permute.xlu0 %2039
    %2042 = vst.msk [vmem:[#allocation2] sm:$0xff] %vm200, %v2040
    %2044 = vrot.lane.b32.xlu0 %v2031, 96
    %v2045 = vpop.permute.xlu0 %2044
    %2047 = vst.msk [vmem:[#allocation3] sm:$0xff] %vm200, %v2045
    %v2048 = vpack.c.bf16 %v2037, %v2037
    %v2049 = vld [vmem:[%s389] sm:$0xf]
    %v2050 = vld [vmem:[%s389 + $0x4] sm:$0xf]
    %v2051 = vld [vmem:[%s389 + $0x8] sm:$0xf]
    %v2052 = vld [vmem:[%s389 + $0xc] sm:$0xf]
    %v2053 = vld [vmem:[%s394] sm:$0xff]
    %v2054 = vpack.c.bf16 %v2053, %v2053
    %v2055 = vld [vmem:[%s397] sm:$0xf]
    %v2056 = vld [vmem:[%s397 + $0x4] sm:$0xf]
    %v2057 = vld [vmem:[%s397 + $0x8] sm:$0xf]
    %v2058 = vld [vmem:[%s397 + $0xc] sm:$0xf]
    %v2063 = vunpack.c.l.b16 %v2055
    %v2064 = vunpack.c.l.b16 %v2056
    %v2065 = vunpack.c.l.b16 %v2057
    %v2066 = vunpack.c.l.b16 %v2058
    %v2067 = vpack.c.b16 %v2064, %v2063
    %v2068 = vpack.c.b16 %v2066, %v2065
    %v2072 = vsel %vm200, %v2054, 0
    %2074 = vmatprep.subr.bf16.mxu0 0
    %2075 = vmatpush1.bf16.msra.mxu0 %v2067
    %2076 = vmatprep.subr.bf16.mxu0 0
    %2077 = vmatpush1.bf16.msra.mxu0 %v2068
    %2078 = vmatprep.subr.bf16.mxu0 0
    %2079 = vmatpush1.bf16.msra.mxu0 0
    %2080 = vmatprep.subr.bf16.mxu0 0
    %2081 = vmatpush1.bf16.msra.mxu0 0
    %2082 = vmatprep.subr.bf16.mxu0 0
    %2083 = vmatpush1.bf16.msra.mxu0 0
    %2084 = vmatprep.subr.bf16.mxu0 0
    %2085 = vmatpush1.bf16.msra.mxu0 0
    %2086 = vmatprep.subr.bf16.mxu0 0
    %2087 = vmatpush1.bf16.msra.mxu0 0
    %2088 = vmatprep.subr.bf16.mxu0 0
    %2089 = vmatpush1.bf16.msra.mxu0 0
    %2090 = vmatprep.subr.bf16.mxu0 0
    %2091 = vmatpush1.bf16.msra.mxu0 0
    %2092 = vmatprep.subr.bf16.mxu0 0
    %2093 = vmatpush1.bf16.msra.mxu0 0
    %2094 = vmatprep.subr.bf16.mxu0 0
    %2095 = vmatpush1.bf16.msra.mxu0 0
    %2096 = vmatprep.subr.bf16.mxu0 0
    %2097 = vmatpush1.bf16.msra.mxu0 0
    %2098 = vmatprep.subr.bf16.mxu0 0
    %2099 = vmatpush1.bf16.msra.mxu0 0
    %2100 = vmatprep.subr.bf16.mxu0 0
    %2101 = vmatpush1.bf16.msra.mxu0 0
    %2102 = vmatprep.subr.bf16.mxu0 0
    %2103 = vmatpush1.bf16.msra.mxu0 0
    %2104 = vmatprep.subr.bf16.mxu0 0
    %2105 = vmatpush1.bf16.msra.mxu0 0
    %2106 = vmatprep.mubr.bf16.mxu0 0
    %2107 = vmatmul.mubr.bf16.gmra.mrb[0].mxu0 %v2072
    %v2108 = vpop.f32.mrb[0].mxu0
    %v2109 = vadd.f32 0.0, %v2108
    %v2110 = vpop.f32.mrb[0].mxu0
    %v2111 = vpop.f32.mrb[0].mxu0
    %v2112 = vpop.f32.mrb[0].mxu0
    %2113 = vdwg.mxu0
    %2115 = vrot.lane.b32.xlu0 %v2048, 32
    %v2116 = vpop.permute.xlu0 %2115
    %v2121 = vunpack.c.l.b16 %v2049
    %v2122 = vunpack.c.l.b16 %v2050
    %v2123 = vunpack.c.l.b16 %v2051
    %v2124 = vunpack.c.l.b16 %v2052
    %v2125 = vpack.c.b16 %v2122, %v2121
    %v2126 = vpack.c.b16 %v2124, %v2123
    %v2130 = vsel %vm200, %v2116, 0
    %2132 = vmatprep.subr.bf16.mxu0 0
    %2133 = vmatpush1.bf16.msra.mxu0 %v2125
    %2134 = vmatprep.subr.bf16.mxu0 0
    %2135 = vmatpush1.bf16.msra.mxu0 %v2126
    %2136 = vmatprep.subr.bf16.mxu0 0
    %2137 = vmatpush1.bf16.msra.mxu0 0
    %2138 = vmatprep.subr.bf16.mxu0 0
    %2139 = vmatpush1.bf16.msra.mxu0 0
    %2140 = vmatprep.subr.bf16.mxu0 0
    %2141 = vmatpush1.bf16.msra.mxu0 0
    %2142 = vmatprep.subr.bf16.mxu0 0
    %2143 = vmatpush1.bf16.msra.mxu0 0
    %2144 = vmatprep.subr.bf16.mxu0 0
    %2145 = vmatpush1.bf16.msra.mxu0 0
    %2146 = vmatprep.subr.bf16.mxu0 0
    %2147 = vmatpush1.bf16.msra.mxu0 0
    %2148 = vmatprep.subr.bf16.mxu0 0
    %2149 = vmatpush1.bf16.msra.mxu0 0
    %2150 = vmatprep.subr.bf16.mxu0 0
    %2151 = vmatpush1.bf16.msra.mxu0 0
    %2152 = vmatprep.subr.bf16.mxu0 0
    %2153 = vmatpush1.bf16.msra.mxu0 0
    %2154 = vmatprep.subr.bf16.mxu0 0
    %2155 = vmatpush1.bf16.msra.mxu0 0
    %2156 = vmatprep.subr.bf16.mxu0 0
    %2157 = vmatpush1.bf16.msra.mxu0 0
    %2158 = vmatprep.subr.bf16.mxu0 0
    %2159 = vmatpush1.bf16.msra.mxu0 0
    %2160 = vmatprep.subr.bf16.mxu0 0
    %2161 = vmatpush1.bf16.msra.mxu0 0
    %2162 = vmatprep.subr.bf16.mxu0 0
    %2163 = vmatpush1.bf16.msra.mxu0 0
    %2164 = vmatprep.mubr.bf16.mxu0 0
    %2165 = vmatmul.mubr.bf16.gmra.mrb[0].mxu0 %v2130
    %v2166 = vpop.f32.mrb[0].mxu0
    %v2167 = vadd.f32 %v2109, %v2166
    %v2168 = vpop.f32.mrb[0].mxu0
    %v2169 = vpop.f32.mrb[0].mxu0
    %v2170 = vpop.f32.mrb[0].mxu0
    %2171 = vdwg.mxu0
    %v2172 = vld [vmem:[%s515] sm:$0x1]
    %v2174 = vlaneseq
    %v2175 = vshrl.u32 %v2174, 7
    %v2176 = vsub.s32 0, %v2175
    %v2177 = vrot.slane %v2172, %v2176
    %v2179 = vadd.f32 %v2167, %v2177
    %v2180 = vld [vmem:[%s524] sm:$0xff]
    %v2181 = vxor.u32 %v2179, 2147483648
    %v2182 = vmul.f32 %v2181, 1.442695
    %v2183 = vpow.pop %v2182
    %v2184 = vadd.f32 %v2183, 1.0
    %v2185 = vrcp.pop %v2184
    %v2186 = vmul.f32 1.0, %v2185
    %v2187 = vtanh.pop %v2179
    %2189 = vrot.lane.b32.xlu0 %v2180, 32
    %v2190 = vpop.permute.xlu0 %2189
    %v2192 = vmul.f32 %v2186, %v2190
    %2194 = vrot.lane.b32.xlu0 %v2187, 64
    %v2195 = vpop.permute.xlu0 %2194
    %v2197 = vmul.f32 %v2186, %v2195
    %2199 = vrot.lane.b32.xlu0 %v2197, 32
    %v2200 = vpop.permute.xlu0 %2199
    %v2202 = vadd.f32 %v2192, %v2200
    %v2203 = vtanh.pop %v2202
    %2205 = vrot.lane.b32.xlu0 %v2203, 64
    %v2206 = vpop.permute.xlu0 %2205
    %v2208 = vmul.f32 %v2186, %v2206
    %2210 = vrot.lane.b32.xlu0 %v2208, 32
    %v2211 = vpop.permute.xlu0 %2210
    %2213 = vst.msk [vmem:[%s394] sm:$0xff] %vm200, %v2211
    %2215 = vrot.lane.b32.xlu0 %v2202, 96
    %v2216 = vpop.permute.xlu0 %2215
    %2218 = vst.msk [vmem:[%s524] sm:$0xff] %vm200, %v2216
    %s2219 = scalar_lea.vmem [#allocation5], 48
    %2220 = vst.msk [vmem:[%s2219] sm:$0xff] %vm200, %v2211
    %s2221 = scalar_lea.vmem [#allocation4], 56
    %v2222 = vld [vmem:[%s2221] sm:$0xff]
    %v2223 = vld [vmem:[#allocation2] sm:$0xff]
    %v2224 = vpack.c.bf16 %v2223, %v2223
    %v2225 = vld [vmem:[#allocation14] sm:$0xf]
    %v2226 = vld [vmem:[#allocation14 + $0x4] sm:$0xf]
    %v2227 = vld [vmem:[#allocation14 + $0x8] sm:$0xf]
    %v2228 = vld [vmem:[#allocation14 + $0xc] sm:$0xf]
    %v2233 = vunpack.c.l.b16 %v2225
    %v2234 = vunpack.c.l.b16 %v2226
    %v2235 = vunpack.c.l.b16 %v2227
    %v2236 = vunpack.c.l.b16 %v2228
    %v2237 = vpack.c.b16 %v2234, %v2233
    %v2238 = vpack.c.b16 %v2236, %v2235
    %v2242 = vsel %vm200, %v2224, 0
    %2244 = vmatprep.subr.bf16.mxu0 0
    %2245 = vmatpush1.bf16.msra.mxu0 %v2237
    %2246 = vmatprep.subr.bf16.mxu0 0
    %2247 = vmatpush1.bf16.msra.mxu0 %v2238
    %2248 = vmatprep.subr.bf16.mxu0 0
    %2249 = vmatpush1.bf16.msra.mxu0 0
    %2250 = vmatprep.subr.bf16.mxu0 0
    %2251 = vmatpush1.bf16.msra.mxu0 0
    %2252 = vmatprep.subr.bf16.mxu0 0
    %2253 = vmatpush1.bf16.msra.mxu0 0
    %2254 = vmatprep.subr.bf16.mxu0 0
    %2255 = vmatpush1.bf16.msra.mxu0 0
    %2256 = vmatprep.subr.bf16.mxu0 0
    %2257 = vmatpush1.bf16.msra.mxu0 0
    %2258 = vmatprep.subr.bf16.mxu0 0
    %2259 = vmatpush1.bf16.msra.mxu0 0
    %2260 = vmatprep.subr.bf16.mxu0 0
    %2261 = vmatpush1.bf16.msra.mxu0 0
    %2262 = vmatprep.subr.bf16.mxu0 0
    %2263 = vmatpush1.bf16.msra.mxu0 0
    %2264 = vmatprep.subr.bf16.mxu0 0
    %2265 = vmatpush1.bf16.msra.mxu0 0
    %2266 = vmatprep.subr.bf16.mxu0 0
    %2267 = vmatpush1.bf16.msra.mxu0 0
    %2268 = vmatprep.subr.bf16.mxu0 0
    %2269 = vmatpush1.bf16.msra.mxu0 0
    %2270 = vmatprep.subr.bf16.mxu0 0
    %2271 = vmatpush1.bf16.msra.mxu0 0
    %2272 = vmatprep.subr.bf16.mxu0 0
    %2273 = vmatpush1.bf16.msra.mxu0 0
    %2274 = vmatprep.subr.bf16.mxu0 0
    %2275 = vmatpush1.bf16.msra.mxu0 0
    %2276 = vmatprep.mubr.bf16.mxu0 0
    %2277 = vmatmul.mubr.bf16.gmra.mrb[0].mxu0 %v2242
    %v2278 = vpop.f32.mrb[0].mxu0
    %v2279 = vadd.f32 0.0, %v2278
    %v2280 = vpop.f32.mrb[0].mxu0
    %v2281 = vpop.f32.mrb[0].mxu0
    %v2282 = vpop.f32.mrb[0].mxu0
    %2283 = vdwg.mxu0
    %v2284 = vadd.f32 %v2222, %v2279
    %v2285 = vld [vmem:[#allocation3] sm:$0xff]
    %v2286 = vxor.u32 %v2284, 2147483648
    %v2287 = vmul.f32 %v2286, 1.442695
    %v2288 = vpow.pop %v2287
    %v2289 = vadd.f32 %v2288, 1.0
    %v2290 = vrcp.pop %v2289
    %v2291 = vmul.f32 1.0, %v2290
    %v2292 = vtanh.pop %v2284
    %2294 = vrot.lane.b32.xlu0 %v2285, 32
    %v2295 = vpop.permute.xlu0 %2294
    %v2297 = vmul.f32 %v2291, %v2295
    %2299 = vrot.lane.b32.xlu0 %v2292, 64
    %v2300 = vpop.permute.xlu0 %2299
    %v2302 = vmul.f32 %v2291, %v2300
    %2304 = vrot.lane.b32.xlu0 %v2302, 32
    %v2305 = vpop.permute.xlu0 %2304
    %v2307 = vadd.f32 %v2297, %v2305
    %v2308 = vtanh.pop %v2307
    %2310 = vrot.lane.b32.xlu0 %v2308, 64
    %v2311 = vpop.permute.xlu0 %2310
    %v2313 = vmul.f32 %v2291, %v2311
    %2315 = vrot.lane.b32.xlu0 %v2313, 32
    %v2316 = vpop.permute.xlu0 %2315
    %2318 = vst.msk [vmem:[#allocation2] sm:$0xff] %vm200, %v2316
    %2320 = vrot.lane.b32.xlu0 %v2307, 96
    %v2321 = vpop.permute.xlu0 %2320
    %2323 = vst.msk [vmem:[#allocation3] sm:$0xff] %vm200, %v2321
    %v2324 = vpack.c.bf16 %v2313, %v2313
    %v2325 = vld [vmem:[%s389] sm:$0xf]
    %v2326 = vld [vmem:[%s389 + $0x4] sm:$0xf]
    %v2327 = vld [vmem:[%s389 + $0x8] sm:$0xf]
    %v2328 = vld [vmem:[%s389 + $0xc] sm:$0xf]
    %v2329 = vld [vmem:[%s394] sm:$0xff]
    %v2330 = vpack.c.bf16 %v2329, %v2329
    %v2331 = vld [vmem:[%s397] sm:$0xf]
    %v2332 = vld [vmem:[%s397 + $0x4] sm:$0xf]
    %v2333 = vld [vmem:[%s397 + $0x8] sm:$0xf]
    %v2334 = vld [vmem:[%s397 + $0xc] sm:$0xf]
    %v2339 = vunpack.c.l.b16 %v2331
    %v2340 = vunpack.c.l.b16 %v2332
    %v2341 = vunpack.c.l.b16 %v2333
    %v2342 = vunpack.c.l.b16 %v2334
    %v2343 = vpack.c.b16 %v2340, %v2339
    %v2344 = vpack.c.b16 %v2342, %v2341
    %v2348 = vsel %vm200, %v2330, 0
    %2350 = vmatprep.subr.bf16.mxu0 0
    %2351 = vmatpush1.bf16.msra.mxu0 %v2343
    %2352 = vmatprep.subr.bf16.mxu0 0
    %2353 = vmatpush1.bf16.msra.mxu0 %v2344
    %2354 = vmatprep.subr.bf16.mxu0 0
    %2355 = vmatpush1.bf16.msra.mxu0 0
    %2356 = vmatprep.subr.bf16.mxu0 0
    %2357 = vmatpush1.bf16.msra.mxu0 0
    %2358 = vmatprep.subr.bf16.mxu0 0
    %2359 = vmatpush1.bf16.msra.mxu0 0
    %2360 = vmatprep.subr.bf16.mxu0 0
    %2361 = vmatpush1.bf16.msra.mxu0 0
    %2362 = vmatprep.subr.bf16.mxu0 0
    %2363 = vmatpush1.bf16.msra.mxu0 0
    %2364 = vmatprep.subr.bf16.mxu0 0
    %2365 = vmatpush1.bf16.msra.mxu0 0
    %2366 = vmatprep.subr.bf16.mxu0 0
    %2367 = vmatpush1.bf16.msra.mxu0 0
    %2368 = vmatprep.subr.bf16.mxu0 0
    %2369 = vmatpush1.bf16.msra.mxu0 0
    %2370 = vmatprep.subr.bf16.mxu0 0
    %2371 = vmatpush1.bf16.msra.mxu0 0
    %2372 = vmatprep.subr.bf16.mxu0 0
    %2373 = vmatpush1.bf16.msra.mxu0 0
    %2374 = vmatprep.subr.bf16.mxu0 0
    %2375 = vmatpush1.bf16.msra.mxu0 0
    %2376 = vmatprep.subr.bf16.mxu0 0
    %2377 = vmatpush1.bf16.msra.mxu0 0
    %2378 = vmatprep.subr.bf16.mxu0 0
    %2379 = vmatpush1.bf16.msra.mxu0 0
    %2380 = vmatprep.subr.bf16.mxu0 0
    %2381 = vmatpush1.bf16.msra.mxu0 0
    %2382 = vmatprep.mubr.bf16.mxu0 0
    %2383 = vmatmul.mubr.bf16.gmra.mrb[0].mxu0 %v2348
    %v2384 = vpop.f32.mrb[0].mxu0
    %v2385 = vadd.f32 0.0, %v2384
    %v2386 = vpop.f32.mrb[0].mxu0
    %v2387 = vpop.f32.mrb[0].mxu0
    %v2388 = vpop.f32.mrb[0].mxu0
    %2389 = vdwg.mxu0
    %2391 = vrot.lane.b32.xlu0 %v2324, 32
    %v2392 = vpop.permute.xlu0 %2391
    %v2397 = vunpack.c.l.b16 %v2325
    %v2398 = vunpack.c.l.b16 %v2326
    %v2399 = vunpack.c.l.b16 %v2327
    %v2400 = vunpack.c.l.b16 %v2328
    %v2401 = vpack.c.b16 %v2398, %v2397
    %v2402 = vpack.c.b16 %v2400, %v2399
    %v2406 = vsel %vm200, %v2392, 0
    %2408 = vmatprep.subr.bf16.mxu0 0
    %2409 = vmatpush1.bf16.msra.mxu0 %v2401
    %2410 = vmatprep.subr.bf16.mxu0 0
    %2411 = vmatpush1.bf16.msra.mxu0 %v2402
    %2412 = vmatprep.subr.bf16.mxu0 0
    %2413 = vmatpush1.bf16.msra.mxu0 0
    %2414 = vmatprep.subr.bf16.mxu0 0
    %2415 = vmatpush1.bf16.msra.mxu0 0
    %2416 = vmatprep.subr.bf16.mxu0 0
    %2417 = vmatpush1.bf16.msra.mxu0 0
    %2418 = vmatprep.subr.bf16.mxu0 0
    %2419 = vmatpush1.bf16.msra.mxu0 0
    %2420 = vmatprep.subr.bf16.mxu0 0
    %2421 = vmatpush1.bf16.msra.mxu0 0
    %2422 = vmatprep.subr.bf16.mxu0 0
    %2423 = vmatpush1.bf16.msra.mxu0 0
    %2424 = vmatprep.subr.bf16.mxu0 0
    %2425 = vmatpush1.bf16.msra.mxu0 0
    %2426 = vmatprep.subr.bf16.mxu0 0
    %2427 = vmatpush1.bf16.msra.mxu0 0
    %2428 = vmatprep.subr.bf16.mxu0 0
    %2429 = vmatpush1.bf16.msra.mxu0 0
    %2430 = vmatprep.subr.bf16.mxu0 0
    %2431 = vmatpush1.bf16.msra.mxu0 0
    %2432 = vmatprep.subr.bf16.mxu0 0
    %2433 = vmatpush1.bf16.msra.mxu0 0
    %2434 = vmatprep.subr.bf16.mxu0 0
    %2435 = vmatpush1.bf16.msra.mxu0 0
    %2436 = vmatprep.subr.bf16.mxu0 0
    %2437 = vmatpush1.bf16.msra.mxu0 0
    %2438 = vmatprep.subr.bf16.mxu0 0
    %2439 = vmatpush1.bf16.msra.mxu0 0
    %2440 = vmatprep.mubr.bf16.mxu0 0
    %2441 = vmatmul.mubr.bf16.gmra.mrb[0].mxu0 %v2406
    %v2442 = vpop.f32.mrb[0].mxu0
    %v2443 = vadd.f32 %v2385, %v2442
    %v2444 = vpop.f32.mrb[0].mxu0
    %v2445 = vpop.f32.mrb[0].mxu0
    %v2446 = vpop.f32.mrb[0].mxu0
    %2447 = vdwg.mxu0
    %v2448 = vld [vmem:[%s515] sm:$0x1]
    %v2450 = vlaneseq
    %v2451 = vshrl.u32 %v2450, 7
    %v2452 = vsub.s32 0, %v2451
    %v2453 = vrot.slane %v2448, %v2452
    %v2455 = vadd.f32 %v2443, %v2453
    %v2456 = vld [vmem:[%s524] sm:$0xff]
    %v2457 = vxor.u32 %v2455, 2147483648
    %v2458 = vmul.f32 %v2457, 1.442695
    %v2459 = vpow.pop %v2458
    %v2460 = vadd.f32 %v2459, 1.0
    %v2461 = vrcp.pop %v2460
    %v2462 = vmul.f32 1.0, %v2461
    %v2463 = vtanh.pop %v2455
    %2465 = vrot.lane.b32.xlu0 %v2456, 32
    %v2466 = vpop.permute.xlu0 %2465
    %v2468 = vmul.f32 %v2462, %v2466
    %2470 = vrot.lane.b32.xlu0 %v2463, 64
    %v2471 = vpop.permute.xlu0 %2470
    %v2473 = vmul.f32 %v2462, %v2471
    %2475 = vrot.lane.b32.xlu0 %v2473, 32
    %v2476 = vpop.permute.xlu0 %2475
    %v2478 = vadd.f32 %v2468, %v2476
    %v2479 = vtanh.pop %v2478
    %2481 = vrot.lane.b32.xlu0 %v2479, 64
    %v2482 = vpop.permute.xlu0 %2481
    %v2484 = vmul.f32 %v2462, %v2482
    %2486 = vrot.lane.b32.xlu0 %v2484, 32
    %v2487 = vpop.permute.xlu0 %2486
    %2489 = vst.msk [vmem:[%s394] sm:$0xff] %vm200, %v2487
    %2491 = vrot.lane.b32.xlu0 %v2478, 96
    %v2492 = vpop.permute.xlu0 %2491
    %2494 = vst.msk [vmem:[%s524] sm:$0xff] %vm200, %v2492
    %s2495 = scalar_lea.vmem [#allocation5], 56
    %2496 = vst.msk [vmem:[%s2495] sm:$0xff] %vm200, %v2487
    %v2497 = vld [vmem:[#allocation5] sm:$0xff]
    %v2498 = vld [vmem:[#allocation5 + $0x8] sm:$0xff]
    %v2499 = vld [vmem:[#allocation5 + $0x10] sm:$0xff]
    %v2500 = vld [vmem:[#allocation5 + $0x18] sm:$0xff]
    %v2501 = vld [vmem:[#allocation5 + $0x20] sm:$0xff]
    %v2502 = vld [vmem:[#allocation5 + $0x28] sm:$0xff]
    %v2503 = vld [vmem:[#allocation5 + $0x30] sm:$0xff]
    %v2504 = vld [vmem:[#allocation5 + $0x38] sm:$0xff]
    %v2505 = vpack.c.bf16 %v2498, %v2497
    %v2506 = vpack.c.bf16 %v2500, %v2499
    %v2507 = vpack.c.bf16 %v2502, %v2501
    %v2508 = vpack.c.bf16 %v2504, %v2503
    %v2509 = vld [vmem:[#allocation17] sm:$0xf]
    %v2510 = vld [vmem:[#allocation17 + $0x4] sm:$0xf]
    %v2511 = vld [vmem:[#allocation17 + $0x8] sm:$0xf]
    %v2512 = vld [vmem:[#allocation17 + $0xc] sm:$0xf]
    %v2513 = vld [vmem:[#allocation18] sm:$0x1]
    %v2515 = vlaneseq
    %v2516 = vshrl.u32 %v2515, 7
    %v2517 = vsub.s32 0, %v2516
    %v2518 = vrot.slane %v2513, %v2517
    %v2524 = vunpack.c.l.b16 %v2509
    %v2525 = vunpack.c.l.b16 %v2510
    %v2526 = vunpack.c.l.b16 %v2511
    %v2527 = vunpack.c.l.b16 %v2512
    %v2528 = vpack.c.b16 %v2525, %v2524
    %v2529 = vpack.c.b16 %v2527, %v2526
    %v2533 = vsel %vm200, %v2505, 0
    %v2536 = vsel %vm200, %v2506, 0
    %v2539 = vsel %vm200, %v2507, 0
    %v2542 = vsel %vm200, %v2508, 0
    %2544 = vmatprep.subr.bf16.mxu0 0
    %2545 = vmatpush1.bf16.msra.mxu0 %v2528
    %2546 = vmatprep.subr.bf16.mxu0 0
    %2547 = vmatpush1.bf16.msra.mxu0 %v2529
    %2548 = vmatprep.subr.bf16.mxu0 0
    %2549 = vmatpush1.bf16.msra.mxu0 0
    %2550 = vmatprep.subr.bf16.mxu0 0
    %2551 = vmatpush1.bf16.msra.mxu0 0
    %2552 = vmatprep.subr.bf16.mxu0 0
    %2553 = vmatpush1.bf16.msra.mxu0 0
    %2554 = vmatprep.subr.bf16.mxu0 0
    %2555 = vmatpush1.bf16.msra.mxu0 0
    %2556 = vmatprep.subr.bf16.mxu0 0
    %2557 = vmatpush1.bf16.msra.mxu0 0
    %2558 = vmatprep.subr.bf16.mxu0 0
    %2559 = vmatpush1.bf16.msra.mxu0 0
    %2560 = vmatprep.subr.bf16.mxu0 0
    %2561 = vmatpush1.bf16.msra.mxu0 0
    %2562 = vmatprep.subr.bf16.mxu0 0
    %2563 = vmatpush1.bf16.msra.mxu0 0
    %2564 = vmatprep.subr.bf16.mxu0 0
    %2565 = vmatpush1.bf16.msra.mxu0 0
    %2566 = vmatprep.subr.bf16.mxu0 0
    %2567 = vmatpush1.bf16.msra.mxu0 0
    %2568 = vmatprep.subr.bf16.mxu0 0
    %2569 = vmatpush1.bf16.msra.mxu0 0
    %2570 = vmatprep.subr.bf16.mxu0 0
    %2571 = vmatpush1.bf16.msra.mxu0 0
    %2572 = vmatprep.subr.bf16.mxu0 0
    %2573 = vmatpush1.bf16.msra.mxu0 0
    %2574 = vmatprep.subr.bf16.mxu0 0
    %2575 = vmatpush1.bf16.msra.mxu0 0
    %2576 = vmatprep.mubr.bf16.mxu0 0
    %2577 = vmatmul.mubr.bf16.gmra.mrb[0].mxu0 %v2533
    %v2578 = vpop.f32.mrb[0].mxu0
    %v2579 = vadd.f32 %v2518, %v2578
    %v2580 = vpop.f32.mrb[0].mxu0
    %v2581 = vpop.f32.mrb[0].mxu0
    %v2582 = vadd.f32 %v2518, %v2581
    %v2583 = vpop.f32.mrb[0].mxu0
    %2584 = vmatprep.mubr.bf16.mxu0 0
    %2585 = vmatmul.mubr.bf16.gmra.mrb[0].mxu0 %v2536
    %v2586 = vpop.f32.mrb[0].mxu0
    %v2587 = vadd.f32 %v2518, %v2586
    %v2588 = vpop.f32.mrb[0].mxu0
    %v2589 = vpop.f32.mrb[0].mxu0
    %v2590 = vadd.f32 %v2518, %v2589
    %v2591 = vpop.f32.mrb[0].mxu0
    %2592 = vmatprep.mubr.bf16.mxu0 0
    %2593 = vmatmul.mubr.bf16.gmra.mrb[0].mxu0 %v2539
    %v2594 = vpop.f32.mrb[0].mxu0
    %v2595 = vadd.f32 %v2518, %v2594
    %v2596 = vpop.f32.mrb[0].mxu0
    %v2597 = vpop.f32.mrb[0].mxu0
    %v2598 = vadd.f32 %v2518, %v2597
    %v2599 = vpop.f32.mrb[0].mxu0
    %2600 = vmatprep.mubr.bf16.mxu0 0
    %2601 = vmatmul.mubr.bf16.gmra.mrb[0].mxu0 %v2542
    %v2602 = vpop.f32.mrb[0].mxu0
    %v2603 = vadd.f32 %v2518, %v2602
    %v2604 = vpop.f32.mrb[0].mxu0
    %v2605 = vpop.f32.mrb[0].mxu0
    %v2606 = vadd.f32 %v2518, %v2605
    %v2607 = vpop.f32.mrb[0].mxu0
    %2608 = vdwg.mxu0
    %2609 = vmax.xlane.f32.xlu0 %v2579
    %v2610 = vpop.xlane.xlu0 %2609
    %2611 = vmax.xlane.f32.xlu0 %v2582
    %v2612 = vpop.xlane.xlu0 %2611
    %2613 = vmax.xlane.f32.xlu0 %v2587
    %v2614 = vpop.xlane.xlu0 %2613
    %2615 = vmax.xlane.f32.xlu0 %v2590
    %v2616 = vpop.xlane.xlu0 %2615
    %2617 = vmax.xlane.f32.xlu0 %v2595
    %v2618 = vpop.xlane.xlu0 %2617
    %2619 = vmax.xlane.f32.xlu0 %v2598
    %v2620 = vpop.xlane.xlu0 %2619
    %2621 = vmax.xlane.f32.xlu0 %v2603
    %v2622 = vpop.xlane.xlu0 %2621
    %2623 = vmax.xlane.f32.xlu0 %v2606
    %v2624 = vpop.xlane.xlu0 %2623
    %v2625 = vsub.f32 %v2579, %v2610
    %v2626 = vsub.f32 %v2582, %v2612
    %v2627 = vsub.f32 %v2587, %v2614
    %v2628 = vsub.f32 %v2590, %v2616
    %v2629 = vsub.f32 %v2595, %v2618
    %v2630 = vsub.f32 %v2598, %v2620
    %v2631 = vsub.f32 %v2603, %v2622
    %v2632 = vsub.f32 %v2606, %v2624
    %v2633 = vmul.f32 %v2625, 1.442695
    %v2634 = vpow.pop %v2633
    %v2635 = vmul.f32 %v2626, 1.442695
    %v2636 = vpow.pop %v2635
    %v2637 = vmul.f32 %v2627, 1.442695
    %v2638 = vpow.pop %v2637
    %v2639 = vmul.f32 %v2628, 1.442695
    %v2640 = vpow.pop %v2639
    %v2641 = vmul.f32 %v2629, 1.442695
    %v2642 = vpow.pop %v2641
    %v2643 = vmul.f32 %v2630, 1.442695
    %v2644 = vpow.pop %v2643
    %v2645 = vmul.f32 %v2631, 1.442695
    %v2646 = vpow.pop %v2645
    %v2647 = vmul.f32 %v2632, 1.442695
    %v2648 = vpow.pop %v2647
    %2649 = vadd.xlane.f32.xlu0 %v2634
    %v2650 = vpop.xlane.xlu0 %2649
    %2651 = vadd.xlane.f32.xlu0 %v2636
    %v2652 = vpop.xlane.xlu0 %2651
    %2653 = vadd.xlane.f32.xlu0 %v2638
    %v2654 = vpop.xlane.xlu0 %2653
    %2655 = vadd.xlane.f32.xlu0 %v2640
    %v2656 = vpop.xlane.xlu0 %2655
    %2657 = vadd.xlane.f32.xlu0 %v2642
    %v2658 = vpop.xlane.xlu0 %2657
    %2659 = vadd.xlane.f32.xlu0 %v2644
    %v2660 = vpop.xlane.xlu0 %2659
    %2661 = vadd.xlane.f32.xlu0 %v2646
    %v2662 = vpop.xlane.xlu0 %2661
    %2663 = vadd.xlane.f32.xlu0 %v2648
    %v2664 = vpop.xlane.xlu0 %2663
    %v2665 = vlog2.pop %v2650
    %v2666 = vmul.f32 %v2665, 0.6931472
    %v2667 = vlog2.pop %v2652
    %v2668 = vmul.f32 %v2667, 0.6931472
    %v2669 = vlog2.pop %v2654
    %v2670 = vmul.f32 %v2669, 0.6931472
    %v2671 = vlog2.pop %v2656
    %v2672 = vmul.f32 %v2671, 0.6931472
    %v2673 = vlog2.pop %v2658
    %v2674 = vmul.f32 %v2673, 0.6931472
    %v2675 = vlog2.pop %v2660
    %v2676 = vmul.f32 %v2675, 0.6931472
    %v2677 = vlog2.pop %v2662
    %v2678 = vmul.f32 %v2677, 0.6931472
    %v2679 = vlog2.pop %v2664
    %v2680 = vmul.f32 %v2679, 0.6931472
    %v2681 = vadd.f32 %v2666, %v2610
    %v2682 = vadd.f32 %v2668, %v2612
    %v2683 = vadd.f32 %v2670, %v2614
    %v2684 = vadd.f32 %v2672, %v2616
    %v2685 = vadd.f32 %v2674, %v2618
    %v2686 = vadd.f32 %v2676, %v2620
    %v2687 = vadd.f32 %v2678, %v2622
    %v2688 = vadd.f32 %v2680, %v2624
    %v2689 = vlaneseq
    %v2690 = vand.u32 %v2689, 127
    %v2691 = vld [vmem:[#allocation9] sm:$0xff]
    %v2692 = vld [vmem:[#allocation9 + $0x8] sm:$0xff]
    %v2693 = vld [vmem:[#allocation9 + $0x10] sm:$0xff]
    %v2694 = vld [vmem:[#allocation9 + $0x18] sm:$0xff]
    %v2695 = vld [vmem:[#allocation9 + $0x20] sm:$0xff]
    %v2696 = vld [vmem:[#allocation9 + $0x28] sm:$0xff]
    %v2697 = vld [vmem:[#allocation9 + $0x30] sm:$0xff]
    %v2698 = vld [vmem:[#allocation9 + $0x38] sm:$0xff]
    %2699 = vset.pattern.permute.xlu0 0
    %2700 = vperm.xlu0 %2699, %v2691
    %v2701 = vpop.permute.xlu0 %2700
    %2702 = vset.pattern.permute.xlu0 0
    %2703 = vperm.xlu0 %2702, %v2692
    %v2704 = vpop.permute.xlu0 %2703
    %2705 = vset.pattern.permute.xlu0 0
    %2706 = vperm.xlu0 %2705, %v2693
    %v2707 = vpop.permute.xlu0 %2706
    %2708 = vset.pattern.permute.xlu0 0
    %2709 = vperm.xlu0 %2708, %v2694
    %v2710 = vpop.permute.xlu0 %2709
    %2711 = vset.pattern.permute.xlu0 0
    %2712 = vperm.xlu0 %2711, %v2695
    %v2713 = vpop.permute.xlu0 %2712
    %2714 = vset.pattern.permute.xlu0 0
    %2715 = vperm.xlu0 %2714, %v2696
    %v2716 = vpop.permute.xlu0 %2715
    %2717 = vset.pattern.permute.xlu0 0
    %2718 = vperm.xlu0 %2717, %v2697
    %v2719 = vpop.permute.xlu0 %2718
    %2720 = vset.pattern.permute.xlu0 0
    %2721 = vperm.xlu0 %2720, %v2698
    %v2722 = vpop.permute.xlu0 %2721
    %vm2723 = vcmp.eq.s32.totalorder %v2690, %v2701
    %vm2724 = vcmp.eq.s32.totalorder %v2690, %v2704
    %vm2725 = vcmp.eq.s32.totalorder %v2690, %v2707
    %vm2726 = vcmp.eq.s32.totalorder %v2690, %v2710
    %vm2727 = vcmp.eq.s32.totalorder %v2690, %v2713
    %vm2728 = vcmp.eq.s32.totalorder %v2690, %v2716
    %vm2729 = vcmp.eq.s32.totalorder %v2690, %v2719
    %vm2730 = vcmp.eq.s32.totalorder %v2690, %v2722
    %v2731 = vsel %vm2723, %v2579, 0.0
    %v2732 = vsel %vm2724, %v2582, 0.0
    %v2733 = vsel %vm2725, %v2587, 0.0
    %v2734 = vsel %vm2726, %v2590, 0.0
    %v2735 = vsel %vm2727, %v2595, 0.0
    %v2736 = vsel %vm2728, %v2598, 0.0
    %v2737 = vsel %vm2729, %v2603, 0.0
    %v2738 = vsel %vm2730, %v2606, 0.0
    %2739 = vadd.xlane.f32.xlu0 %v2731
    %v2740 = vpop.xlane.xlu0 %2739
    %2741 = vadd.xlane.f32.xlu0 %v2732
    %v2742 = vpop.xlane.xlu0 %2741
    %2743 = vadd.xlane.f32.xlu0 %v2733
    %v2744 = vpop.xlane.xlu0 %2743
    %2745 = vadd.xlane.f32.xlu0 %v2734
    %v2746 = vpop.xlane.xlu0 %2745
    %2747 = vadd.xlane.f32.xlu0 %v2735
    %v2748 = vpop.xlane.xlu0 %2747
    %2749 = vadd.xlane.f32.xlu0 %v2736
    %v2750 = vpop.xlane.xlu0 %2749
    %2751 = vadd.xlane.f32.xlu0 %v2737
    %v2752 = vpop.xlane.xlu0 %2751
    %2753 = vadd.xlane.f32.xlu0 %v2738
    %v2754 = vpop.xlane.xlu0 %2753
    %v2755 = vsub.f32 %v2681, %v2740
    %v2756 = vsub.f32 %v2682, %v2742
    %v2757 = vsub.f32 %v2683, %v2744
    %v2758 = vsub.f32 %v2684, %v2746
    %v2759 = vsub.f32 %v2685, %v2748
    %v2760 = vsub.f32 %v2686, %v2750
    %v2761 = vsub.f32 %v2687, %v2752
    %v2762 = vsub.f32 %v2688, %v2754
    %v2763 = vld [vmem:[#allocation20] sm:$0x1]
    %v2764 = vld [vmem:[#allocation11] sm:$0xff]
    %v2765 = vld [vmem:[#allocation11 + $0x8] sm:$0xff]
    %v2766 = vld [vmem:[#allocation11 + $0x10] sm:$0xff]
    %v2767 = vld [vmem:[#allocation11 + $0x18] sm:$0xff]
    %v2768 = vld [vmem:[#allocation11 + $0x20] sm:$0xff]
    %v2769 = vld [vmem:[#allocation11 + $0x28] sm:$0xff]
    %v2770 = vld [vmem:[#allocation11 + $0x30] sm:$0xff]
    %v2771 = vld [vmem:[#allocation11 + $0x38] sm:$0xff]
    %v2772 = vmul.f32 %v2755, %v2764
    %v2773 = vmul.f32 %v2756, %v2765
    %v2774 = vmul.f32 %v2757, %v2766
    %v2775 = vmul.f32 %v2758, %v2767
    %v2776 = vmul.f32 %v2759, %v2768
    %v2777 = vmul.f32 %v2760, %v2769
    %v2778 = vmul.f32 %v2761, %v2770
    %v2779 = vmul.f32 %v2762, %v2771
    %vm2780 = vcmask 7168
    %v2781 = vsel %vm2780, %v2772, 0.0
    %v2782 = vsel %vm2780, %v2773, 0.0
    %v2783 = vadd.f32 %v2781, %v2782
    %v2784 = vsel %vm2780, %v2774, 0.0
    %v2785 = vadd.f32 %v2783, %v2784
    %v2786 = vsel %vm2780, %v2775, 0.0
    %v2787 = vadd.f32 %v2785, %v2786
    %v2788 = vsel %vm2780, %v2776, 0.0
    %v2789 = vadd.f32 %v2787, %v2788
    %v2790 = vsel %vm2780, %v2777, 0.0
    %v2791 = vadd.f32 %v2789, %v2790
    %v2792 = vsel %vm2780, %v2778, 0.0
    %v2793 = vadd.f32 %v2791, %v2792
    %v2794 = vsel %vm2780, %v2779, 0.0
    %v2795 = vadd.f32 %v2793, %v2794
    %v2796 = vrot.slane %v2795, 4
    %v2797 = vadd.f32 %v2795, %v2796
    %v2798 = vrot.slane %v2797, 2
    %v2799 = vadd.f32 %v2797, %v2798
    %v2800 = vrot.slane %v2799, 1
    %v2801 = vadd.f32 %v2799, %v2800
    %v2802 = vadd.f32 %v2763, %v2801
    %vm2803 = vcmask 0
    %2804 = vst.msk [vmem:[#allocation20] sm:$0x1] %vm2803, %v2802
    // Predicated region
    $region70: #{tpu_custom_call.1} parent=1 // pred_check
      _
    $region71: #{tpu_custom_call.1} parent=1 // pred_check_branch
      %2806 = sbr.rel (0) target = $region73
    $region72: #{tpu_custom_call.1} parent=1 // pred_region
      %s2808 = ssub.s32 16, 16
      %2809 = vsyncadd [#allocation8], %s2808
      %s2811 = sshll.u32 [#allocation20], 4
      %s2812 = int_to_ptr.vmem [resolvable:$true] %s2811
      %2814 = dma.vmem_to_hbm [thread:$0]  %s2812, 16, %s8, [#allocation8]
    $region73: #{tpu_custom_call.1} parent=1 // pred_fallthru
      _
    // Predicated region
    $region74: #{tpu_custom_call.1} parent=1 // pred_check
      _
    $region75: #{tpu_custom_call.1} parent=1 // pred_check_branch
      %2816 = sbr.rel (0) target = $region77
    $region76: #{tpu_custom_call.1} parent=1 // pred_region
      %2817 = dma.done [#allocation8], 16
    $region77: #{tpu_custom_call.1} parent=1 // pred_fallthru
      _
    %2818 = vsyncpa [#allocation7], 1
    %2819 = vsyncpa [#allocation10], 1
    %2820 = vsyncpa [#allocation13], 1
    %2821 = vsyncpa [#allocation16], 1
    %2822 = vsyncpa [#allocation19], 1
    %2823 = vsyncpa [#allocation8], 1

</llo_original>
